<compile_context>
chip_gen: v6e
topology: v6e:2x2x1
jax: 0.10.0
libtpu: 0.0.40
codegen_flags: <defaults>
</compile_context>

<pallas_src>
import functools

import jax
import jax.numpy as jnp
from jax.experimental import pallas as pl
from jax.experimental.pallas import tpu as pltpu

# ---------------- config ----------------
NREGION = 8          # nodes per graph
INPUT_SIZE = 256     # must equal 256 so the residual `out + data.x` is shape-valid (as in torch)
OUTPUT_SIZE = 4      # per-node actor outputs / critic outputs
OUT_PAD = 128        # lane-padded width of the last linear layer (sliced in the wrapper)
BATCH = 32           # graphs processed per forward call
TILE_GRAPHS = 32     # graphs per grid step; == BATCH -> grid=(1,), 32*8 = 256-row matmul tiles
JITTER = 1e-20       # `jitter_setting` global in the original code (tiny positive constant)


def _relu(x):
    return jnp.maximum(x, 0.0)


def _bf(x):
    return x.astype(jnp.bfloat16)


def a2c_kernel(obs_ref, center_ref, adjc_ref, sum_ref, w_conv_ref, w_mlp_ref, b_ref,
               conc_ref, val_ref):
    obs = obs_ref[...]                                   # (R, 256) f32 RAW observations
    obs_bf = _bf(obs)
    b = b_ref[...]                                       # (8, 512) f32 bias slab

    # GNNParser.parse_obs per-graph mean-centering, fused: x = blockdiag(I - J/8) @ obs  (f32).
    x = jnp.dot(center_ref[...], obs, preferred_element_type=jnp.float32)      # (R, 256) f32

    # SAGEConv mean neighbor aggregation; centering folded into the adjacency in the wrapper
    # (adj_c = A_norm @ C), so this matmul issues independently of the centering matmul.
    agg = jnp.dot(adjc_ref[...], obs_bf, preferred_element_type=jnp.float32)   # (R, 256) f32

    # Fused SAGEConv for actor+critic, no activation concat:
    #   conv = agg @ [a_wl | c_wl] + x @ [a_wr | c_wr] + [a_bc | c_bc]
    conv = (jnp.dot(_bf(agg), w_conv_ref[0:256, :], preferred_element_type=jnp.float32)
            + jnp.dot(_bf(x), w_conv_ref[256:512, :], preferred_element_type=jnp.float32))
    conv = _relu(conv + b[0:1, :])                                             # (R, 512) f32

    a_h = conv[:, 0:256] + x          # actor residual (torch: out + data.x)
    c_h = conv[:, 256:512] + x        # critic residual

    # ---------------- Actor head: per-node MLP -> softplus concentrations ----------------
    a_h1 = _relu(jnp.dot(_bf(a_h), w_mlp_ref[0:256, 0:128],
                         preferred_element_type=jnp.float32) + b[1:2, 0:128])
    a_h2 = _relu(jnp.dot(_bf(a_h1), w_mlp_ref[256:384, 0:128],
                         preferred_element_type=jnp.float32) + b[1:2, 128:256])
    a_out = jnp.dot(_bf(a_h2), w_mlp_ref[384:512, 0:128],
                    preferred_element_type=jnp.float32) + b[1:2, 256:384]
    # softplus + jitter in f32, stored bf16 (only 4/128 lanes are useful -> halve the HBM write)
    conc_ref[...] = (jax.nn.softplus(a_out) + JITTER).astype(conc_ref.dtype)

    # ---------------- Critic head: per-graph node sum -> MLP ----------------
    # torch.sum(x, dim=0) per graph, expressed as an exact f32 selector matmul.
    c_s = jnp.dot(sum_ref[...], c_h, preferred_element_type=jnp.float32)       # (G, 256) f32
    c_h1 = _relu(jnp.dot(_bf(c_s), w_mlp_ref[0:256, 128:256],
                         preferred_element_type=jnp.float32) + b[2:3, 0:128])
    c_h2 = _relu(jnp.dot(_bf(c_h1), w_mlp_ref[256:384, 128:256],
                         preferred_element_type=jnp.float32) + b[2:3, 128:256])
    val_ref[...] = jnp.dot(_bf(c_h2), w_mlp_ref[384:512, 128:256],
                           preferred_element_type=jnp.float32) + b[2:3, 256:384]


def init_branch_params(key, in_size, out_size):
    """Raw SAGEConv(in, 256) + Linear(256,128) + Linear(128,32) + Linear(32,out) params (f32)."""
    ks = jax.random.split(key, 9)
    s = 0.05
    return dict(
        wl=jax.random.normal(ks[0], (in_size, 256), jnp.float32) * s,   # SAGEConv lin_l (aggregated)
        wr=jax.random.normal(ks[1], (in_size, 256), jnp.float32) * s,   # SAGEConv lin_r (root)
        bc=jax.random.normal(ks[2], (256,), jnp.float32) * s,
        w1=jax.random.normal(ks[3], (256, 128), jnp.float32) * s,
        b1=jax.random.normal(ks[4], (128,), jnp.float32) * s,
        w2=jax.random.normal(ks[5], (128, 32), jnp.float32) * s,
        b2=jax.random.normal(ks[6], (32,), jnp.float32) * s,
        w3=jax.random.normal(ks[7], (32, out_size), jnp.float32) * s,
        b3=jax.random.normal(ks[8], (32,), jnp.float32)[:out_size] * s,
    )


def pack_params(actor, critic):
    """One-time packing into 3 lane-/sublane-aligned slabs (7 kernel operands total)."""
    # conv slab (512,512) bf16: rows 0:256 = W_l (aggregated), rows 256:512 = W_r (root);
    # lanes 0:256 = actor, lanes 256:512 = critic.
    w_conv = _bf(jnp.block([[actor["wl"], critic["wl"]],
                            [actor["wr"], critic["wr"]]]))

    def pad2(w, rows, cols):
        return jnp.zeros((rows, cols), jnp.float32).at[:w.shape[0], :w.shape[1]].set(w)

    def mlp_block(p):  # (512,128) f32: rows 0:256 = w1, 256:384 = w2 (padded), 384:512 = w3 (padded)
        return jnp.concatenate([pad2(p["w1"], 256, 128),
                                pad2(p["w2"], 128, 128),
                                pad2(p["w3"], 128, 128)], axis=0)

    # MLP slab (512,256) bf16: lanes 0:128 = actor, 128:256 = critic.
    w_mlp = _bf(jnp.concatenate([mlp_block(actor), mlp_block(critic)], axis=1))

    def pad1(v, size):
        return jnp.zeros((size,), jnp.float32).at[:v.shape[0]].set(v)

    def bias_row(p):   # (512,) = [b1 | b2 padded | b3 padded | zeros]
        return jnp.concatenate([pad1(p["b1"], 128), pad1(p["b2"], 128),
                                pad1(p["b3"], 128), jnp.zeros((128,), jnp.float32)])

    # bias slab (8,512) f32: row 0 = [a_bc | c_bc], row 1 = actor MLP biases, row 2 = critic.
    biases = jnp.zeros((8, 512), jnp.float32)
    biases = biases.at[0, :].set(jnp.concatenate([actor["bc"], critic["bc"]]))
    biases = biases.at[1, :].set(bias_row(actor))
    biases = biases.at[2, :].set(bias_row(critic))
    return [w_conv, w_mlp, biases]


def build_tile_adjacency(edge_index, n, tile_graphs):
    """Block-diagonal row-normalized adjacency (f32) for one tile of `tile_graphs` identical graphs.
    A_norm[i, j] = 1/deg_in(i) if edge j->i (SAGE mean aggregation)."""
    src, dst = edge_index[0], edge_index[1]
    a = jnp.zeros((n, n), jnp.float32).at[dst, src].add(1.0)
    deg = jnp.sum(a, axis=1, keepdims=True)
    a = jnp.where(deg > 0, a / jnp.maximum(deg, 1.0), 0.0)
    blocks = jnp.einsum("gh,ij->gihj", jnp.eye(tile_graphs, dtype=jnp.float32), a)
    return blocks.reshape(tile_graphs * n, tile_graphs * n)


def build_tile_center(n, tile_graphs):
    """Block-diagonal (I - J/n) f32: per-graph mean-centering (GNNParser.parse_obs) as a matmul."""
    c = jnp.eye(n, dtype=jnp.float32) - 1.0 / n
    blocks = jnp.einsum("gh,ij->gihj", jnp.eye(tile_graphs, dtype=jnp.float32), c)
    return blocks.reshape(tile_graphs * n, tile_graphs * n)


def build_sum_selector(n, tile_graphs):
    """(G, G*n) f32 selector: row g sums the n nodes of graph g (torch.sum(x, dim=0))."""
    return jnp.repeat(jnp.eye(tile_graphs, dtype=jnp.float32), n, axis=1)


@functools.partial(jax.jit, static_argnames=("n", "out_size", "tile_graphs"))
def a2c_forward(obs, center, adj_c, sum_sel, packed_params, n, out_size, tile_graphs):
    """obs: (B, n, INPUT_SIZE) RAW observations, one graph per batch entry (centering is in-kernel)."""
    batch, n_nodes, feat = obs.shape
    assert n_nodes == n and batch % tile_graphs == 0
    num_tiles = batch // tile_graphs
    tile_rows = tile_graphs * n

    obs_flat = obs.reshape(batch * n, feat)   # contiguous reshape, no copy

    const2d = lambda i: (0, 0)   # weights / adjacency / centering / selector stay VMEM-resident
    in_specs = ([pl.BlockSpec((tile_rows, feat), lambda i: (i, 0)),
                 pl.BlockSpec(center.shape, const2d),
                 pl.BlockSpec(adj_c.shape, const2d),
                 pl.BlockSpec(sum_sel.shape, const2d)]
                + [pl.BlockSpec(p.shape, const2d) for p in packed_params])
    out_specs = (pl.BlockSpec((tile_rows, OUT_PAD), lambda i: (i, 0)),
                 pl.BlockSpec((tile_graphs, OUT_PAD), lambda i: (i, 0)))
    out_shape = (jax.ShapeDtypeStruct((batch * n, OUT_PAD), jnp.bfloat16),
                 jax.ShapeDtypeStruct((batch, OUT_PAD), jnp.float32))

    mlp_flops = 256 * 128 + 128 * 128 + 128 * 128
    flops_tile = (2 * tile_rows * tile_rows * feat                  # mean-centering
                  + 2 * tile_rows * tile_rows * feat                # SAGE mean aggregation
                  + 2 * 2 * tile_rows * 256 * 512                   # fused SAGEConv (2 matmuls)
                  + 2 * tile_rows * mlp_flops                       # actor MLP
                  + 2 * tile_graphs * tile_rows * feat              # critic per-graph node sum
                  + 2 * tile_graphs * mlp_flops)                    # critic MLP
    bytes_params = sum(int(p.size) * p.dtype.itemsize
                       for p in [center, adj_c, sum_sel] + list(packed_params))
    bytes_io = int(obs_flat.size) * 4 + batch * n * OUT_PAD * 2 + batch * OUT_PAD * 4
    cost = pl.CostEstimate(flops=num_tiles * flops_tile,
                           transcendentals=num_tiles * 2 * tile_rows * OUT_PAD,
                           bytes_accessed=bytes_params + bytes_io)

    # grid=(1,) on the default config (single-TC v5e/v6e sweet spot); if batch grows and
    # tile_graphs = batch // 2, the batch axis shards across v7x's two TensorCores.
    semantics = ("parallel",) if num_tiles > 1 else ("arbitrary",)

    conc_pad, val_pad = pl.pallas_call(
        a2c_kernel,
        out_shape=out_shape,
        grid_spec=pltpu.PrefetchScalarGridSpec(
            num_scalar_prefetch=0,
            grid=(num_tiles,),
            in_specs=in_specs,
            out_specs=out_specs),
        compiler_params=pltpu.CompilerParams(dimension_semantics=semantics),
        cost_estimate=cost,
    )(obs_flat, center, adj_c, sum_sel, *packed_params)

    # F.softplus(actor_out).reshape(-1) per graph; slice away lane padding, back to f32.
    concentration = conc_pad[:, :out_size].astype(jnp.float32).reshape(batch, n * out_size)
    value = val_pad[:, :out_size]                                   # (B, output_size)
    return concentration, value


if __name__ == "__main__":
    key = jax.random.PRNGKey(0)
    k_obs, k_actor, k_critic = jax.random.split(key, 3)

    # deterministic batch of raw observations: BATCH graphs x NREGION nodes x INPUT_SIZE features
    obs = jax.random.normal(k_obs, (BATCH, NREGION, INPUT_SIZE), jnp.float32)

    # deterministic ring-graph edge_index (stand-in for the global `final_list`)
    idx = jnp.arange(NREGION)
    src = jnp.concatenate([idx, idx])
    dst = jnp.concatenate([(idx + 1) % NREGION, (idx - 1) % NREGION])
    edge_index = jnp.stack([src, dst]).astype(jnp.int32)

    adj = build_tile_adjacency(edge_index, NREGION, TILE_GRAPHS)     # f32, row-normalized
    center = build_tile_center(NREGION, TILE_GRAPHS)                 # f32, (I - J/8) block-diag
    adj_c = _bf(adj @ center)                                        # centering folded into SAGE agg
    sum_sel = build_sum_selector(NREGION, TILE_GRAPHS)               # f32 per-graph sum selector

    actor_raw = init_branch_params(k_actor, INPUT_SIZE, OUTPUT_SIZE)
    critic_raw = init_branch_params(k_critic, INPUT_SIZE, OUTPUT_SIZE)
    packed = pack_params(actor_raw, critic_raw)

    concentration, value = a2c_forward(obs, center, adj_c, sum_sel, packed,
                                       n=NREGION, out_size=OUTPUT_SIZE,
                                       tile_graphs=TILE_GRAPHS)
    jax.block_until_ready((concentration, value))

    assert concentration.shape == (BATCH, NREGION * OUTPUT_SIZE)
    assert value.shape == (BATCH, OUTPUT_SIZE)
    assert bool(jnp.all(concentration > 0.0))   # softplus + jitter -> positive Dirichlet params
    # TODO(synk): Dirichlet sampling / log_prob (select_action) and the Adam training step are
    #             host-side and stochastic — not part of the kernel forward pass.
    print("KERNEL_OK")
</pallas_src>

<mosaic_0001>
module attributes {stable_mosaic.version = 11 : i64} {
  func.func @a2c_kernel(%arg0: i32, %arg1: memref<256x256xf32, #tpu.memory_space<vmem>>, %arg2: memref<256x256xf32, #tpu.memory_space<vmem>>, %arg3: memref<256x256xbf16, #tpu.memory_space<vmem>>, %arg4: memref<32x256xf32, #tpu.memory_space<vmem>>, %arg5: memref<512x512xbf16, #tpu.memory_space<vmem>>, %arg6: memref<512x256xbf16, #tpu.memory_space<vmem>>, %arg7: memref<8x512xf32, #tpu.memory_space<vmem>>, %arg8: memref<256x128xbf16, #tpu.memory_space<vmem>>, %arg9: memref<32x128xf32, #tpu.memory_space<vmem>>) attributes {dimension_semantics = [#tpu.dimension_semantics<arbitrary>], iteration_bounds = array<i64: 1>, scalar_prefetch = 0 : i64, scratch_operands = 0 : i64, tpu.core_type = #tpu.core_type<tc>, window_params = [{transform_indices = @transform_0, window_bounds = array<i64: 256, 256>}, {pipeline_mode = #tpu.pipeline_mode<synchronous>, transform_indices = @transform_1, window_bounds = array<i64: 256, 256>}, {pipeline_mode = #tpu.pipeline_mode<synchronous>, transform_indices = @transform_2, window_bounds = array<i64: 256, 256>}, {pipeline_mode = #tpu.pipeline_mode<synchronous>, transform_indices = @transform_3, window_bounds = array<i64: 32, 256>}, {pipeline_mode = #tpu.pipeline_mode<synchronous>, transform_indices = @transform_4, window_bounds = array<i64: 512, 512>}, {pipeline_mode = #tpu.pipeline_mode<synchronous>, transform_indices = @transform_5, window_bounds = array<i64: 512, 256>}, {pipeline_mode = #tpu.pipeline_mode<synchronous>, transform_indices = @transform_6, window_bounds = array<i64: 8, 512>}, {transform_indices = @transform_7, window_bounds = array<i64: 256, 128>}, {transform_indices = @transform_8, window_bounds = array<i64: 32, 128>}]} {
    %c0 = arith.constant 0 : index
    %c0_0 = arith.constant 0 : index
    %0 = vector.load %arg1[%c0, %c0_0] : memref<256x256xf32, #tpu.memory_space<vmem>>, vector<256x256xf32>
    %1 = arith.truncf %0 : vector<256x256xf32> to vector<256x256xbf16>
    %c0_1 = arith.constant 0 : index
    %c0_2 = arith.constant 0 : index
    %2 = vector.load %arg7[%c0_1, %c0_2] : memref<8x512xf32, #tpu.memory_space<vmem>>, vector<8x512xf32>
    %c0_3 = arith.constant 0 : index
    %c0_4 = arith.constant 0 : index
    %3 = vector.load %arg2[%c0_3, %c0_4] : memref<256x256xf32, #tpu.memory_space<vmem>>, vector<256x256xf32>
    %cst = arith.constant dense<0.000000e+00> : vector<256x256xf32>
    %4 = tpu.matmul %3, %0, %cst {dimension_numbers = #tpu.dot_dimension_numbers<[1], [0], [0], [1], [0, 0, 1, 1], [], []>} : vector<256x256xf32>, vector<256x256xf32>, vector<256x256xf32> -> vector<256x256xf32>
    %c0_5 = arith.constant 0 : index
    %c0_6 = arith.constant 0 : index
    %5 = vector.load %arg3[%c0_5, %c0_6] : memref<256x256xbf16, #tpu.memory_space<vmem>>, vector<256x256xbf16>
    %cst_7 = arith.constant dense<0.000000e+00> : vector<256x256xf32>
    %6 = tpu.matmul %5, %1, %cst_7 {dimension_numbers = #tpu.dot_dimension_numbers<[1], [0], [0], [1], [0, 0, 1, 1], [], []>} : vector<256x256xbf16>, vector<256x256xbf16>, vector<256x256xf32> -> vector<256x256xf32>
    %7 = arith.truncf %6 : vector<256x256xf32> to vector<256x256xbf16>
    %c0_8 = arith.constant 0 : index
    %c0_9 = arith.constant 0 : index
    %8 = vector.load %arg5[%c0_8, %c0_9] : memref<512x512xbf16, #tpu.memory_space<vmem>>, vector<256x512xbf16>
    %cst_10 = arith.constant dense<0.000000e+00> : vector<256x512xf32>
    %9 = tpu.matmul %7, %8, %cst_10 {dimension_numbers = #tpu.dot_dimension_numbers<[1], [0], [0], [1], [0, 0, 1, 1], [], []>} : vector<256x256xbf16>, vector<256x512xbf16>, vector<256x512xf32> -> vector<256x512xf32>
    %10 = arith.truncf %4 : vector<256x256xf32> to vector<256x256xbf16>
    %c256 = arith.constant 256 : index
    %c0_11 = arith.constant 0 : index
    %11 = vector.load %arg5[%c256, %c0_11] : memref<512x512xbf16, #tpu.memory_space<vmem>>, vector<256x512xbf16>
    %cst_12 = arith.constant dense<0.000000e+00> : vector<256x512xf32>
    %12 = tpu.matmul %10, %11, %cst_12 {dimension_numbers = #tpu.dot_dimension_numbers<[1], [0], [0], [1], [0, 0, 1, 1], [], []>} : vector<256x256xbf16>, vector<256x512xbf16>, vector<256x512xf32> -> vector<256x512xf32>
    %13 = arith.addf %9, %12 : vector<256x512xf32>
    %14 = vector.extract_strided_slice %2 {offsets = [0, 0], sizes = [1, 512], strides = [1, 1]} : vector<8x512xf32> to vector<1x512xf32>
    %15 = vector.broadcast %14 : vector<1x512xf32> to vector<256x512xf32>
    %16 = arith.addf %13, %15 : vector<256x512xf32>
    %cst_13 = arith.constant 0.000000e+00 : f32
    %17 = vector.broadcast %cst_13 : f32 to vector<256x512xf32>
    %18 = arith.maximumf %16, %17 : vector<256x512xf32>
    %19 = vector.extract_strided_slice %18 {offsets = [0, 0], sizes = [256, 256], strides = [1, 1]} : vector<256x512xf32> to vector<256x256xf32>
    %20 = arith.addf %19, %4 : vector<256x256xf32>
    %21 = vector.extract_strided_slice %18 {offsets = [0, 256], sizes = [256, 256], strides = [1, 1]} : vector<256x512xf32> to vector<256x256xf32>
    %22 = arith.addf %21, %4 : vector<256x256xf32>
    %23 = arith.truncf %20 : vector<256x256xf32> to vector<256x256xbf16>
    %c0_14 = arith.constant 0 : index
    %c0_15 = arith.constant 0 : index
    %24 = vector.load %arg6[%c0_14, %c0_15] : memref<512x256xbf16, #tpu.memory_space<vmem>>, vector<256x128xbf16>
    %cst_16 = arith.constant dense<0.000000e+00> : vector<256x128xf32>
    %25 = tpu.matmul %23, %24, %cst_16 {dimension_numbers = #tpu.dot_dimension_numbers<[1], [0], [0], [1], [0, 0, 1, 1], [], []>} : vector<256x256xbf16>, vector<256x128xbf16>, vector<256x128xf32> -> vector<256x128xf32>
    %26 = vector.extract_strided_slice %2 {offsets = [1, 0], sizes = [1, 128], strides = [1, 1]} : vector<8x512xf32> to vector<1x128xf32>
    %27 = vector.broadcast %26 : vector<1x128xf32> to vector<256x128xf32>
    %28 = arith.addf %25, %27 : vector<256x128xf32>
    %cst_17 = arith.constant 0.000000e+00 : f32
    %29 = vector.broadcast %cst_17 : f32 to vector<256x128xf32>
    %30 = arith.maximumf %28, %29 : vector<256x128xf32>
    %31 = arith.truncf %30 : vector<256x128xf32> to vector<256x128xbf16>
    %c256_18 = arith.constant 256 : index
    %c0_19 = arith.constant 0 : index
    %32 = vector.load %arg6[%c256_18, %c0_19] : memref<512x256xbf16, #tpu.memory_space<vmem>>, vector<128x128xbf16>
    %cst_20 = arith.constant dense<0.000000e+00> : vector<256x128xf32>
    %33 = tpu.matmul %31, %32, %cst_20 {dimension_numbers = #tpu.dot_dimension_numbers<[1], [0], [0], [1], [0, 0, 1, 1], [], []>} : vector<256x128xbf16>, vector<128x128xbf16>, vector<256x128xf32> -> vector<256x128xf32>
    %34 = vector.extract_strided_slice %2 {offsets = [1, 128], sizes = [1, 128], strides = [1, 1]} : vector<8x512xf32> to vector<1x128xf32>
    %35 = vector.broadcast %34 : vector<1x128xf32> to vector<256x128xf32>
    %36 = arith.addf %33, %35 : vector<256x128xf32>
    %cst_21 = arith.constant 0.000000e+00 : f32
    %37 = vector.broadcast %cst_21 : f32 to vector<256x128xf32>
    %38 = arith.maximumf %36, %37 : vector<256x128xf32>
    %39 = arith.truncf %38 : vector<256x128xf32> to vector<256x128xbf16>
    %c384 = arith.constant 384 : index
    %c0_22 = arith.constant 0 : index
    %40 = vector.load %arg6[%c384, %c0_22] : memref<512x256xbf16, #tpu.memory_space<vmem>>, vector<128x128xbf16>
    %cst_23 = arith.constant dense<0.000000e+00> : vector<256x128xf32>
    %41 = tpu.matmul %39, %40, %cst_23 {dimension_numbers = #tpu.dot_dimension_numbers<[1], [0], [0], [1], [0, 0, 1, 1], [], []>} : vector<256x128xbf16>, vector<128x128xbf16>, vector<256x128xf32> -> vector<256x128xf32>
    %42 = vector.extract_strided_slice %2 {offsets = [1, 256], sizes = [1, 128], strides = [1, 1]} : vector<8x512xf32> to vector<1x128xf32>
    %43 = vector.broadcast %42 : vector<1x128xf32> to vector<256x128xf32>
    %44 = arith.addf %41, %43 : vector<256x128xf32>
    %cst_24 = arith.constant 0.000000e+00 : f32
    %45 = vector.broadcast %cst_24 : f32 to vector<256x128xf32>
    %46 = arith.maximumf %44, %45 : vector<256x128xf32>
    %47 = vector.broadcast %cst_24 : f32 to vector<256x128xf32>
    %48 = arith.subf %44, %47 : vector<256x128xf32>
    %49 = arith.cmpf one, %48, %48 : vector<256x128xf32>
    %50 = vector.broadcast %cst_24 : f32 to vector<256x128xf32>
    %51 = arith.addf %44, %50 : vector<256x128xf32>
    %52 = math.absf %48 : vector<256x128xf32>
    %cst_25 = arith.constant 0.000000e+00 : f32
    %53 = vector.broadcast %cst_25 : f32 to vector<256x128xf32>
    %54 = arith.subf %53, %52 : vector<256x128xf32>
    %55 = math.exp %54 : vector<256x128xf32>
    %56 = math.log1p %55 : vector<256x128xf32>
    %57 = arith.addf %46, %56 : vector<256x128xf32>
    %58 = arith.select %49, %51, %57 : vector<256x128xi1>, vector<256x128xf32>
    %cst_26 = arith.constant 9.99999968E-21 : f32
    %59 = vector.broadcast %cst_26 : f32 to vector<256x128xf32>
    %60 = arith.addf %58, %59 : vector<256x128xf32>
    %61 = arith.truncf %60 : vector<256x128xf32> to vector<256x128xbf16>
    %c0_27 = arith.constant 0 : index
    %c0_28 = arith.constant 0 : index
    %62 = vector.load %arg8[%c0_27, %c0_28] : memref<256x128xbf16, #tpu.memory_space<vmem>>, vector<256x128xbf16>
    tpu.vector_store %arg8[%c0_27, %c0_28], %61 {strides = array<i32>} : memref<256x128xbf16, #tpu.memory_space<vmem>>, vector<256x128xbf16>,
    %c0_29 = arith.constant 0 : index
    %c0_30 = arith.constant 0 : index
    %63 = vector.load %arg4[%c0_29, %c0_30] : memref<32x256xf32, #tpu.memory_space<vmem>>, vector<32x256xf32>
    %cst_31 = arith.constant dense<0.000000e+00> : vector<32x256xf32>
    %64 = tpu.matmul %63, %22, %cst_31 {dimension_numbers = #tpu.dot_dimension_numbers<[1], [0], [0], [1], [0, 0, 1, 1], [], []>} : vector<32x256xf32>, vector<256x256xf32>, vector<32x256xf32> -> vector<32x256xf32>
    %65 = arith.truncf %64 : vector<32x256xf32> to vector<32x256xbf16>
    %c0_32 = arith.constant 0 : index
    %c128 = arith.constant 128 : index
    %66 = vector.load %arg6[%c0_32, %c128] : memref<512x256xbf16, #tpu.memory_space<vmem>>, vector<256x128xbf16>
    %cst_33 = arith.constant dense<0.000000e+00> : vector<32x128xf32>
    %67 = tpu.matmul %65, %66, %cst_33 {dimension_numbers = #tpu.dot_dimension_numbers<[1], [0], [0], [1], [0, 0, 1, 1], [], []>} : vector<32x256xbf16>, vector<256x128xbf16>, vector<32x128xf32> -> vector<32x128xf32>
    %68 = vector.extract_strided_slice %2 {offsets = [2, 0], sizes = [1, 128], strides = [1, 1]} : vector<8x512xf32> to vector<1x128xf32>
    %69 = vector.broadcast %68 : vector<1x128xf32> to vector<32x128xf32>
    %70 = arith.addf %67, %69 : vector<32x128xf32>
    %cst_34 = arith.constant 0.000000e+00 : f32
    %71 = vector.broadcast %cst_34 : f32 to vector<32x128xf32>
    %72 = arith.maximumf %70, %71 : vector<32x128xf32>
    %73 = arith.truncf %72 : vector<32x128xf32> to vector<32x128xbf16>
    %c256_35 = arith.constant 256 : index
    %c128_36 = arith.constant 128 : index
    %74 = vector.load %arg6[%c256_35, %c128_36] : memref<512x256xbf16, #tpu.memory_space<vmem>>, vector<128x128xbf16>
    %cst_37 = arith.constant dense<0.000000e+00> : vector<32x128xf32>
    %75 = tpu.matmul %73, %74, %cst_37 {dimension_numbers = #tpu.dot_dimension_numbers<[1], [0], [0], [1], [0, 0, 1, 1], [], []>} : vector<32x128xbf16>, vector<128x128xbf16>, vector<32x128xf32> -> vector<32x128xf32>
    %76 = vector.extract_strided_slice %2 {offsets = [2, 128], sizes = [1, 128], strides = [1, 1]} : vector<8x512xf32> to vector<1x128xf32>
    %77 = vector.broadcast %76 : vector<1x128xf32> to vector<32x128xf32>
    %78 = arith.addf %75, %77 : vector<32x128xf32>
    %cst_38 = arith.constant 0.000000e+00 : f32
    %79 = vector.broadcast %cst_38 : f32 to vector<32x128xf32>
    %80 = arith.maximumf %78, %79 : vector<32x128xf32>
    %81 = arith.truncf %80 : vector<32x128xf32> to vector<32x128xbf16>
    %c384_39 = arith.constant 384 : index
    %c128_40 = arith.constant 128 : index
    %82 = vector.load %arg6[%c384_39, %c128_40] : memref<512x256xbf16, #tpu.memory_space<vmem>>, vector<128x128xbf16>
    %cst_41 = arith.constant dense<0.000000e+00> : vector<32x128xf32>
    %83 = tpu.matmul %81, %82, %cst_41 {dimension_numbers = #tpu.dot_dimension_numbers<[1], [0], [0], [1], [0, 0, 1, 1], [], []>} : vector<32x128xbf16>, vector<128x128xbf16>, vector<32x128xf32> -> vector<32x128xf32>
    %84 = vector.extract_strided_slice %2 {offsets = [2, 256], sizes = [1, 128], strides = [1, 1]} : vector<8x512xf32> to vector<1x128xf32>
    %85 = vector.broadcast %84 : vector<1x128xf32> to vector<32x128xf32>
    %86 = arith.addf %83, %85 : vector<32x128xf32>
    %c0_42 = arith.constant 0 : index
    %c0_43 = arith.constant 0 : index
    %87 = vector.load %arg9[%c0_42, %c0_43] : memref<32x128xf32, #tpu.memory_space<vmem>>, vector<32x128xf32>
    tpu.vector_store %arg9[%c0_42, %c0_43], %86 {strides = array<i32>} : memref<32x128xf32, #tpu.memory_space<vmem>>, vector<32x128xf32>,
    return
  }
  func.func @transform_0(%arg0: i32) -> (i32, i32) {
    %c0_i32 = arith.constant 0 : i32
    %c0_i32_0 = arith.constant 0 : i32
    return %arg0, %c0_i32 : i32, i32
  }
  func.func @transform_1(%arg0: i32) -> (i32, i32) {
    %c0_i32 = arith.constant 0 : i32
    %c0_i32_0 = arith.constant 0 : i32
    %c0_i32_1 = arith.constant 0 : i32
    return %c0_i32, %c0_i32_0 : i32, i32
  }
  func.func @transform_2(%arg0: i32) -> (i32, i32) {
    %c0_i32 = arith.constant 0 : i32
    %c0_i32_0 = arith.constant 0 : i32
    %c0_i32_1 = arith.constant 0 : i32
    return %c0_i32, %c0_i32_0 : i32, i32
  }
  func.func @transform_3(%arg0: i32) -> (i32, i32) {
    %c0_i32 = arith.constant 0 : i32
    %c0_i32_0 = arith.constant 0 : i32
    %c0_i32_1 = arith.constant 0 : i32
    return %c0_i32, %c0_i32_0 : i32, i32
  }
  func.func @transform_4(%arg0: i32) -> (i32, i32) {
    %c0_i32 = arith.constant 0 : i32
    %c0_i32_0 = arith.constant 0 : i32
    %c0_i32_1 = arith.constant 0 : i32
    return %c0_i32, %c0_i32_0 : i32, i32
  }
  func.func @transform_5(%arg0: i32) -> (i32, i32) {
    %c0_i32 = arith.constant 0 : i32
    %c0_i32_0 = arith.constant 0 : i32
    %c0_i32_1 = arith.constant 0 : i32
    return %c0_i32, %c0_i32_0 : i32, i32
  }
  func.func @transform_6(%arg0: i32) -> (i32, i32) {
    %c0_i32 = arith.constant 0 : i32
    %c0_i32_0 = arith.constant 0 : i32
    %c0_i32_1 = arith.constant 0 : i32
    return %c0_i32, %c0_i32_0 : i32, i32
  }
  func.func @transform_7(%arg0: i32) -> (i32, i32) {
    %c0_i32 = arith.constant 0 : i32
    %c0_i32_0 = arith.constant 0 : i32
    return %arg0, %c0_i32 : i32, i32
  }
  func.func @transform_8(%arg0: i32) -> (i32, i32) {
    %c0_i32 = arith.constant 0 : i32
    %c0_i32_0 = arith.constant 0 : i32
    return %arg0, %c0_i32 : i32, i32
  }
}

</mosaic_0001>

<llo_original>
// kernel: a2c_forward.1
$region0: #{a2c_forward.1}
  #allocation0 [shape = 'u32[]', space=smem, size = 0x4, offset = 0x4, fixed_abs, tag = 'smem constant byte address 0x4 - core index']
  #allocation1 [shape = 'u32[144,128]{1,0:T(1,128)}', space=vmem, size = 0x12000, scoped, tag = 'internal scratch']
  %s0 = inlined_call_operand.hbm [shape: f32[256,256], index: 0, kind: input, shape index: {}]
  %s1 = inlined_call_operand.hbm [shape: f32[256,256], index: 1, kind: input, shape index: {}]
  %s2 = inlined_call_operand.hbm [shape: bf16[256,256], index: 2, kind: input, shape index: {}]
  %s3 = inlined_call_operand.hbm [shape: f32[32,256], index: 3, kind: input, shape index: {}]
  %s4 = inlined_call_operand.hbm [shape: bf16[512,512], index: 4, kind: input, shape index: {}]
  %s5 = inlined_call_operand.hbm [shape: bf16[512,256], index: 5, kind: input, shape index: {}]
  %s6 = inlined_call_operand.hbm [shape: f32[8,512], index: 6, kind: input, shape index: {}]
  %s7 = inlined_call_operand.vmem [shape: bf16[256,128], index: 7, kind: output, shape index: {0}]
  %s8 = inlined_call_operand.vmem [shape: f32[32,128], index: 8, kind: output, shape index: {1}]
  %9 = xla_tuple %s7, %s8
  %s10 = sld [smem:[#allocation0]]
  $region74: #{a2c_forward.1} parent=0
    _
  %s12 = ssub.s32 1, %s10
  %s13 = scalar_select 0, %s12, %s10
  $region1: #{a2c_forward.1} parent=0
    #allocation2 [shape = 'u8[262144]{0}', space=vmem, size = 0x40000, scoped, tag = 'input window, operand 0, single buffered']
    #allocation3 [shape = 's32[1]{0}', space=sflag, size = 0x4, scoped, tag = 'scoped memory for a2c_forward.1']
    #allocation4 [shape = 'u8[262144]{0}', space=vmem, size = 0x40000, scoped, tag = 'input window, operand 1, single buffered']
    #allocation5 [shape = 's32[1]{0}', space=sflag, size = 0x4, scoped, tag = 'scoped memory for a2c_forward.1']
    #allocation6 [shape = 'u8[131072]{0}', space=vmem, size = 0x20000, scoped, tag = 'input window, operand 2, single buffered']
    #allocation7 [shape = 'u8[32768]{0}', space=vmem, size = 0x8000, scoped, tag = 'input window, operand 3, single buffered']
    #allocation8 [shape = 's32[1]{0}', space=sflag, size = 0x4, scoped, tag = 'scoped memory for a2c_forward.1']
    #allocation9 [shape = 'u8[524288]{0}', space=vmem, size = 0x80000, scoped, tag = 'input window, operand 4, single buffered']
    #allocation10 [shape = 'u8[262144]{0}', space=vmem, size = 0x40000, scoped, tag = 'input window, operand 5, single buffered']
    #allocation11 [shape = 's32[1]{0}', space=sflag, size = 0x4, scoped, tag = 'scoped memory for a2c_forward.1']
    #allocation12 [shape = 'u8[16384]{0}', space=vmem, size = 0x4000, scoped, tag = 'input window, operand 6, single buffered']
    %14 = vsyncpa [#allocation3], 0
    %15 = vsyncpa [#allocation5], 0
    %16 = vsyncpa [#allocation8], 0
    %17 = vsyncpa [#allocation11], 0
    // Predicated region
    $region2: #{a2c_forward.1} parent=1 // pred_check
      _
    $region3: #{a2c_forward.1} parent=1 // pred_check_branch
      %19 = sbr.rel (0) target = $region5
    $region4: #{a2c_forward.1} parent=1 // pred_region
      %s21 = ssub.s32 8192, 8192
      %22 = vsyncadd [#allocation3], %s21
      %s23 = sshll.u32 [#allocation2], 4
      %s24 = int_to_ptr.vmem [resolvable:$true] %s23
      %29 = dma.hbm_to_vmem [thread:$0]  %s0, 8192, %s24, [#allocation3], 256, 256, 16
    $region5: #{a2c_forward.1} parent=1 // pred_fallthru
      _
    // Predicated region
    $region6: #{a2c_forward.1} parent=1 // pred_check
      _
    $region7: #{a2c_forward.1} parent=1 // pred_check_branch
      %31 = sbr.rel (0) target = $region9
    $region8: #{a2c_forward.1} parent=1 // pred_region
      %s33 = ssub.s32 8192, 8192
      %34 = vsyncadd [#allocation5], %s33
      %s35 = sshll.u32 [#allocation4], 4
      %s36 = int_to_ptr.vmem [resolvable:$true] %s35
      %41 = dma.hbm_to_vmem [thread:$0]  %s1, 8192, %s36, [#allocation5], 256, 256, 16
    $region9: #{a2c_forward.1} parent=1 // pred_fallthru
      _
    // Predicated region
    $region10: #{a2c_forward.1} parent=1 // pred_check
      _
    $region11: #{a2c_forward.1} parent=1 // pred_check_branch
      %43 = sbr.rel (0) target = $region13
    $region12: #{a2c_forward.1} parent=1 // pred_region
      %s45 = ssub.s32 4096, 4096
      %46 = vsyncadd [#allocation5], %s45
      %s47 = sshll.u32 [#allocation6], 4
      %s48 = int_to_ptr.vmem [resolvable:$true] %s47
      %53 = dma.hbm_to_vmem [thread:$0]  %s2, 4096, %s48, [#allocation5], 128, 128, 8
    $region13: #{a2c_forward.1} parent=1 // pred_fallthru
      _
    // Predicated region
    $region14: #{a2c_forward.1} parent=1 // pred_check
      _
    $region15: #{a2c_forward.1} parent=1 // pred_check_branch
      %55 = sbr.rel (0) target = $region17
    $region16: #{a2c_forward.1} parent=1 // pred_region
      %s57 = ssub.s32 1024, 1024
      %58 = vsyncadd [#allocation8], %s57
      %s59 = sshll.u32 [#allocation7], 4
      %s60 = int_to_ptr.vmem [resolvable:$true] %s59
      %65 = dma.hbm_to_vmem [thread:$0]  %s3, 1024, %s60, [#allocation8], 256, 256, 16
    $region17: #{a2c_forward.1} parent=1 // pred_fallthru
      _
    // Predicated region
    $region18: #{a2c_forward.1} parent=1 // pred_check
      _
    $region19: #{a2c_forward.1} parent=1 // pred_check_branch
      %67 = sbr.rel (0) target = $region21
    $region20: #{a2c_forward.1} parent=1 // pred_region
      %s69 = ssub.s32 16384, 16384
      %70 = vsyncadd [#allocation8], %s69
      %s71 = sshll.u32 [#allocation9], 4
      %s72 = int_to_ptr.vmem [resolvable:$true] %s71
      %77 = dma.hbm_to_vmem [thread:$0]  %s4, 16384, %s72, [#allocation8], 256, 256, 16
    $region21: #{a2c_forward.1} parent=1 // pred_fallthru
      _
    // Predicated region
    $region22: #{a2c_forward.1} parent=1 // pred_check
      _
    $region23: #{a2c_forward.1} parent=1 // pred_check_branch
      %79 = sbr.rel (0) target = $region25
    $region24: #{a2c_forward.1} parent=1 // pred_region
      %s81 = ssub.s32 8192, 8192
      %82 = vsyncadd [#allocation11], %s81
      %s83 = sshll.u32 [#allocation10], 4
      %s84 = int_to_ptr.vmem [resolvable:$true] %s83
      %89 = dma.hbm_to_vmem [thread:$0]  %s5, 8192, %s84, [#allocation11], 128, 128, 8
    $region25: #{a2c_forward.1} parent=1 // pred_fallthru
      _
    // Predicated region
    $region26: #{a2c_forward.1} parent=1 // pred_check
      _
    $region27: #{a2c_forward.1} parent=1 // pred_check_branch
      %91 = sbr.rel (0) target = $region29
    $region28: #{a2c_forward.1} parent=1 // pred_region
      %s93 = ssub.s32 512, 512
      %94 = vsyncadd [#allocation11], %s93
      %s96 = sshll.u32 [#allocation12], 4
      %s97 = int_to_ptr.vmem [resolvable:$true] %s96
      %99 = dma.hbm_to_vmem [thread:$0]  %s6, 512, %s97, [#allocation11]
    $region29: #{a2c_forward.1} parent=1 // pred_fallthru
      _
    // Predicated region
    $region30: #{a2c_forward.1} parent=1 // pred_check
      _
    $region31: #{a2c_forward.1} parent=1 // pred_check_branch
      %101 = sbr.rel (0) target = $region33
    $region32: #{a2c_forward.1} parent=1 // pred_region
      %102 = dma.done [#allocation3], 8192
    $region33: #{a2c_forward.1} parent=1 // pred_fallthru
      _
    // Predicated region
    $region34: #{a2c_forward.1} parent=1 // pred_check
      _
    $region35: #{a2c_forward.1} parent=1 // pred_check_branch
      %104 = sbr.rel (0) target = $region37
    $region36: #{a2c_forward.1} parent=1 // pred_region
      %105 = dma.done [#allocation5], 8192
    $region37: #{a2c_forward.1} parent=1 // pred_fallthru
      _
    // Predicated region
    $region38: #{a2c_forward.1} parent=1 // pred_check
      _
    $region39: #{a2c_forward.1} parent=1 // pred_check_branch
      %107 = sbr.rel (0) target = $region41
    $region40: #{a2c_forward.1} parent=1 // pred_region
      %108 = dma.done [#allocation5], 4096
    $region41: #{a2c_forward.1} parent=1 // pred_fallthru
      _
    // Predicated region
    $region42: #{a2c_forward.1} parent=1 // pred_check
      _
    $region43: #{a2c_forward.1} parent=1 // pred_check_branch
      %110 = sbr.rel (0) target = $region45
    $region44: #{a2c_forward.1} parent=1 // pred_region
      %111 = dma.done [#allocation8], 1024
    $region45: #{a2c_forward.1} parent=1 // pred_fallthru
      _
    // Predicated region
    $region46: #{a2c_forward.1} parent=1 // pred_check
      _
    $region47: #{a2c_forward.1} parent=1 // pred_check_branch
      %113 = sbr.rel (0) target = $region49
    $region48: #{a2c_forward.1} parent=1 // pred_region
      %114 = dma.done [#allocation8], 16384
    $region49: #{a2c_forward.1} parent=1 // pred_fallthru
      _
    // Predicated region
    $region50: #{a2c_forward.1} parent=1 // pred_check
      _
    $region51: #{a2c_forward.1} parent=1 // pred_check_branch
      %116 = sbr.rel (0) target = $region53
    $region52: #{a2c_forward.1} parent=1 // pred_region
      %117 = dma.done [#allocation11], 8192
    $region53: #{a2c_forward.1} parent=1 // pred_fallthru
      _
    // Predicated region
    $region54: #{a2c_forward.1} parent=1 // pred_check
      _
    $region55: #{a2c_forward.1} parent=1 // pred_check_branch
      %119 = sbr.rel (0) target = $region57
    $region56: #{a2c_forward.1} parent=1 // pred_region
      %120 = dma.done [#allocation11], 512
    $region57: #{a2c_forward.1} parent=1 // pred_fallthru
      _
    %v122 = vld [vmem:[#allocation2] sm:$0xff]
    %v123 = vld [vmem:[#allocation2 + $0x8] sm:$0xff]
    %v124 = vld [vmem:[#allocation2 + $0x10] sm:$0xff]
    %v125 = vld [vmem:[#allocation2 + $0x18] sm:$0xff]
    %v126 = vld [vmem:[#allocation2 + $0x20] sm:$0xff]
    %v127 = vld [vmem:[#allocation2 + $0x28] sm:$0xff]
    %v128 = vld [vmem:[#allocation2 + $0x30] sm:$0xff]
    %v129 = vld [vmem:[#allocation2 + $0x38] sm:$0xff]
    %v130 = vld [vmem:[#allocation2 + $0x40] sm:$0xff]
    %v131 = vld [vmem:[#allocation2 + $0x48] sm:$0xff]
    %v132 = vld [vmem:[#allocation2 + $0x50] sm:$0xff]
    %v133 = vld [vmem:[#allocation2 + $0x58] sm:$0xff]
    %v134 = vld [vmem:[#allocation2 + $0x60] sm:$0xff]
    %v135 = vld [vmem:[#allocation2 + $0x68] sm:$0xff]
    %v136 = vld [vmem:[#allocation2 + $0x70] sm:$0xff]
    %v137 = vld [vmem:[#allocation2 + $0x78] sm:$0xff]
    %v138 = vld [vmem:[#allocation2 + $0x80] sm:$0xff]
    %v139 = vld [vmem:[#allocation2 + $0x88] sm:$0xff]
    %v140 = vld [vmem:[#allocation2 + $0x90] sm:$0xff]
    %v141 = vld [vmem:[#allocation2 + $0x98] sm:$0xff]
    %v142 = vld [vmem:[#allocation2 + $0xa0] sm:$0xff]
    %v143 = vld [vmem:[#allocation2 + $0xa8] sm:$0xff]
    %v144 = vld [vmem:[#allocation2 + $0xb0] sm:$0xff]
    %v145 = vld [vmem:[#allocation2 + $0xb8] sm:$0xff]
    %v146 = vld [vmem:[#allocation2 + $0xc0] sm:$0xff]
    %v147 = vld [vmem:[#allocation2 + $0xc8] sm:$0xff]
    %v148 = vld [vmem:[#allocation2 + $0xd0] sm:$0xff]
    %v149 = vld [vmem:[#allocation2 + $0xd8] sm:$0xff]
    %v150 = vld [vmem:[#allocation2 + $0xe0] sm:$0xff]
    %v151 = vld [vmem:[#allocation2 + $0xe8] sm:$0xff]
    %v152 = vld [vmem:[#allocation2 + $0xf0] sm:$0xff]
    %v153 = vld [vmem:[#allocation2 + $0xf8] sm:$0xff]
    %v154 = vld [vmem:[#allocation2 + $0x100] sm:$0xff]
    %v155 = vld [vmem:[#allocation2 + $0x108] sm:$0xff]
    %v156 = vld [vmem:[#allocation2 + $0x110] sm:$0xff]
    %v157 = vld [vmem:[#allocation2 + $0x118] sm:$0xff]
    %v158 = vld [vmem:[#allocation2 + $0x120] sm:$0xff]
    %v159 = vld [vmem:[#allocation2 + $0x128] sm:$0xff]
    %v160 = vld [vmem:[#allocation2 + $0x130] sm:$0xff]
    %v161 = vld [vmem:[#allocation2 + $0x138] sm:$0xff]
    %v162 = vld [vmem:[#allocation2 + $0x140] sm:$0xff]
    %v163 = vld [vmem:[#allocation2 + $0x148] sm:$0xff]
    %v164 = vld [vmem:[#allocation2 + $0x150] sm:$0xff]
    %v165 = vld [vmem:[#allocation2 + $0x158] sm:$0xff]
    %v166 = vld [vmem:[#allocation2 + $0x160] sm:$0xff]
    %v167 = vld [vmem:[#allocation2 + $0x168] sm:$0xff]
    %v168 = vld [vmem:[#allocation2 + $0x170] sm:$0xff]
    %v169 = vld [vmem:[#allocation2 + $0x178] sm:$0xff]
    %v170 = vld [vmem:[#allocation2 + $0x180] sm:$0xff]
    %v171 = vld [vmem:[#allocation2 + $0x188] sm:$0xff]
    %v172 = vld [vmem:[#allocation2 + $0x190] sm:$0xff]
    %v173 = vld [vmem:[#allocation2 + $0x198] sm:$0xff]
    %v174 = vld [vmem:[#allocation2 + $0x1a0] sm:$0xff]
    %v175 = vld [vmem:[#allocation2 + $0x1a8] sm:$0xff]
    %v176 = vld [vmem:[#allocation2 + $0x1b0] sm:$0xff]
    %v177 = vld [vmem:[#allocation2 + $0x1b8] sm:$0xff]
    %v178 = vld [vmem:[#allocation2 + $0x1c0] sm:$0xff]
    %v179 = vld [vmem:[#allocation2 + $0x1c8] sm:$0xff]
    %v180 = vld [vmem:[#allocation2 + $0x1d0] sm:$0xff]
    %v181 = vld [vmem:[#allocation2 + $0x1d8] sm:$0xff]
    %v182 = vld [vmem:[#allocation2 + $0x1e0] sm:$0xff]
    %v183 = vld [vmem:[#allocation2 + $0x1e8] sm:$0xff]
    %v184 = vld [vmem:[#allocation2 + $0x1f0] sm:$0xff]
    %v185 = vld [vmem:[#allocation2 + $0x1f8] sm:$0xff]
    %v186 = vpack.c.bf16 %v124, %v122
    %v187 = vpack.c.bf16 %v125, %v123
    %v188 = vpack.c.bf16 %v128, %v126
    %v189 = vpack.c.bf16 %v129, %v127
    %v190 = vpack.c.bf16 %v132, %v130
    %v191 = vpack.c.bf16 %v133, %v131
    %v192 = vpack.c.bf16 %v136, %v134
    %v193 = vpack.c.bf16 %v137, %v135
    %v194 = vpack.c.bf16 %v140, %v138
    %v195 = vpack.c.bf16 %v141, %v139
    %v196 = vpack.c.bf16 %v144, %v142
    %v197 = vpack.c.bf16 %v145, %v143
    %v198 = vpack.c.bf16 %v148, %v146
    %v199 = vpack.c.bf16 %v149, %v147
    %v200 = vpack.c.bf16 %v152, %v150
    %v201 = vpack.c.bf16 %v153, %v151
    %v202 = vpack.c.bf16 %v156, %v154
    %v203 = vpack.c.bf16 %v157, %v155
    %v204 = vpack.c.bf16 %v160, %v158
    %v205 = vpack.c.bf16 %v161, %v159
    %v206 = vpack.c.bf16 %v164, %v162
    %v207 = vpack.c.bf16 %v165, %v163
    %v208 = vpack.c.bf16 %v168, %v166
    %v209 = vpack.c.bf16 %v169, %v167
    %v210 = vpack.c.bf16 %v172, %v170
    %v211 = vpack.c.bf16 %v173, %v171
    %v212 = vpack.c.bf16 %v176, %v174
    %v213 = vpack.c.bf16 %v177, %v175
    %v214 = vpack.c.bf16 %v180, %v178
    %v215 = vpack.c.bf16 %v181, %v179
    %v216 = vpack.c.bf16 %v184, %v182
    %v217 = vpack.c.bf16 %v185, %v183
    %v218 = vld [vmem:[#allocation12] sm:$0xff]
    %v219 = vld [vmem:[#allocation12 + $0x8] sm:$0xff]
    %v220 = vld [vmem:[#allocation12 + $0x10] sm:$0xff]
    %v221 = vld [vmem:[#allocation12 + $0x18] sm:$0xff]
    %v222 = vld [vmem:[#allocation4] sm:$0xff]
    %v223 = vld [vmem:[#allocation4 + $0x8] sm:$0xff]
    %v224 = vld [vmem:[#allocation4 + $0x10] sm:$0xff]
    %v225 = vld [vmem:[#allocation4 + $0x18] sm:$0xff]
    %v226 = vld [vmem:[#allocation4 + $0x20] sm:$0xff]
    %v227 = vld [vmem:[#allocation4 + $0x28] sm:$0xff]
    %v228 = vld [vmem:[#allocation4 + $0x30] sm:$0xff]
    %v229 = vld [vmem:[#allocation4 + $0x38] sm:$0xff]
    %v230 = vld [vmem:[#allocation4 + $0x40] sm:$0xff]
    %v231 = vld [vmem:[#allocation4 + $0x48] sm:$0xff]
    %v232 = vld [vmem:[#allocation4 + $0x50] sm:$0xff]
    %v233 = vld [vmem:[#allocation4 + $0x58] sm:$0xff]
    %v234 = vld [vmem:[#allocation4 + $0x60] sm:$0xff]
    %v235 = vld [vmem:[#allocation4 + $0x68] sm:$0xff]
    %v236 = vld [vmem:[#allocation4 + $0x70] sm:$0xff]
    %v237 = vld [vmem:[#allocation4 + $0x78] sm:$0xff]
    %v238 = vld [vmem:[#allocation4 + $0x80] sm:$0xff]
    %v239 = vld [vmem:[#allocation4 + $0x88] sm:$0xff]
    %v240 = vld [vmem:[#allocation4 + $0x90] sm:$0xff]
    %v241 = vld [vmem:[#allocation4 + $0x98] sm:$0xff]
    %v242 = vld [vmem:[#allocation4 + $0xa0] sm:$0xff]
    %v243 = vld [vmem:[#allocation4 + $0xa8] sm:$0xff]
    %v244 = vld [vmem:[#allocation4 + $0xb0] sm:$0xff]
    %v245 = vld [vmem:[#allocation4 + $0xb8] sm:$0xff]
    %v246 = vld [vmem:[#allocation4 + $0xc0] sm:$0xff]
    %v247 = vld [vmem:[#allocation4 + $0xc8] sm:$0xff]
    %v248 = vld [vmem:[#allocation4 + $0xd0] sm:$0xff]
    %v249 = vld [vmem:[#allocation4 + $0xd8] sm:$0xff]
    %v250 = vld [vmem:[#allocation4 + $0xe0] sm:$0xff]
    %v251 = vld [vmem:[#allocation4 + $0xe8] sm:$0xff]
    %v252 = vld [vmem:[#allocation4 + $0xf0] sm:$0xff]
    %v253 = vld [vmem:[#allocation4 + $0xf8] sm:$0xff]
    %v254 = vld [vmem:[#allocation4 + $0x100] sm:$0xff]
    %v255 = vld [vmem:[#allocation4 + $0x108] sm:$0xff]
    %v256 = vld [vmem:[#allocation4 + $0x110] sm:$0xff]
    %v257 = vld [vmem:[#allocation4 + $0x118] sm:$0xff]
    %v258 = vld [vmem:[#allocation4 + $0x120] sm:$0xff]
    %v259 = vld [vmem:[#allocation4 + $0x128] sm:$0xff]
    %v260 = vld [vmem:[#allocation4 + $0x130] sm:$0xff]
    %v261 = vld [vmem:[#allocation4 + $0x138] sm:$0xff]
    %v262 = vld [vmem:[#allocation4 + $0x140] sm:$0xff]
    %v263 = vld [vmem:[#allocation4 + $0x148] sm:$0xff]
    %v264 = vld [vmem:[#allocation4 + $0x150] sm:$0xff]
    %v265 = vld [vmem:[#allocation4 + $0x158] sm:$0xff]
    %v266 = vld [vmem:[#allocation4 + $0x160] sm:$0xff]
    %v267 = vld [vmem:[#allocation4 + $0x168] sm:$0xff]
    %v268 = vld [vmem:[#allocation4 + $0x170] sm:$0xff]
    %v269 = vld [vmem:[#allocation4 + $0x178] sm:$0xff]
    %v270 = vld [vmem:[#allocation4 + $0x180] sm:$0xff]
    %v271 = vld [vmem:[#allocation4 + $0x188] sm:$0xff]
    %v272 = vld [vmem:[#allocation4 + $0x190] sm:$0xff]
    %v273 = vld [vmem:[#allocation4 + $0x198] sm:$0xff]
    %v274 = vld [vmem:[#allocation4 + $0x1a0] sm:$0xff]
    %v275 = vld [vmem:[#allocation4 + $0x1a8] sm:$0xff]
    %v276 = vld [vmem:[#allocation4 + $0x1b0] sm:$0xff]
    %v277 = vld [vmem:[#allocation4 + $0x1b8] sm:$0xff]
    %v278 = vld [vmem:[#allocation4 + $0x1c0] sm:$0xff]
    %v279 = vld [vmem:[#allocation4 + $0x1c8] sm:$0xff]
    %v280 = vld [vmem:[#allocation4 + $0x1d0] sm:$0xff]
    %v281 = vld [vmem:[#allocation4 + $0x1d8] sm:$0xff]
    %v282 = vld [vmem:[#allocation4 + $0x1e0] sm:$0xff]
    %v283 = vld [vmem:[#allocation4 + $0x1e8] sm:$0xff]
    %v284 = vld [vmem:[#allocation4 + $0x1f0] sm:$0xff]
    %v285 = vld [vmem:[#allocation4 + $0x1f8] sm:$0xff]
    %286 = vmatprep.subr.mxu0 %v153
    %287 = vmatpush1.msra.mxu0 %v152
    %288 = vmatprep.subr.mxu0 %v151
    %289 = vmatpush1.msra.mxu0 %v150
    %290 = vmatprep.subr.mxu0 %v149
    %291 = vmatpush1.msra.mxu0 %v148
    %292 = vmatprep.subr.mxu0 %v147
    %293 = vmatpush1.msra.mxu0 %v146
    %294 = vmatprep.subr.mxu0 %v145
    %295 = vmatpush1.msra.mxu0 %v144
    %296 = vmatprep.subr.mxu0 %v143
    %297 = vmatpush1.msra.mxu0 %v142
    %298 = vmatprep.subr.mxu0 %v141
    %299 = vmatpush1.msra.mxu0 %v140
    %300 = vmatprep.subr.mxu0 %v139
    %301 = vmatpush1.msra.mxu0 %v138
    %302 = vmatprep.subr.mxu0 %v137
    %303 = vmatpush1.msra.mxu0 %v136
    %304 = vmatprep.subr.mxu0 %v135
    %305 = vmatpush1.msra.mxu0 %v134
    %306 = vmatprep.subr.mxu0 %v133
    %307 = vmatpush1.msra.mxu0 %v132
    %308 = vmatprep.subr.mxu0 %v131
    %309 = vmatpush1.msra.mxu0 %v130
    %310 = vmatprep.subr.mxu0 %v129
    %311 = vmatpush1.msra.mxu0 %v128
    %312 = vmatprep.subr.mxu0 %v127
    %313 = vmatpush1.msra.mxu0 %v126
    %314 = vmatprep.subr.mxu0 %v125
    %315 = vmatpush1.msra.mxu0 %v124
    %316 = vmatprep.subr.mxu0 %v123
    %317 = vmatpush1.msra.mxu0 %v122
    %318 = vmatprep.subr.mxu0 %v185
    %319 = vmatpush2.msra.mxu0 %v184
    %320 = vmatprep.subr.mxu0 %v183
    %321 = vmatpush2.msra.mxu0 %v182
    %322 = vmatprep.subr.mxu0 %v181
    %323 = vmatpush2.msra.mxu0 %v180
    %324 = vmatprep.subr.mxu0 %v179
    %325 = vmatpush2.msra.mxu0 %v178
    %326 = vmatprep.subr.mxu0 %v177
    %327 = vmatpush2.msra.mxu0 %v176
    %328 = vmatprep.subr.mxu0 %v175
    %329 = vmatpush2.msra.mxu0 %v174
    %330 = vmatprep.subr.mxu0 %v173
    %331 = vmatpush2.msra.mxu0 %v172
    %332 = vmatprep.subr.mxu0 %v171
    %333 = vmatpush2.msra.mxu0 %v170
    %334 = vmatprep.subr.mxu0 %v169
    %335 = vmatpush2.msra.mxu0 %v168
    %336 = vmatprep.subr.mxu0 %v167
    %337 = vmatpush2.msra.mxu0 %v166
    %338 = vmatprep.subr.mxu0 %v165
    %339 = vmatpush2.msra.mxu0 %v164
    %340 = vmatprep.subr.mxu0 %v163
    %341 = vmatpush2.msra.mxu0 %v162
    %342 = vmatprep.subr.mxu0 %v161
    %343 = vmatpush2.msra.mxu0 %v160
    %344 = vmatprep.subr.mxu0 %v159
    %345 = vmatpush2.msra.mxu0 %v158
    %346 = vmatprep.subr.mxu0 %v157
    %347 = vmatpush2.msra.mxu0 %v156
    %348 = vmatprep.subr.mxu0 %v155
    %349 = vmatpush2.msra.mxu0 %v154
    %350 = vmatprep.mubr.f32.mxu0 %v223
    %351 = vmatmul.mubr.f32.gmra.mxu0 %v222
    %v352 = vpop.f32.mrf.mxu0
    %v353 = vadd.f32 0.0, %v352
    %v354 = vpop.f32.mrf.mxu0
    %v355 = vadd.f32 0.0, %v354
    %356 = vmatprep.mubr.f32.mxu0 %v225
    %357 = vmatmul.mubr.f32.gmra.mxu0 %v224
    %v358 = vpop.f32.mrf.mxu0
    %v359 = vadd.f32 0.0, %v358
    %v360 = vpop.f32.mrf.mxu0
    %v361 = vadd.f32 0.0, %v360
    %362 = vmatprep.mubr.f32.mxu0 %v227
    %363 = vmatmul.mubr.f32.gmra.mxu0 %v226
    %v364 = vpop.f32.mrf.mxu0
    %v365 = vadd.f32 0.0, %v364
    %v366 = vpop.f32.mrf.mxu0
    %v367 = vadd.f32 0.0, %v366
    %368 = vmatprep.mubr.f32.mxu0 %v229
    %369 = vmatmul.mubr.f32.gmra.mxu0 %v228
    %v370 = vpop.f32.mrf.mxu0
    %v371 = vadd.f32 0.0, %v370
    %v372 = vpop.f32.mrf.mxu0
    %v373 = vadd.f32 0.0, %v372
    %374 = vmatprep.mubr.f32.mxu0 %v231
    %375 = vmatmul.mubr.f32.gmra.mxu0 %v230
    %v376 = vpop.f32.mrf.mxu0
    %v377 = vadd.f32 0.0, %v376
    %v378 = vpop.f32.mrf.mxu0
    %v379 = vadd.f32 0.0, %v378
    %380 = vmatprep.mubr.f32.mxu0 %v233
    %381 = vmatmul.mubr.f32.gmra.mxu0 %v232
    %v382 = vpop.f32.mrf.mxu0
    %v383 = vadd.f32 0.0, %v382
    %v384 = vpop.f32.mrf.mxu0
    %v385 = vadd.f32 0.0, %v384
    %386 = vmatprep.mubr.f32.mxu0 %v235
    %387 = vmatmul.mubr.f32.gmra.mxu0 %v234
    %v388 = vpop.f32.mrf.mxu0
    %v389 = vadd.f32 0.0, %v388
    %v390 = vpop.f32.mrf.mxu0
    %v391 = vadd.f32 0.0, %v390
    %392 = vmatprep.mubr.f32.mxu0 %v237
    %393 = vmatmul.mubr.f32.gmra.mxu0 %v236
    %v394 = vpop.f32.mrf.mxu0
    %v395 = vadd.f32 0.0, %v394
    %v396 = vpop.f32.mrf.mxu0
    %v397 = vadd.f32 0.0, %v396
    %398 = vmatprep.mubr.f32.mxu0 %v239
    %399 = vmatmul.mubr.f32.gmra.mxu0 %v238
    %v400 = vpop.f32.mrf.mxu0
    %v401 = vadd.f32 0.0, %v400
    %v402 = vpop.f32.mrf.mxu0
    %v403 = vadd.f32 0.0, %v402
    %404 = vmatprep.mubr.f32.mxu0 %v241
    %405 = vmatmul.mubr.f32.gmra.mxu0 %v240
    %v406 = vpop.f32.mrf.mxu0
    %v407 = vadd.f32 0.0, %v406
    %v408 = vpop.f32.mrf.mxu0
    %v409 = vadd.f32 0.0, %v408
    %410 = vmatprep.mubr.f32.mxu0 %v243
    %411 = vmatmul.mubr.f32.gmra.mxu0 %v242
    %v412 = vpop.f32.mrf.mxu0
    %v413 = vadd.f32 0.0, %v412
    %v414 = vpop.f32.mrf.mxu0
    %v415 = vadd.f32 0.0, %v414
    %416 = vmatprep.mubr.f32.mxu0 %v245
    %417 = vmatmul.mubr.f32.gmra.mxu0 %v244
    %v418 = vpop.f32.mrf.mxu0
    %v419 = vadd.f32 0.0, %v418
    %v420 = vpop.f32.mrf.mxu0
    %v421 = vadd.f32 0.0, %v420
    %422 = vmatprep.mubr.f32.mxu0 %v247
    %423 = vmatmul.mubr.f32.gmra.mxu0 %v246
    %v424 = vpop.f32.mrf.mxu0
    %v425 = vadd.f32 0.0, %v424
    %v426 = vpop.f32.mrf.mxu0
    %v427 = vadd.f32 0.0, %v426
    %428 = vmatprep.mubr.f32.mxu0 %v249
    %429 = vmatmul.mubr.f32.gmra.mxu0 %v248
    %v430 = vpop.f32.mrf.mxu0
    %v431 = vadd.f32 0.0, %v430
    %v432 = vpop.f32.mrf.mxu0
    %v433 = vadd.f32 0.0, %v432
    %434 = vmatprep.mubr.f32.mxu0 %v251
    %435 = vmatmul.mubr.f32.gmra.mxu0 %v250
    %v436 = vpop.f32.mrf.mxu0
    %v437 = vadd.f32 0.0, %v436
    %v438 = vpop.f32.mrf.mxu0
    %v439 = vadd.f32 0.0, %v438
    %440 = vmatprep.mubr.f32.mxu0 %v253
    %441 = vmatmul.mubr.f32.gmra.mxu0 %v252
    %v442 = vpop.f32.mrf.mxu0
    %v443 = vadd.f32 0.0, %v442
    %v444 = vpop.f32.mrf.mxu0
    %v445 = vadd.f32 0.0, %v444
    %446 = vmatprep.mubr.f32.mxu0 %v255
    %447 = vmatmul.mubr.f32.gmra.mxu0 %v254
    %v448 = vpop.f32.mrf.mxu0
    %v449 = vadd.f32 0.0, %v448
    %v450 = vpop.f32.mrf.mxu0
    %v451 = vadd.f32 0.0, %v450
    %452 = vmatprep.mubr.f32.mxu0 %v257
    %453 = vmatmul.mubr.f32.gmra.mxu0 %v256
    %v454 = vpop.f32.mrf.mxu0
    %v455 = vadd.f32 0.0, %v454
    %v456 = vpop.f32.mrf.mxu0
    %v457 = vadd.f32 0.0, %v456
    %458 = vmatprep.mubr.f32.mxu0 %v259
    %459 = vmatmul.mubr.f32.gmra.mxu0 %v258
    %v460 = vpop.f32.mrf.mxu0
    %v461 = vadd.f32 0.0, %v460
    %v462 = vpop.f32.mrf.mxu0
    %v463 = vadd.f32 0.0, %v462
    %464 = vmatprep.mubr.f32.mxu0 %v261
    %465 = vmatmul.mubr.f32.gmra.mxu0 %v260
    %v466 = vpop.f32.mrf.mxu0
    %v467 = vadd.f32 0.0, %v466
    %v468 = vpop.f32.mrf.mxu0
    %v469 = vadd.f32 0.0, %v468
    %470 = vmatprep.mubr.f32.mxu0 %v263
    %471 = vmatmul.mubr.f32.gmra.mxu0 %v262
    %v472 = vpop.f32.mrf.mxu0
    %v473 = vadd.f32 0.0, %v472
    %v474 = vpop.f32.mrf.mxu0
    %v475 = vadd.f32 0.0, %v474
    %476 = vmatprep.mubr.f32.mxu0 %v265
    %477 = vmatmul.mubr.f32.gmra.mxu0 %v264
    %v478 = vpop.f32.mrf.mxu0
    %v479 = vadd.f32 0.0, %v478
    %v480 = vpop.f32.mrf.mxu0
    %v481 = vadd.f32 0.0, %v480
    %482 = vmatprep.mubr.f32.mxu0 %v267
    %483 = vmatmul.mubr.f32.gmra.mxu0 %v266
    %v484 = vpop.f32.mrf.mxu0
    %v485 = vadd.f32 0.0, %v484
    %v486 = vpop.f32.mrf.mxu0
    %v487 = vadd.f32 0.0, %v486
    %488 = vmatprep.mubr.f32.mxu0 %v269
    %489 = vmatmul.mubr.f32.gmra.mxu0 %v268
    %v490 = vpop.f32.mrf.mxu0
    %v491 = vadd.f32 0.0, %v490
    %v492 = vpop.f32.mrf.mxu0
    %v493 = vadd.f32 0.0, %v492
    %494 = vmatprep.mubr.f32.mxu0 %v271
    %495 = vmatmul.mubr.f32.gmra.mxu0 %v270
    %v496 = vpop.f32.mrf.mxu0
    %v497 = vadd.f32 0.0, %v496
    %v498 = vpop.f32.mrf.mxu0
    %v499 = vadd.f32 0.0, %v498
    %500 = vmatprep.mubr.f32.mxu0 %v273
    %501 = vmatmul.mubr.f32.gmra.mxu0 %v272
    %v502 = vpop.f32.mrf.mxu0
    %v503 = vadd.f32 0.0, %v502
    %v504 = vpop.f32.mrf.mxu0
    %v505 = vadd.f32 0.0, %v504
    %506 = vmatprep.mubr.f32.mxu0 %v275
    %507 = vmatmul.mubr.f32.gmra.mxu0 %v274
    %v508 = vpop.f32.mrf.mxu0
    %v509 = vadd.f32 0.0, %v508
    %v510 = vpop.f32.mrf.mxu0
    %v511 = vadd.f32 0.0, %v510
    %512 = vmatprep.mubr.f32.mxu0 %v277
    %513 = vmatmul.mubr.f32.gmra.mxu0 %v276
    %v514 = vpop.f32.mrf.mxu0
    %v515 = vadd.f32 0.0, %v514
    %v516 = vpop.f32.mrf.mxu0
    %v517 = vadd.f32 0.0, %v516
    %518 = vmatprep.mubr.f32.mxu0 %v279
    %519 = vmatmul.mubr.f32.gmra.mxu0 %v278
    %v520 = vpop.f32.mrf.mxu0
    %v521 = vadd.f32 0.0, %v520
    %v522 = vpop.f32.mrf.mxu0
    %v523 = vadd.f32 0.0, %v522
    %524 = vmatprep.mubr.f32.mxu0 %v281
    %525 = vmatmul.mubr.f32.gmra.mxu0 %v280
    %v526 = vpop.f32.mrf.mxu0
    %v527 = vadd.f32 0.0, %v526
    %v528 = vpop.f32.mrf.mxu0
    %v529 = vadd.f32 0.0, %v528
    %530 = vmatprep.mubr.f32.mxu0 %v283
    %531 = vmatmul.mubr.f32.gmra.mxu0 %v282
    %v532 = vpop.f32.mrf.mxu0
    %v533 = vadd.f32 0.0, %v532
    %v534 = vpop.f32.mrf.mxu0
    %v535 = vadd.f32 0.0, %v534
    %536 = vmatprep.mubr.f32.mxu0 %v285
    %537 = vmatmul.mubr.f32.gmra.mxu0 %v284
    %v538 = vpop.f32.mrf.mxu0
    %v539 = vadd.f32 0.0, %v538
    %v540 = vpop.f32.mrf.mxu0
    %v541 = vadd.f32 0.0, %v540
    %542 = vdwg.mxu0
    %v543 = vld [vmem:[#allocation6] sm:$0xff]
    %v544 = vld [vmem:[#allocation6 + $0x8] sm:$0xff]
    %v545 = vld [vmem:[#allocation6 + $0x10] sm:$0xff]
    %v546 = vld [vmem:[#allocation6 + $0x18] sm:$0xff]
    %v547 = vld [vmem:[#allocation6 + $0x20] sm:$0xff]
    %v548 = vld [vmem:[#allocation6 + $0x28] sm:$0xff]
    %v549 = vld [vmem:[#allocation6 + $0x30] sm:$0xff]
    %v550 = vld [vmem:[#allocation6 + $0x38] sm:$0xff]
    %v551 = vld [vmem:[#allocation6 + $0x40] sm:$0xff]
    %v552 = vld [vmem:[#allocation6 + $0x48] sm:$0xff]
    %v553 = vld [vmem:[#allocation6 + $0x50] sm:$0xff]
    %v554 = vld [vmem:[#allocation6 + $0x58] sm:$0xff]
    %v555 = vld [vmem:[#allocation6 + $0x60] sm:$0xff]
    %v556 = vld [vmem:[#allocation6 + $0x68] sm:$0xff]
    %v557 = vld [vmem:[#allocation6 + $0x70] sm:$0xff]
    %v558 = vld [vmem:[#allocation6 + $0x78] sm:$0xff]
    %v559 = vld [vmem:[#allocation6 + $0x80] sm:$0xff]
    %v560 = vld [vmem:[#allocation6 + $0x88] sm:$0xff]
    %v561 = vld [vmem:[#allocation6 + $0x90] sm:$0xff]
    %v562 = vld [vmem:[#allocation6 + $0x98] sm:$0xff]
    %v563 = vld [vmem:[#allocation6 + $0xa0] sm:$0xff]
    %v564 = vld [vmem:[#allocation6 + $0xa8] sm:$0xff]
    %v565 = vld [vmem:[#allocation6 + $0xb0] sm:$0xff]
    %v566 = vld [vmem:[#allocation6 + $0xb8] sm:$0xff]
    %v567 = vld [vmem:[#allocation6 + $0xc0] sm:$0xff]
    %v568 = vld [vmem:[#allocation6 + $0xc8] sm:$0xff]
    %v569 = vld [vmem:[#allocation6 + $0xd0] sm:$0xff]
    %v570 = vld [vmem:[#allocation6 + $0xd8] sm:$0xff]
    %v571 = vld [vmem:[#allocation6 + $0xe0] sm:$0xff]
    %v572 = vld [vmem:[#allocation6 + $0xe8] sm:$0xff]
    %v573 = vld [vmem:[#allocation6 + $0xf0] sm:$0xff]
    %v574 = vld [vmem:[#allocation6 + $0xf8] sm:$0xff]
    %v607 = vunpack.c.l.b16 %v543
    %v608 = vunpack.c.h.b16 %v543
    %v609 = vunpack.c.l.b16 %v544
    %v610 = vunpack.c.h.b16 %v544
    %v611 = vunpack.c.l.b16 %v545
    %v612 = vunpack.c.h.b16 %v545
    %v613 = vunpack.c.l.b16 %v546
    %v614 = vunpack.c.h.b16 %v546
    %v615 = vunpack.c.l.b16 %v547
    %v616 = vunpack.c.h.b16 %v547
    %v617 = vunpack.c.l.b16 %v548
    %v618 = vunpack.c.h.b16 %v548
    %v619 = vunpack.c.l.b16 %v549
    %v620 = vunpack.c.h.b16 %v549
    %v621 = vunpack.c.l.b16 %v550
    %v622 = vunpack.c.h.b16 %v550
    %v623 = vunpack.c.l.b16 %v551
    %v624 = vunpack.c.h.b16 %v551
    %v625 = vunpack.c.l.b16 %v552
    %v626 = vunpack.c.h.b16 %v552
    %v627 = vunpack.c.l.b16 %v553
    %v628 = vunpack.c.h.b16 %v553
    %v629 = vunpack.c.l.b16 %v554
    %v630 = vunpack.c.h.b16 %v554
    %v631 = vunpack.c.l.b16 %v555
    %v632 = vunpack.c.h.b16 %v555
    %v633 = vunpack.c.l.b16 %v556
    %v634 = vunpack.c.h.b16 %v556
    %v635 = vunpack.c.l.b16 %v557
    %v636 = vunpack.c.h.b16 %v557
    %v637 = vunpack.c.l.b16 %v558
    %v638 = vunpack.c.h.b16 %v558
    %v639 = vunpack.c.l.b16 %v559
    %v640 = vunpack.c.h.b16 %v559
    %v641 = vunpack.c.l.b16 %v560
    %v642 = vunpack.c.h.b16 %v560
    %v643 = vunpack.c.l.b16 %v561
    %v644 = vunpack.c.h.b16 %v561
    %v645 = vunpack.c.l.b16 %v562
    %v646 = vunpack.c.h.b16 %v562
    %v647 = vunpack.c.l.b16 %v563
    %v648 = vunpack.c.h.b16 %v563
    %v649 = vunpack.c.l.b16 %v564
    %v650 = vunpack.c.h.b16 %v564
    %v651 = vunpack.c.l.b16 %v565
    %v652 = vunpack.c.h.b16 %v565
    %v653 = vunpack.c.l.b16 %v566
    %v654 = vunpack.c.h.b16 %v566
    %v655 = vunpack.c.l.b16 %v567
    %v656 = vunpack.c.h.b16 %v567
    %v657 = vunpack.c.l.b16 %v568
    %v658 = vunpack.c.h.b16 %v568
    %v659 = vunpack.c.l.b16 %v569
    %v660 = vunpack.c.h.b16 %v569
    %v661 = vunpack.c.l.b16 %v570
    %v662 = vunpack.c.h.b16 %v570
    %v663 = vunpack.c.l.b16 %v571
    %v664 = vunpack.c.h.b16 %v571
    %v665 = vunpack.c.l.b16 %v572
    %v666 = vunpack.c.h.b16 %v572
    %v667 = vunpack.c.l.b16 %v573
    %v668 = vunpack.c.h.b16 %v573
    %v669 = vunpack.c.l.b16 %v574
    %v670 = vunpack.c.h.b16 %v574
    %v671 = vpack.c.b16 %v609, %v607
    %v672 = vpack.c.b16 %v610, %v608
    %v673 = vpack.c.b16 %v613, %v611
    %v674 = vpack.c.b16 %v614, %v612
    %v675 = vpack.c.b16 %v617, %v615
    %v676 = vpack.c.b16 %v618, %v616
    %v677 = vpack.c.b16 %v621, %v619
    %v678 = vpack.c.b16 %v622, %v620
    %v679 = vpack.c.b16 %v625, %v623
    %v680 = vpack.c.b16 %v626, %v624
    %v681 = vpack.c.b16 %v629, %v627
    %v682 = vpack.c.b16 %v630, %v628
    %v683 = vpack.c.b16 %v633, %v631
    %v684 = vpack.c.b16 %v634, %v632
    %v685 = vpack.c.b16 %v637, %v635
    %v686 = vpack.c.b16 %v638, %v636
    %v687 = vpack.c.b16 %v641, %v639
    %v688 = vpack.c.b16 %v642, %v640
    %v689 = vpack.c.b16 %v645, %v643
    %v690 = vpack.c.b16 %v646, %v644
    %v691 = vpack.c.b16 %v649, %v647
    %v692 = vpack.c.b16 %v650, %v648
    %v693 = vpack.c.b16 %v653, %v651
    %v694 = vpack.c.b16 %v654, %v652
    %v695 = vpack.c.b16 %v657, %v655
    %v696 = vpack.c.b16 %v658, %v656
    %v697 = vpack.c.b16 %v661, %v659
    %v698 = vpack.c.b16 %v662, %v660
    %v699 = vpack.c.b16 %v665, %v663
    %v700 = vpack.c.b16 %v666, %v664
    %v701 = vpack.c.b16 %v669, %v667
    %v702 = vpack.c.b16 %v670, %v668
    %735 = vmatprep.subr.bf16.mxu0 %v201
    %736 = vmatpush1.bf16.msra.mxu0 %v200
    %737 = vmatprep.subr.bf16.mxu0 %v199
    %738 = vmatpush1.bf16.msra.mxu0 %v198
    %739 = vmatprep.subr.bf16.mxu0 %v197
    %740 = vmatpush1.bf16.msra.mxu0 %v196
    %741 = vmatprep.subr.bf16.mxu0 %v195
    %742 = vmatpush1.bf16.msra.mxu0 %v194
    %743 = vmatprep.subr.bf16.mxu0 %v193
    %744 = vmatpush1.bf16.msra.mxu0 %v192
    %745 = vmatprep.subr.bf16.mxu0 %v191
    %746 = vmatpush1.bf16.msra.mxu0 %v190
    %747 = vmatprep.subr.bf16.mxu0 %v189
    %748 = vmatpush1.bf16.msra.mxu0 %v188
    %749 = vmatprep.subr.bf16.mxu0 %v187
    %750 = vmatpush1.bf16.msra.mxu0 %v186
    %751 = vmatprep.subr.bf16.mxu0 %v217
    %752 = vmatpush2.bf16.msra.mxu0 %v216
    %753 = vmatprep.subr.bf16.mxu0 %v215
    %754 = vmatpush2.bf16.msra.mxu0 %v214
    %755 = vmatprep.subr.bf16.mxu0 %v213
    %756 = vmatpush2.bf16.msra.mxu0 %v212
    %757 = vmatprep.subr.bf16.mxu0 %v211
    %758 = vmatpush2.bf16.msra.mxu0 %v210
    %759 = vmatprep.subr.bf16.mxu0 %v209
    %760 = vmatpush2.bf16.msra.mxu0 %v208
    %761 = vmatprep.subr.bf16.mxu0 %v207
    %762 = vmatpush2.bf16.msra.mxu0 %v206
    %763 = vmatprep.subr.bf16.mxu0 %v205
    %764 = vmatpush2.bf16.msra.mxu0 %v204
    %765 = vmatprep.subr.bf16.mxu0 %v203
    %766 = vmatpush2.bf16.msra.mxu0 %v202
    %767 = vmatprep.mubr.bf16.mxu0 %v672
    %768 = vmatmul.mubr.bf16.gmra.mxu0 %v671
    %v769 = vpop.f32.mrf.mxu0
    %v770 = vadd.f32 0.0, %v769
    %v771 = vpop.f32.mrf.mxu0
    %v772 = vadd.f32 0.0, %v771
    %v773 = vpop.f32.mrf.mxu0
    %v774 = vadd.f32 0.0, %v773
    %v775 = vpop.f32.mrf.mxu0
    %v776 = vadd.f32 0.0, %v775
    %777 = vmatprep.mubr.bf16.mxu0 %v674
    %778 = vmatmul.mubr.bf16.gmra.mxu0 %v673
    %v779 = vpop.f32.mrf.mxu0
    %v780 = vadd.f32 0.0, %v779
    %v781 = vpop.f32.mrf.mxu0
    %v782 = vadd.f32 0.0, %v781
    %v783 = vpop.f32.mrf.mxu0
    %v784 = vadd.f32 0.0, %v783
    %v785 = vpop.f32.mrf.mxu0
    %v786 = vadd.f32 0.0, %v785
    %787 = vmatprep.mubr.bf16.mxu0 %v676
    %788 = vmatmul.mubr.bf16.gmra.mxu0 %v675
    %v789 = vpop.f32.mrf.mxu0
    %v790 = vadd.f32 0.0, %v789
    %v791 = vpop.f32.mrf.mxu0
    %v792 = vadd.f32 0.0, %v791
    %v793 = vpop.f32.mrf.mxu0
    %v794 = vadd.f32 0.0, %v793
    %v795 = vpop.f32.mrf.mxu0
    %v796 = vadd.f32 0.0, %v795
    %797 = vmatprep.mubr.bf16.mxu0 %v678
    %798 = vmatmul.mubr.bf16.gmra.mxu0 %v677
    %v799 = vpop.f32.mrf.mxu0
    %v800 = vadd.f32 0.0, %v799
    %v801 = vpop.f32.mrf.mxu0
    %v802 = vadd.f32 0.0, %v801
    %v803 = vpop.f32.mrf.mxu0
    %v804 = vadd.f32 0.0, %v803
    %v805 = vpop.f32.mrf.mxu0
    %v806 = vadd.f32 0.0, %v805
    %807 = vmatprep.mubr.bf16.mxu0 %v680
    %808 = vmatmul.mubr.bf16.gmra.mxu0 %v679
    %v809 = vpop.f32.mrf.mxu0
    %v810 = vadd.f32 0.0, %v809
    %v811 = vpop.f32.mrf.mxu0
    %v812 = vadd.f32 0.0, %v811
    %v813 = vpop.f32.mrf.mxu0
    %v814 = vadd.f32 0.0, %v813
    %v815 = vpop.f32.mrf.mxu0
    %v816 = vadd.f32 0.0, %v815
    %817 = vmatprep.mubr.bf16.mxu0 %v682
    %818 = vmatmul.mubr.bf16.gmra.mxu0 %v681
    %v819 = vpop.f32.mrf.mxu0
    %v820 = vadd.f32 0.0, %v819
    %v821 = vpop.f32.mrf.mxu0
    %v822 = vadd.f32 0.0, %v821
    %v823 = vpop.f32.mrf.mxu0
    %v824 = vadd.f32 0.0, %v823
    %v825 = vpop.f32.mrf.mxu0
    %v826 = vadd.f32 0.0, %v825
    %827 = vmatprep.mubr.bf16.mxu0 %v684
    %828 = vmatmul.mubr.bf16.gmra.mxu0 %v683
    %v829 = vpop.f32.mrf.mxu0
    %v830 = vadd.f32 0.0, %v829
    %v831 = vpop.f32.mrf.mxu0
    %v832 = vadd.f32 0.0, %v831
    %v833 = vpop.f32.mrf.mxu0
    %v834 = vadd.f32 0.0, %v833
    %v835 = vpop.f32.mrf.mxu0
    %v836 = vadd.f32 0.0, %v835
    %837 = vmatprep.mubr.bf16.mxu0 %v686
    %838 = vmatmul.mubr.bf16.gmra.mxu0 %v685
    %v839 = vpop.f32.mrf.mxu0
    %v840 = vadd.f32 0.0, %v839
    %v841 = vpop.f32.mrf.mxu0
    %v842 = vadd.f32 0.0, %v841
    %v843 = vpop.f32.mrf.mxu0
    %v844 = vadd.f32 0.0, %v843
    %v845 = vpop.f32.mrf.mxu0
    %v846 = vadd.f32 0.0, %v845
    %847 = vmatprep.mubr.bf16.mxu0 %v688
    %848 = vmatmul.mubr.bf16.gmra.mxu0 %v687
    %v849 = vpop.f32.mrf.mxu0
    %v850 = vadd.f32 0.0, %v849
    %v851 = vpop.f32.mrf.mxu0
    %v852 = vadd.f32 0.0, %v851
    %v853 = vpop.f32.mrf.mxu0
    %v854 = vadd.f32 0.0, %v853
    %v855 = vpop.f32.mrf.mxu0
    %v856 = vadd.f32 0.0, %v855
    %857 = vmatprep.mubr.bf16.mxu0 %v690
    %858 = vmatmul.mubr.bf16.gmra.mxu0 %v689
    %v859 = vpop.f32.mrf.mxu0
    %v860 = vadd.f32 0.0, %v859
    %v861 = vpop.f32.mrf.mxu0
    %v862 = vadd.f32 0.0, %v861
    %v863 = vpop.f32.mrf.mxu0
    %v864 = vadd.f32 0.0, %v863
    %v865 = vpop.f32.mrf.mxu0
    %v866 = vadd.f32 0.0, %v865
    %867 = vmatprep.mubr.bf16.mxu0 %v692
    %868 = vmatmul.mubr.bf16.gmra.mxu0 %v691
    %v869 = vpop.f32.mrf.mxu0
    %v870 = vadd.f32 0.0, %v869
    %v871 = vpop.f32.mrf.mxu0
    %v872 = vadd.f32 0.0, %v871
    %v873 = vpop.f32.mrf.mxu0
    %v874 = vadd.f32 0.0, %v873
    %v875 = vpop.f32.mrf.mxu0
    %v876 = vadd.f32 0.0, %v875
    %877 = vmatprep.mubr.bf16.mxu0 %v694
    %878 = vmatmul.mubr.bf16.gmra.mxu0 %v693
    %v879 = vpop.f32.mrf.mxu0
    %v880 = vadd.f32 0.0, %v879
    %v881 = vpop.f32.mrf.mxu0
    %v882 = vadd.f32 0.0, %v881
    %v883 = vpop.f32.mrf.mxu0
    %v884 = vadd.f32 0.0, %v883
    %v885 = vpop.f32.mrf.mxu0
    %v886 = vadd.f32 0.0, %v885
    %887 = vmatprep.mubr.bf16.mxu0 %v696
    %888 = vmatmul.mubr.bf16.gmra.mxu0 %v695
    %v889 = vpop.f32.mrf.mxu0
    %v890 = vadd.f32 0.0, %v889
    %v891 = vpop.f32.mrf.mxu0
    %v892 = vadd.f32 0.0, %v891
    %v893 = vpop.f32.mrf.mxu0
    %v894 = vadd.f32 0.0, %v893
    %v895 = vpop.f32.mrf.mxu0
    %v896 = vadd.f32 0.0, %v895
    %897 = vmatprep.mubr.bf16.mxu0 %v698
    %898 = vmatmul.mubr.bf16.gmra.mxu0 %v697
    %v899 = vpop.f32.mrf.mxu0
    %v900 = vadd.f32 0.0, %v899
    %v901 = vpop.f32.mrf.mxu0
    %v902 = vadd.f32 0.0, %v901
    %v903 = vpop.f32.mrf.mxu0
    %v904 = vadd.f32 0.0, %v903
    %v905 = vpop.f32.mrf.mxu0
    %v906 = vadd.f32 0.0, %v905
    %907 = vmatprep.mubr.bf16.mxu0 %v700
    %908 = vmatmul.mubr.bf16.gmra.mxu0 %v699
    %v909 = vpop.f32.mrf.mxu0
    %v910 = vadd.f32 0.0, %v909
    %v911 = vpop.f32.mrf.mxu0
    %v912 = vadd.f32 0.0, %v911
    %v913 = vpop.f32.mrf.mxu0
    %v914 = vadd.f32 0.0, %v913
    %v915 = vpop.f32.mrf.mxu0
    %v916 = vadd.f32 0.0, %v915
    %917 = vmatprep.mubr.bf16.mxu0 %v702
    %918 = vmatmul.mubr.bf16.gmra.mxu0 %v701
    %v919 = vpop.f32.mrf.mxu0
    %v920 = vadd.f32 0.0, %v919
    %v921 = vpop.f32.mrf.mxu0
    %v922 = vadd.f32 0.0, %v921
    %v923 = vpop.f32.mrf.mxu0
    %v924 = vadd.f32 0.0, %v923
    %v925 = vpop.f32.mrf.mxu0
    %v926 = vadd.f32 0.0, %v925
    %927 = vdwg.mxu0
    %v928 = vpack.c.bf16 %v774, %v770
    %v929 = vpack.c.bf16 %v776, %v772
    %v930 = vpack.c.bf16 %v784, %v780
    %v931 = vpack.c.bf16 %v786, %v782
    %v932 = vpack.c.bf16 %v794, %v790
    %v933 = vpack.c.bf16 %v796, %v792
    %v934 = vpack.c.bf16 %v804, %v800
    %v935 = vpack.c.bf16 %v806, %v802
    %v936 = vpack.c.bf16 %v814, %v810
    %v937 = vpack.c.bf16 %v816, %v812
    %v938 = vpack.c.bf16 %v824, %v820
    %v939 = vpack.c.bf16 %v826, %v822
    %v940 = vpack.c.bf16 %v834, %v830
    %v941 = vpack.c.bf16 %v836, %v832
    %v942 = vpack.c.bf16 %v844, %v840
    %v943 = vpack.c.bf16 %v846, %v842
    %v944 = vpack.c.bf16 %v854, %v850
    %v945 = vpack.c.bf16 %v856, %v852
    %v946 = vpack.c.bf16 %v864, %v860
    %v947 = vpack.c.bf16 %v866, %v862
    %v948 = vpack.c.bf16 %v874, %v870
    %v949 = vpack.c.bf16 %v876, %v872
    %v950 = vpack.c.bf16 %v884, %v880
    %v951 = vpack.c.bf16 %v886, %v882
    %v952 = vpack.c.bf16 %v894, %v890
    %v953 = vpack.c.bf16 %v896, %v892
    %v954 = vpack.c.bf16 %v904, %v900
    %v955 = vpack.c.bf16 %v906, %v902
    %v956 = vpack.c.bf16 %v914, %v910
    %v957 = vpack.c.bf16 %v916, %v912
    %v958 = vpack.c.bf16 %v924, %v920
    %v959 = vpack.c.bf16 %v926, %v922
    %v960 = vld [vmem:[#allocation9] sm:$0xff]
    %v961 = vld [vmem:[#allocation9 + $0x8] sm:$0xff]
    %v962 = vld [vmem:[#allocation9 + $0x10] sm:$0xff]
    %v963 = vld [vmem:[#allocation9 + $0x18] sm:$0xff]
    %v964 = vld [vmem:[#allocation9 + $0x20] sm:$0xff]
    %v965 = vld [vmem:[#allocation9 + $0x28] sm:$0xff]
    %v966 = vld [vmem:[#allocation9 + $0x30] sm:$0xff]
    %v967 = vld [vmem:[#allocation9 + $0x38] sm:$0xff]
    %v968 = vld [vmem:[#allocation9 + $0x40] sm:$0xff]
    %v969 = vld [vmem:[#allocation9 + $0x48] sm:$0xff]
    %v970 = vld [vmem:[#allocation9 + $0x50] sm:$0xff]
    %v971 = vld [vmem:[#allocation9 + $0x58] sm:$0xff]
    %v972 = vld [vmem:[#allocation9 + $0x60] sm:$0xff]
    %v973 = vld [vmem:[#allocation9 + $0x68] sm:$0xff]
    %v974 = vld [vmem:[#allocation9 + $0x70] sm:$0xff]
    %v975 = vld [vmem:[#allocation9 + $0x78] sm:$0xff]
    %v976 = vld [vmem:[#allocation9 + $0x80] sm:$0xff]
    %v977 = vld [vmem:[#allocation9 + $0x88] sm:$0xff]
    %v978 = vld [vmem:[#allocation9 + $0x90] sm:$0xff]
    %v979 = vld [vmem:[#allocation9 + $0x98] sm:$0xff]
    %v980 = vld [vmem:[#allocation9 + $0xa0] sm:$0xff]
    %v981 = vld [vmem:[#allocation9 + $0xa8] sm:$0xff]
    %v982 = vld [vmem:[#allocation9 + $0xb0] sm:$0xff]
    %v983 = vld [vmem:[#allocation9 + $0xb8] sm:$0xff]
    %v984 = vld [vmem:[#allocation9 + $0xc0] sm:$0xff]
    %v985 = vld [vmem:[#allocation9 + $0xc8] sm:$0xff]
    %v986 = vld [vmem:[#allocation9 + $0xd0] sm:$0xff]
    %v987 = vld [vmem:[#allocation9 + $0xd8] sm:$0xff]
    %v988 = vld [vmem:[#allocation9 + $0xe0] sm:$0xff]
    %v989 = vld [vmem:[#allocation9 + $0xe8] sm:$0xff]
    %v990 = vld [vmem:[#allocation9 + $0xf0] sm:$0xff]
    %v991 = vld [vmem:[#allocation9 + $0xf8] sm:$0xff]
    %v992 = vld [vmem:[#allocation9 + $0x100] sm:$0xff]
    %v993 = vld [vmem:[#allocation9 + $0x108] sm:$0xff]
    %v994 = vld [vmem:[#allocation9 + $0x110] sm:$0xff]
    %v995 = vld [vmem:[#allocation9 + $0x118] sm:$0xff]
    %v996 = vld [vmem:[#allocation9 + $0x120] sm:$0xff]
    %v997 = vld [vmem:[#allocation9 + $0x128] sm:$0xff]
    %v998 = vld [vmem:[#allocation9 + $0x130] sm:$0xff]
    %v999 = vld [vmem:[#allocation9 + $0x138] sm:$0xff]
    %v1000 = vld [vmem:[#allocation9 + $0x140] sm:$0xff]
    %v1001 = vld [vmem:[#allocation9 + $0x148] sm:$0xff]
    %v1002 = vld [vmem:[#allocation9 + $0x150] sm:$0xff]
    %v1003 = vld [vmem:[#allocation9 + $0x158] sm:$0xff]
    %v1004 = vld [vmem:[#allocation9 + $0x160] sm:$0xff]
    %v1005 = vld [vmem:[#allocation9 + $0x168] sm:$0xff]
    %v1006 = vld [vmem:[#allocation9 + $0x170] sm:$0xff]
    %v1007 = vld [vmem:[#allocation9 + $0x178] sm:$0xff]
    %v1008 = vld [vmem:[#allocation9 + $0x180] sm:$0xff]
    %v1009 = vld [vmem:[#allocation9 + $0x188] sm:$0xff]
    %v1010 = vld [vmem:[#allocation9 + $0x190] sm:$0xff]
    %v1011 = vld [vmem:[#allocation9 + $0x198] sm:$0xff]
    %v1012 = vld [vmem:[#allocation9 + $0x1a0] sm:$0xff]
    %v1013 = vld [vmem:[#allocation9 + $0x1a8] sm:$0xff]
    %v1014 = vld [vmem:[#allocation9 + $0x1b0] sm:$0xff]
    %v1015 = vld [vmem:[#allocation9 + $0x1b8] sm:$0xff]
    %v1016 = vld [vmem:[#allocation9 + $0x1c0] sm:$0xff]
    %v1017 = vld [vmem:[#allocation9 + $0x1c8] sm:$0xff]
    %v1018 = vld [vmem:[#allocation9 + $0x1d0] sm:$0xff]
    %v1019 = vld [vmem:[#allocation9 + $0x1d8] sm:$0xff]
    %v1020 = vld [vmem:[#allocation9 + $0x1e0] sm:$0xff]
    %v1021 = vld [vmem:[#allocation9 + $0x1e8] sm:$0xff]
    %v1022 = vld [vmem:[#allocation9 + $0x1f0] sm:$0xff]
    %v1023 = vld [vmem:[#allocation9 + $0x1f8] sm:$0xff]
    %v1024 = vpack.c.bf16 %v359, %v353
    %v1025 = vpack.c.bf16 %v361, %v355
    %v1026 = vpack.c.bf16 %v371, %v365
    %v1027 = vpack.c.bf16 %v373, %v367
    %v1028 = vpack.c.bf16 %v383, %v377
    %v1029 = vpack.c.bf16 %v385, %v379
    %v1030 = vpack.c.bf16 %v395, %v389
    %v1031 = vpack.c.bf16 %v397, %v391
    %v1032 = vpack.c.bf16 %v407, %v401
    %v1033 = vpack.c.bf16 %v409, %v403
    %v1034 = vpack.c.bf16 %v419, %v413
    %v1035 = vpack.c.bf16 %v421, %v415
    %v1036 = vpack.c.bf16 %v431, %v425
    %v1037 = vpack.c.bf16 %v433, %v427
    %v1038 = vpack.c.bf16 %v443, %v437
    %v1039 = vpack.c.bf16 %v445, %v439
    %v1040 = vpack.c.bf16 %v455, %v449
    %v1041 = vpack.c.bf16 %v457, %v451
    %v1042 = vpack.c.bf16 %v467, %v461
    %v1043 = vpack.c.bf16 %v469, %v463
    %v1044 = vpack.c.bf16 %v479, %v473
    %v1045 = vpack.c.bf16 %v481, %v475
    %v1046 = vpack.c.bf16 %v491, %v485
    %v1047 = vpack.c.bf16 %v493, %v487
    %v1048 = vpack.c.bf16 %v503, %v497
    %v1049 = vpack.c.bf16 %v505, %v499
    %v1050 = vpack.c.bf16 %v515, %v509
    %v1051 = vpack.c.bf16 %v517, %v511
    %v1052 = vpack.c.bf16 %v527, %v521
    %v1053 = vpack.c.bf16 %v529, %v523
    %v1054 = vpack.c.bf16 %v539, %v533
    %v1055 = vpack.c.bf16 %v541, %v535
    %v1056 = vld [vmem:[#allocation9 + $0x200] sm:$0xff]
    %v1057 = vld [vmem:[#allocation9 + $0x208] sm:$0xff]
    %v1058 = vld [vmem:[#allocation9 + $0x210] sm:$0xff]
    %v1059 = vld [vmem:[#allocation9 + $0x218] sm:$0xff]
    %v1060 = vld [vmem:[#allocation9 + $0x220] sm:$0xff]
    %v1061 = vld [vmem:[#allocation9 + $0x228] sm:$0xff]
    %v1062 = vld [vmem:[#allocation9 + $0x230] sm:$0xff]
    %v1063 = vld [vmem:[#allocation9 + $0x238] sm:$0xff]
    %v1064 = vld [vmem:[#allocation9 + $0x240] sm:$0xff]
    %v1065 = vld [vmem:[#allocation9 + $0x248] sm:$0xff]
    %v1066 = vld [vmem:[#allocation9 + $0x250] sm:$0xff]
    %v1067 = vld [vmem:[#allocation9 + $0x258] sm:$0xff]
    %v1068 = vld [vmem:[#allocation9 + $0x260] sm:$0xff]
    %v1069 = vld [vmem:[#allocation9 + $0x268] sm:$0xff]
    %v1070 = vld [vmem:[#allocation9 + $0x270] sm:$0xff]
    %v1071 = vld [vmem:[#allocation9 + $0x278] sm:$0xff]
    %v1072 = vld [vmem:[#allocation9 + $0x280] sm:$0xff]
    %v1073 = vld [vmem:[#allocation9 + $0x288] sm:$0xff]
    %v1074 = vld [vmem:[#allocation9 + $0x290] sm:$0xff]
    %v1075 = vld [vmem:[#allocation9 + $0x298] sm:$0xff]
    %v1076 = vld [vmem:[#allocation9 + $0x2a0] sm:$0xff]
    %v1077 = vld [vmem:[#allocation9 + $0x2a8] sm:$0xff]
    %v1078 = vld [vmem:[#allocation9 + $0x2b0] sm:$0xff]
    %v1079 = vld [vmem:[#allocation9 + $0x2b8] sm:$0xff]
    %v1080 = vld [vmem:[#allocation9 + $0x2c0] sm:$0xff]
    %v1081 = vld [vmem:[#allocation9 + $0x2c8] sm:$0xff]
    %v1082 = vld [vmem:[#allocation9 + $0x2d0] sm:$0xff]
    %v1083 = vld [vmem:[#allocation9 + $0x2d8] sm:$0xff]
    %v1084 = vld [vmem:[#allocation9 + $0x2e0] sm:$0xff]
    %v1085 = vld [vmem:[#allocation9 + $0x2e8] sm:$0xff]
    %v1086 = vld [vmem:[#allocation9 + $0x2f0] sm:$0xff]
    %v1087 = vld [vmem:[#allocation9 + $0x2f8] sm:$0xff]
    %v1088 = vld [vmem:[#allocation9 + $0x300] sm:$0xff]
    %v1089 = vld [vmem:[#allocation9 + $0x308] sm:$0xff]
    %v1090 = vld [vmem:[#allocation9 + $0x310] sm:$0xff]
    %v1091 = vld [vmem:[#allocation9 + $0x318] sm:$0xff]
    %v1092 = vld [vmem:[#allocation9 + $0x320] sm:$0xff]
    %v1093 = vld [vmem:[#allocation9 + $0x328] sm:$0xff]
    %v1094 = vld [vmem:[#allocation9 + $0x330] sm:$0xff]
    %v1095 = vld [vmem:[#allocation9 + $0x338] sm:$0xff]
    %v1096 = vld [vmem:[#allocation9 + $0x340] sm:$0xff]
    %v1097 = vld [vmem:[#allocation9 + $0x348] sm:$0xff]
    %v1098 = vld [vmem:[#allocation9 + $0x350] sm:$0xff]
    %v1099 = vld [vmem:[#allocation9 + $0x358] sm:$0xff]
    %v1100 = vld [vmem:[#allocation9 + $0x360] sm:$0xff]
    %v1101 = vld [vmem:[#allocation9 + $0x368] sm:$0xff]
    %v1102 = vld [vmem:[#allocation9 + $0x370] sm:$0xff]
    %v1103 = vld [vmem:[#allocation9 + $0x378] sm:$0xff]
    %v1104 = vld [vmem:[#allocation9 + $0x380] sm:$0xff]
    %v1105 = vld [vmem:[#allocation9 + $0x388] sm:$0xff]
    %v1106 = vld [vmem:[#allocation9 + $0x390] sm:$0xff]
    %v1107 = vld [vmem:[#allocation9 + $0x398] sm:$0xff]
    %v1108 = vld [vmem:[#allocation9 + $0x3a0] sm:$0xff]
    %v1109 = vld [vmem:[#allocation9 + $0x3a8] sm:$0xff]
    %v1110 = vld [vmem:[#allocation9 + $0x3b0] sm:$0xff]
    %v1111 = vld [vmem:[#allocation9 + $0x3b8] sm:$0xff]
    %v1112 = vld [vmem:[#allocation9 + $0x3c0] sm:$0xff]
    %v1113 = vld [vmem:[#allocation9 + $0x3c8] sm:$0xff]
    %v1114 = vld [vmem:[#allocation9 + $0x3d0] sm:$0xff]
    %v1115 = vld [vmem:[#allocation9 + $0x3d8] sm:$0xff]
    %v1116 = vld [vmem:[#allocation9 + $0x3e0] sm:$0xff]
    %v1117 = vld [vmem:[#allocation9 + $0x3e8] sm:$0xff]
    %v1118 = vld [vmem:[#allocation9 + $0x3f0] sm:$0xff]
    %v1119 = vld [vmem:[#allocation9 + $0x3f8] sm:$0xff]
    %v1184 = vunpack.c.l.b16 %v1056
    %v1185 = vunpack.c.h.b16 %v1056
    %v1186 = vunpack.c.l.b16 %v1057
    %v1187 = vunpack.c.h.b16 %v1057
    %v1188 = vunpack.c.l.b16 %v1058
    %v1189 = vunpack.c.h.b16 %v1058
    %v1190 = vunpack.c.l.b16 %v1059
    %v1191 = vunpack.c.h.b16 %v1059
    %v1192 = vunpack.c.l.b16 %v1060
    %v1193 = vunpack.c.h.b16 %v1060
    %v1194 = vunpack.c.l.b16 %v1061
    %v1195 = vunpack.c.h.b16 %v1061
    %v1196 = vunpack.c.l.b16 %v1062
    %v1197 = vunpack.c.h.b16 %v1062
    %v1198 = vunpack.c.l.b16 %v1063
    %v1199 = vunpack.c.h.b16 %v1063
    %v1200 = vunpack.c.l.b16 %v1064
    %v1201 = vunpack.c.h.b16 %v1064
    %v1202 = vunpack.c.l.b16 %v1065
    %v1203 = vunpack.c.h.b16 %v1065
    %v1204 = vunpack.c.l.b16 %v1066
    %v1205 = vunpack.c.h.b16 %v1066
    %v1206 = vunpack.c.l.b16 %v1067
    %v1207 = vunpack.c.h.b16 %v1067
    %v1208 = vunpack.c.l.b16 %v1068
    %v1209 = vunpack.c.h.b16 %v1068
    %v1210 = vunpack.c.l.b16 %v1069
    %v1211 = vunpack.c.h.b16 %v1069
    %v1212 = vunpack.c.l.b16 %v1070
    %v1213 = vunpack.c.h.b16 %v1070
    %v1214 = vunpack.c.l.b16 %v1071
    %v1215 = vunpack.c.h.b16 %v1071
    %v1216 = vunpack.c.l.b16 %v1072
    %v1217 = vunpack.c.h.b16 %v1072
    %v1218 = vunpack.c.l.b16 %v1073
    %v1219 = vunpack.c.h.b16 %v1073
    %v1220 = vunpack.c.l.b16 %v1074
    %v1221 = vunpack.c.h.b16 %v1074
    %v1222 = vunpack.c.l.b16 %v1075
    %v1223 = vunpack.c.h.b16 %v1075
    %v1224 = vunpack.c.l.b16 %v1076
    %v1225 = vunpack.c.h.b16 %v1076
    %v1226 = vunpack.c.l.b16 %v1077
    %v1227 = vunpack.c.h.b16 %v1077
    %v1228 = vunpack.c.l.b16 %v1078
    %v1229 = vunpack.c.h.b16 %v1078
    %v1230 = vunpack.c.l.b16 %v1079
    %v1231 = vunpack.c.h.b16 %v1079
    %v1232 = vunpack.c.l.b16 %v1080
    %v1233 = vunpack.c.h.b16 %v1080
    %v1234 = vunpack.c.l.b16 %v1081
    %v1235 = vunpack.c.h.b16 %v1081
    %v1236 = vunpack.c.l.b16 %v1082
    %v1237 = vunpack.c.h.b16 %v1082
    %v1238 = vunpack.c.l.b16 %v1083
    %v1239 = vunpack.c.h.b16 %v1083
    %v1240 = vunpack.c.l.b16 %v1084
    %v1241 = vunpack.c.h.b16 %v1084
    %v1242 = vunpack.c.l.b16 %v1085
    %v1243 = vunpack.c.h.b16 %v1085
    %v1244 = vunpack.c.l.b16 %v1086
    %v1245 = vunpack.c.h.b16 %v1086
    %v1246 = vunpack.c.l.b16 %v1087
    %v1247 = vunpack.c.h.b16 %v1087
    %v1248 = vunpack.c.l.b16 %v1088
    %v1249 = vunpack.c.h.b16 %v1088
    %v1250 = vunpack.c.l.b16 %v1089
    %v1251 = vunpack.c.h.b16 %v1089
    %v1252 = vunpack.c.l.b16 %v1090
    %v1253 = vunpack.c.h.b16 %v1090
    %v1254 = vunpack.c.l.b16 %v1091
    %v1255 = vunpack.c.h.b16 %v1091
    %v1256 = vunpack.c.l.b16 %v1092
    %v1257 = vunpack.c.h.b16 %v1092
    %v1258 = vunpack.c.l.b16 %v1093
    %v1259 = vunpack.c.h.b16 %v1093
    %v1260 = vunpack.c.l.b16 %v1094
    %v1261 = vunpack.c.h.b16 %v1094
    %v1262 = vunpack.c.l.b16 %v1095
    %v1263 = vunpack.c.h.b16 %v1095
    %v1264 = vunpack.c.l.b16 %v1096
    %v1265 = vunpack.c.h.b16 %v1096
    %v1266 = vunpack.c.l.b16 %v1097
    %v1267 = vunpack.c.h.b16 %v1097
    %v1268 = vunpack.c.l.b16 %v1098
    %v1269 = vunpack.c.h.b16 %v1098
    %v1270 = vunpack.c.l.b16 %v1099
    %v1271 = vunpack.c.h.b16 %v1099
    %v1272 = vunpack.c.l.b16 %v1100
    %v1273 = vunpack.c.h.b16 %v1100
    %v1274 = vunpack.c.l.b16 %v1101
    %v1275 = vunpack.c.h.b16 %v1101
    %v1276 = vunpack.c.l.b16 %v1102
    %v1277 = vunpack.c.h.b16 %v1102
    %v1278 = vunpack.c.l.b16 %v1103
    %v1279 = vunpack.c.h.b16 %v1103
    %v1280 = vunpack.c.l.b16 %v1104
    %v1281 = vunpack.c.h.b16 %v1104
    %v1282 = vunpack.c.l.b16 %v1105
    %v1283 = vunpack.c.h.b16 %v1105
    %v1284 = vunpack.c.l.b16 %v1106
    %v1285 = vunpack.c.h.b16 %v1106
    %v1286 = vunpack.c.l.b16 %v1107
    %v1287 = vunpack.c.h.b16 %v1107
    %v1288 = vunpack.c.l.b16 %v1108
    %v1289 = vunpack.c.h.b16 %v1108
    %v1290 = vunpack.c.l.b16 %v1109
    %v1291 = vunpack.c.h.b16 %v1109
    %v1292 = vunpack.c.l.b16 %v1110
    %v1293 = vunpack.c.h.b16 %v1110
    %v1294 = vunpack.c.l.b16 %v1111
    %v1295 = vunpack.c.h.b16 %v1111
    %v1296 = vunpack.c.l.b16 %v1112
    %v1297 = vunpack.c.h.b16 %v1112
    %v1298 = vunpack.c.l.b16 %v1113
    %v1299 = vunpack.c.h.b16 %v1113
    %v1300 = vunpack.c.l.b16 %v1114
    %v1301 = vunpack.c.h.b16 %v1114
    %v1302 = vunpack.c.l.b16 %v1115
    %v1303 = vunpack.c.h.b16 %v1115
    %v1304 = vunpack.c.l.b16 %v1116
    %v1305 = vunpack.c.h.b16 %v1116
    %v1306 = vunpack.c.l.b16 %v1117
    %v1307 = vunpack.c.h.b16 %v1117
    %v1308 = vunpack.c.l.b16 %v1118
    %v1309 = vunpack.c.h.b16 %v1118
    %v1310 = vunpack.c.l.b16 %v1119
    %v1311 = vunpack.c.h.b16 %v1119
    %v1312 = vpack.c.b16 %v1188, %v1184
    %v1313 = vpack.c.b16 %v1189, %v1185
    %v1314 = vpack.c.b16 %v1190, %v1186
    %v1315 = vpack.c.b16 %v1191, %v1187
    %v1316 = vpack.c.b16 %v1196, %v1192
    %v1317 = vpack.c.b16 %v1197, %v1193
    %v1318 = vpack.c.b16 %v1198, %v1194
    %v1319 = vpack.c.b16 %v1199, %v1195
    %v1320 = vpack.c.b16 %v1204, %v1200
    %v1321 = vpack.c.b16 %v1205, %v1201
    %v1322 = vpack.c.b16 %v1206, %v1202
    %v1323 = vpack.c.b16 %v1207, %v1203
    %v1324 = vpack.c.b16 %v1212, %v1208
    %v1325 = vpack.c.b16 %v1213, %v1209
    %v1326 = vpack.c.b16 %v1214, %v1210
    %v1327 = vpack.c.b16 %v1215, %v1211
    %v1328 = vpack.c.b16 %v1220, %v1216
    %v1329 = vpack.c.b16 %v1221, %v1217
    %v1330 = vpack.c.b16 %v1222, %v1218
    %v1331 = vpack.c.b16 %v1223, %v1219
    %v1332 = vpack.c.b16 %v1228, %v1224
    %v1333 = vpack.c.b16 %v1229, %v1225
    %v1334 = vpack.c.b16 %v1230, %v1226
    %v1335 = vpack.c.b16 %v1231, %v1227
    %v1336 = vpack.c.b16 %v1236, %v1232
    %v1337 = vpack.c.b16 %v1237, %v1233
    %v1338 = vpack.c.b16 %v1238, %v1234
    %v1339 = vpack.c.b16 %v1239, %v1235
    %v1340 = vpack.c.b16 %v1244, %v1240
    %v1341 = vpack.c.b16 %v1245, %v1241
    %v1342 = vpack.c.b16 %v1246, %v1242
    %v1343 = vpack.c.b16 %v1247, %v1243
    %v1344 = vpack.c.b16 %v1252, %v1248
    %v1345 = vpack.c.b16 %v1253, %v1249
    %v1346 = vpack.c.b16 %v1254, %v1250
    %v1347 = vpack.c.b16 %v1255, %v1251
    %v1348 = vpack.c.b16 %v1260, %v1256
    %v1349 = vpack.c.b16 %v1261, %v1257
    %v1350 = vpack.c.b16 %v1262, %v1258
    %v1351 = vpack.c.b16 %v1263, %v1259
    %v1352 = vpack.c.b16 %v1268, %v1264
    %v1353 = vpack.c.b16 %v1269, %v1265
    %v1354 = vpack.c.b16 %v1270, %v1266
    %v1355 = vpack.c.b16 %v1271, %v1267
    %v1356 = vpack.c.b16 %v1276, %v1272
    %v1357 = vpack.c.b16 %v1277, %v1273
    %v1358 = vpack.c.b16 %v1278, %v1274
    %v1359 = vpack.c.b16 %v1279, %v1275
    %v1360 = vpack.c.b16 %v1284, %v1280
    %v1361 = vpack.c.b16 %v1285, %v1281
    %v1362 = vpack.c.b16 %v1286, %v1282
    %v1363 = vpack.c.b16 %v1287, %v1283
    %v1364 = vpack.c.b16 %v1292, %v1288
    %v1365 = vpack.c.b16 %v1293, %v1289
    %v1366 = vpack.c.b16 %v1294, %v1290
    %v1367 = vpack.c.b16 %v1295, %v1291
    %v1368 = vpack.c.b16 %v1300, %v1296
    %v1369 = vpack.c.b16 %v1301, %v1297
    %v1370 = vpack.c.b16 %v1302, %v1298
    %v1371 = vpack.c.b16 %v1303, %v1299
    %v1372 = vpack.c.b16 %v1308, %v1304
    %v1373 = vpack.c.b16 %v1309, %v1305
    %v1374 = vpack.c.b16 %v1310, %v1306
    %v1375 = vpack.c.b16 %v1311, %v1307
    %1440 = vmatprep.subr.bf16.mxu0 %v1341
    %1441 = vmatpush1.bf16.msra.mxu0 %v1340
    %1442 = vmatprep.subr.bf16.mxu0 %v1337
    %1443 = vmatpush1.bf16.msra.mxu0 %v1336
    %1444 = vmatprep.subr.bf16.mxu0 %v1333
    %1445 = vmatpush1.bf16.msra.mxu0 %v1332
    %1446 = vmatprep.subr.bf16.mxu0 %v1329
    %1447 = vmatpush1.bf16.msra.mxu0 %v1328
    %1448 = vmatprep.subr.bf16.mxu0 %v1325
    %1449 = vmatpush1.bf16.msra.mxu0 %v1324
    %1450 = vmatprep.subr.bf16.mxu0 %v1321
    %1451 = vmatpush1.bf16.msra.mxu0 %v1320
    %1452 = vmatprep.subr.bf16.mxu0 %v1317
    %1453 = vmatpush1.bf16.msra.mxu0 %v1316
    %1454 = vmatprep.subr.bf16.mxu0 %v1313
    %1455 = vmatpush1.bf16.msra.mxu0 %v1312
    %1456 = vmatprep.subr.bf16.mxu0 %v1373
    %1457 = vmatpush2.bf16.msra.mxu0 %v1372
    %1458 = vmatprep.subr.bf16.mxu0 %v1369
    %1459 = vmatpush2.bf16.msra.mxu0 %v1368
    %1460 = vmatprep.subr.bf16.mxu0 %v1365
    %1461 = vmatpush2.bf16.msra.mxu0 %v1364
    %1462 = vmatprep.subr.bf16.mxu0 %v1361
    %1463 = vmatpush2.bf16.msra.mxu0 %v1360
    %1464 = vmatprep.subr.bf16.mxu0 %v1357
    %1465 = vmatpush2.bf16.msra.mxu0 %v1356
    %1466 = vmatprep.subr.bf16.mxu0 %v1353
    %1467 = vmatpush2.bf16.msra.mxu0 %v1352
    %1468 = vmatprep.subr.bf16.mxu0 %v1349
    %1469 = vmatpush2.bf16.msra.mxu0 %v1348
    %1470 = vmatprep.subr.bf16.mxu0 %v1345
    %1471 = vmatpush2.bf16.msra.mxu0 %v1344
    %1472 = vmatprep.mubr.bf16.mxu0 %v1025
    %1473 = vmatmul.mubr.bf16.gmra.mxu0 %v1024
    %v1474 = vpop.f32.mrf.mxu0
    %v1475 = vadd.f32 0.0, %v1474
    %v1476 = vpop.f32.mrf.mxu0
    %v1477 = vadd.f32 0.0, %v1476
    %v1478 = vpop.f32.mrf.mxu0
    %v1479 = vadd.f32 0.0, %v1478
    %v1480 = vpop.f32.mrf.mxu0
    %v1481 = vadd.f32 0.0, %v1480
    %1482 = vmatprep.mubr.bf16.mxu0 %v1027
    %1483 = vmatmul.mubr.bf16.gmra.mxu0 %v1026
    %v1484 = vpop.f32.mrf.mxu0
    %v1485 = vadd.f32 0.0, %v1484
    %v1486 = vpop.f32.mrf.mxu0
    %v1487 = vadd.f32 0.0, %v1486
    %v1488 = vpop.f32.mrf.mxu0
    %v1489 = vadd.f32 0.0, %v1488
    %v1490 = vpop.f32.mrf.mxu0
    %v1491 = vadd.f32 0.0, %v1490
    %1492 = vmatprep.mubr.bf16.mxu0 %v1029
    %1493 = vmatmul.mubr.bf16.gmra.mxu0 %v1028
    %v1494 = vpop.f32.mrf.mxu0
    %v1495 = vadd.f32 0.0, %v1494
    %v1496 = vpop.f32.mrf.mxu0
    %v1497 = vadd.f32 0.0, %v1496
    %v1498 = vpop.f32.mrf.mxu0
    %v1499 = vadd.f32 0.0, %v1498
    %v1500 = vpop.f32.mrf.mxu0
    %v1501 = vadd.f32 0.0, %v1500
    %1502 = vmatprep.mubr.bf16.mxu0 %v1031
    %1503 = vmatmul.mubr.bf16.gmra.mxu0 %v1030
    %v1504 = vpop.f32.mrf.mxu0
    %v1505 = vadd.f32 0.0, %v1504
    %v1506 = vpop.f32.mrf.mxu0
    %v1507 = vadd.f32 0.0, %v1506
    %v1508 = vpop.f32.mrf.mxu0
    %v1509 = vadd.f32 0.0, %v1508
    %v1510 = vpop.f32.mrf.mxu0
    %v1511 = vadd.f32 0.0, %v1510
    %1512 = vmatprep.mubr.bf16.mxu0 %v1033
    %1513 = vmatmul.mubr.bf16.gmra.mxu0 %v1032
    %v1514 = vpop.f32.mrf.mxu0
    %v1515 = vadd.f32 0.0, %v1514
    %v1516 = vpop.f32.mrf.mxu0
    %v1517 = vadd.f32 0.0, %v1516
    %v1518 = vpop.f32.mrf.mxu0
    %v1519 = vadd.f32 0.0, %v1518
    %v1520 = vpop.f32.mrf.mxu0
    %v1521 = vadd.f32 0.0, %v1520
    %1522 = vmatprep.mubr.bf16.mxu0 %v1035
    %1523 = vmatmul.mubr.bf16.gmra.mxu0 %v1034
    %v1524 = vpop.f32.mrf.mxu0
    %v1525 = vadd.f32 0.0, %v1524
    %v1526 = vpop.f32.mrf.mxu0
    %v1527 = vadd.f32 0.0, %v1526
    %v1528 = vpop.f32.mrf.mxu0
    %v1529 = vadd.f32 0.0, %v1528
    %v1530 = vpop.f32.mrf.mxu0
    %v1531 = vadd.f32 0.0, %v1530
    %1532 = vmatprep.mubr.bf16.mxu0 %v1037
    %1533 = vmatmul.mubr.bf16.gmra.mxu0 %v1036
    %v1534 = vpop.f32.mrf.mxu0
    %v1535 = vadd.f32 0.0, %v1534
    %v1536 = vpop.f32.mrf.mxu0
    %v1537 = vadd.f32 0.0, %v1536
    %v1538 = vpop.f32.mrf.mxu0
    %v1539 = vadd.f32 0.0, %v1538
    %v1540 = vpop.f32.mrf.mxu0
    %v1541 = vadd.f32 0.0, %v1540
    %1542 = vmatprep.mubr.bf16.mxu0 %v1039
    %1543 = vmatmul.mubr.bf16.gmra.mxu0 %v1038
    %v1544 = vpop.f32.mrf.mxu0
    %v1545 = vadd.f32 0.0, %v1544
    %v1546 = vpop.f32.mrf.mxu0
    %v1547 = vadd.f32 0.0, %v1546
    %v1548 = vpop.f32.mrf.mxu0
    %v1549 = vadd.f32 0.0, %v1548
    %v1550 = vpop.f32.mrf.mxu0
    %v1551 = vadd.f32 0.0, %v1550
    %1552 = vmatprep.mubr.bf16.mxu0 %v1041
    %1553 = vmatmul.mubr.bf16.gmra.mxu0 %v1040
    %v1554 = vpop.f32.mrf.mxu0
    %v1555 = vadd.f32 0.0, %v1554
    %v1556 = vpop.f32.mrf.mxu0
    %v1557 = vadd.f32 0.0, %v1556
    %v1558 = vpop.f32.mrf.mxu0
    %v1559 = vadd.f32 0.0, %v1558
    %v1560 = vpop.f32.mrf.mxu0
    %v1561 = vadd.f32 0.0, %v1560
    %1562 = vmatprep.mubr.bf16.mxu0 %v1043
    %1563 = vmatmul.mubr.bf16.gmra.mxu0 %v1042
    %v1564 = vpop.f32.mrf.mxu0
    %v1565 = vadd.f32 0.0, %v1564
    %v1566 = vpop.f32.mrf.mxu0
    %v1567 = vadd.f32 0.0, %v1566
    %v1568 = vpop.f32.mrf.mxu0
    %v1569 = vadd.f32 0.0, %v1568
    %v1570 = vpop.f32.mrf.mxu0
    %v1571 = vadd.f32 0.0, %v1570
    %1572 = vmatprep.mubr.bf16.mxu0 %v1045
    %1573 = vmatmul.mubr.bf16.gmra.mxu0 %v1044
    %v1574 = vpop.f32.mrf.mxu0
    %v1575 = vadd.f32 0.0, %v1574
    %v1576 = vpop.f32.mrf.mxu0
    %v1577 = vadd.f32 0.0, %v1576
    %v1578 = vpop.f32.mrf.mxu0
    %v1579 = vadd.f32 0.0, %v1578
    %v1580 = vpop.f32.mrf.mxu0
    %v1581 = vadd.f32 0.0, %v1580
    %1582 = vmatprep.mubr.bf16.mxu0 %v1047
    %1583 = vmatmul.mubr.bf16.gmra.mxu0 %v1046
    %v1584 = vpop.f32.mrf.mxu0
    %v1585 = vadd.f32 0.0, %v1584
    %v1586 = vpop.f32.mrf.mxu0
    %v1587 = vadd.f32 0.0, %v1586
    %v1588 = vpop.f32.mrf.mxu0
    %v1589 = vadd.f32 0.0, %v1588
    %v1590 = vpop.f32.mrf.mxu0
    %v1591 = vadd.f32 0.0, %v1590
    %1592 = vmatprep.mubr.bf16.mxu0 %v1049
    %1593 = vmatmul.mubr.bf16.gmra.mxu0 %v1048
    %v1594 = vpop.f32.mrf.mxu0
    %v1595 = vadd.f32 0.0, %v1594
    %v1596 = vpop.f32.mrf.mxu0
    %v1597 = vadd.f32 0.0, %v1596
    %v1598 = vpop.f32.mrf.mxu0
    %v1599 = vadd.f32 0.0, %v1598
    %v1600 = vpop.f32.mrf.mxu0
    %v1601 = vadd.f32 0.0, %v1600
    %1602 = vmatprep.mubr.bf16.mxu0 %v1051
    %1603 = vmatmul.mubr.bf16.gmra.mxu0 %v1050
    %v1604 = vpop.f32.mrf.mxu0
    %v1605 = vadd.f32 0.0, %v1604
    %v1606 = vpop.f32.mrf.mxu0
    %v1607 = vadd.f32 0.0, %v1606
    %v1608 = vpop.f32.mrf.mxu0
    %v1609 = vadd.f32 0.0, %v1608
    %v1610 = vpop.f32.mrf.mxu0
    %v1611 = vadd.f32 0.0, %v1610
    %1612 = vmatprep.mubr.bf16.mxu0 %v1053
    %1613 = vmatmul.mubr.bf16.gmra.mxu0 %v1052
    %v1614 = vpop.f32.mrf.mxu0
    %v1615 = vadd.f32 0.0, %v1614
    %v1616 = vpop.f32.mrf.mxu0
    %v1617 = vadd.f32 0.0, %v1616
    %v1618 = vpop.f32.mrf.mxu0
    %v1619 = vadd.f32 0.0, %v1618
    %v1620 = vpop.f32.mrf.mxu0
    %v1621 = vadd.f32 0.0, %v1620
    %1622 = vmatprep.mubr.bf16.mxu0 %v1055
    %1623 = vmatmul.mubr.bf16.gmra.mxu0 %v1054
    %v1624 = vpop.f32.mrf.mxu0
    %v1625 = vadd.f32 0.0, %v1624
    %v1626 = vpop.f32.mrf.mxu0
    %v1627 = vadd.f32 0.0, %v1626
    %v1628 = vpop.f32.mrf.mxu0
    %v1629 = vadd.f32 0.0, %v1628
    %v1630 = vpop.f32.mrf.mxu0
    %v1631 = vadd.f32 0.0, %v1630
    %1632 = vdwg.mxu0
    %1633 = vmatprep.subr.bf16.mxu0 %v1343
    %1634 = vmatpush1.bf16.msra.mxu0 %v1342
    %1635 = vmatprep.subr.bf16.mxu0 %v1339
    %1636 = vmatpush1.bf16.msra.mxu0 %v1338
    %1637 = vmatprep.subr.bf16.mxu0 %v1335
    %1638 = vmatpush1.bf16.msra.mxu0 %v1334
    %1639 = vmatprep.subr.bf16.mxu0 %v1331
    %1640 = vmatpush1.bf16.msra.mxu0 %v1330
    %1641 = vmatprep.subr.bf16.mxu0 %v1327
    %1642 = vmatpush1.bf16.msra.mxu0 %v1326
    %1643 = vmatprep.subr.bf16.mxu0 %v1323
    %1644 = vmatpush1.bf16.msra.mxu0 %v1322
    %1645 = vmatprep.subr.bf16.mxu0 %v1319
    %1646 = vmatpush1.bf16.msra.mxu0 %v1318
    %1647 = vmatprep.subr.bf16.mxu0 %v1315
    %1648 = vmatpush1.bf16.msra.mxu0 %v1314
    %1649 = vmatprep.subr.bf16.mxu0 %v1375
    %1650 = vmatpush2.bf16.msra.mxu0 %v1374
    %1651 = vmatprep.subr.bf16.mxu0 %v1371
    %1652 = vmatpush2.bf16.msra.mxu0 %v1370
    %1653 = vmatprep.subr.bf16.mxu0 %v1367
    %1654 = vmatpush2.bf16.msra.mxu0 %v1366
    %1655 = vmatprep.subr.bf16.mxu0 %v1363
    %1656 = vmatpush2.bf16.msra.mxu0 %v1362
    %1657 = vmatprep.subr.bf16.mxu0 %v1359
    %1658 = vmatpush2.bf16.msra.mxu0 %v1358
    %1659 = vmatprep.subr.bf16.mxu0 %v1355
    %1660 = vmatpush2.bf16.msra.mxu0 %v1354
    %1661 = vmatprep.subr.bf16.mxu0 %v1351
    %1662 = vmatpush2.bf16.msra.mxu0 %v1350
    %1663 = vmatprep.subr.bf16.mxu0 %v1347
    %1664 = vmatpush2.bf16.msra.mxu0 %v1346
    %1665 = vmatprep.mubr.bf16.mxu0 %v1025
    %1666 = vmatmul.mubr.bf16.gmra.mxu0 %v1024
    %v1667 = vpop.f32.mrf.mxu0
    %v1668 = vadd.f32 0.0, %v1667
    %v1669 = vpop.f32.mrf.mxu0
    %v1670 = vadd.f32 0.0, %v1669
    %v1671 = vpop.f32.mrf.mxu0
    %v1672 = vadd.f32 0.0, %v1671
    %v1673 = vpop.f32.mrf.mxu0
    %v1674 = vadd.f32 0.0, %v1673
    %1675 = vmatprep.mubr.bf16.mxu0 %v1027
    %1676 = vmatmul.mubr.bf16.gmra.mxu0 %v1026
    %v1677 = vpop.f32.mrf.mxu0
    %v1678 = vadd.f32 0.0, %v1677
    %v1679 = vpop.f32.mrf.mxu0
    %v1680 = vadd.f32 0.0, %v1679
    %v1681 = vpop.f32.mrf.mxu0
    %v1682 = vadd.f32 0.0, %v1681
    %v1683 = vpop.f32.mrf.mxu0
    %v1684 = vadd.f32 0.0, %v1683
    %1685 = vmatprep.mubr.bf16.mxu0 %v1029
    %1686 = vmatmul.mubr.bf16.gmra.mxu0 %v1028
    %v1687 = vpop.f32.mrf.mxu0
    %v1688 = vadd.f32 0.0, %v1687
    %v1689 = vpop.f32.mrf.mxu0
    %v1690 = vadd.f32 0.0, %v1689
    %v1691 = vpop.f32.mrf.mxu0
    %v1692 = vadd.f32 0.0, %v1691
    %v1693 = vpop.f32.mrf.mxu0
    %v1694 = vadd.f32 0.0, %v1693
    %1695 = vmatprep.mubr.bf16.mxu0 %v1031
    %1696 = vmatmul.mubr.bf16.gmra.mxu0 %v1030
    %v1697 = vpop.f32.mrf.mxu0
    %v1698 = vadd.f32 0.0, %v1697
    %v1699 = vpop.f32.mrf.mxu0
    %v1700 = vadd.f32 0.0, %v1699
    %v1701 = vpop.f32.mrf.mxu0
    %v1702 = vadd.f32 0.0, %v1701
    %v1703 = vpop.f32.mrf.mxu0
    %v1704 = vadd.f32 0.0, %v1703
    %1705 = vmatprep.mubr.bf16.mxu0 %v1033
    %1706 = vmatmul.mubr.bf16.gmra.mxu0 %v1032
    %v1707 = vpop.f32.mrf.mxu0
    %v1708 = vadd.f32 0.0, %v1707
    %v1709 = vpop.f32.mrf.mxu0
    %v1710 = vadd.f32 0.0, %v1709
    %v1711 = vpop.f32.mrf.mxu0
    %v1712 = vadd.f32 0.0, %v1711
    %v1713 = vpop.f32.mrf.mxu0
    %v1714 = vadd.f32 0.0, %v1713
    %1715 = vmatprep.mubr.bf16.mxu0 %v1035
    %1716 = vmatmul.mubr.bf16.gmra.mxu0 %v1034
    %v1717 = vpop.f32.mrf.mxu0
    %v1718 = vadd.f32 0.0, %v1717
    %v1719 = vpop.f32.mrf.mxu0
    %v1720 = vadd.f32 0.0, %v1719
    %v1721 = vpop.f32.mrf.mxu0
    %v1722 = vadd.f32 0.0, %v1721
    %v1723 = vpop.f32.mrf.mxu0
    %v1724 = vadd.f32 0.0, %v1723
    %1725 = vmatprep.mubr.bf16.mxu0 %v1037
    %1726 = vmatmul.mubr.bf16.gmra.mxu0 %v1036
    %v1727 = vpop.f32.mrf.mxu0
    %v1728 = vadd.f32 0.0, %v1727
    %v1729 = vpop.f32.mrf.mxu0
    %v1730 = vadd.f32 0.0, %v1729
    %v1731 = vpop.f32.mrf.mxu0
    %v1732 = vadd.f32 0.0, %v1731
    %v1733 = vpop.f32.mrf.mxu0
    %v1734 = vadd.f32 0.0, %v1733
    %1735 = vmatprep.mubr.bf16.mxu0 %v1039
    %1736 = vmatmul.mubr.bf16.gmra.mxu0 %v1038
    %v1737 = vpop.f32.mrf.mxu0
    %v1738 = vadd.f32 0.0, %v1737
    %v1739 = vpop.f32.mrf.mxu0
    %v1740 = vadd.f32 0.0, %v1739
    %v1741 = vpop.f32.mrf.mxu0
    %v1742 = vadd.f32 0.0, %v1741
    %v1743 = vpop.f32.mrf.mxu0
    %v1744 = vadd.f32 0.0, %v1743
    %1745 = vmatprep.mubr.bf16.mxu0 %v1041
    %1746 = vmatmul.mubr.bf16.gmra.mxu0 %v1040
    %v1747 = vpop.f32.mrf.mxu0
    %v1748 = vadd.f32 0.0, %v1747
    %v1749 = vpop.f32.mrf.mxu0
    %v1750 = vadd.f32 0.0, %v1749
    %v1751 = vpop.f32.mrf.mxu0
    %v1752 = vadd.f32 0.0, %v1751
    %v1753 = vpop.f32.mrf.mxu0
    %v1754 = vadd.f32 0.0, %v1753
    %1755 = vmatprep.mubr.bf16.mxu0 %v1043
    %1756 = vmatmul.mubr.bf16.gmra.mxu0 %v1042
    %v1757 = vpop.f32.mrf.mxu0
    %v1758 = vadd.f32 0.0, %v1757
    %v1759 = vpop.f32.mrf.mxu0
    %v1760 = vadd.f32 0.0, %v1759
    %v1761 = vpop.f32.mrf.mxu0
    %v1762 = vadd.f32 0.0, %v1761
    %v1763 = vpop.f32.mrf.mxu0
    %v1764 = vadd.f32 0.0, %v1763
    %1765 = vmatprep.mubr.bf16.mxu0 %v1045
    %1766 = vmatmul.mubr.bf16.gmra.mxu0 %v1044
    %v1767 = vpop.f32.mrf.mxu0
    %v1768 = vadd.f32 0.0, %v1767
    %v1769 = vpop.f32.mrf.mxu0
    %v1770 = vadd.f32 0.0, %v1769
    %v1771 = vpop.f32.mrf.mxu0
    %v1772 = vadd.f32 0.0, %v1771
    %v1773 = vpop.f32.mrf.mxu0
    %v1774 = vadd.f32 0.0, %v1773
    %1775 = vmatprep.mubr.bf16.mxu0 %v1047
    %1776 = vmatmul.mubr.bf16.gmra.mxu0 %v1046
    %v1777 = vpop.f32.mrf.mxu0
    %v1778 = vadd.f32 0.0, %v1777
    %v1779 = vpop.f32.mrf.mxu0
    %v1780 = vadd.f32 0.0, %v1779
    %v1781 = vpop.f32.mrf.mxu0
    %v1782 = vadd.f32 0.0, %v1781
    %v1783 = vpop.f32.mrf.mxu0
    %v1784 = vadd.f32 0.0, %v1783
    %1785 = vmatprep.mubr.bf16.mxu0 %v1049
    %1786 = vmatmul.mubr.bf16.gmra.mxu0 %v1048
    %v1787 = vpop.f32.mrf.mxu0
    %v1788 = vadd.f32 0.0, %v1787
    %v1789 = vpop.f32.mrf.mxu0
    %v1790 = vadd.f32 0.0, %v1789
    %v1791 = vpop.f32.mrf.mxu0
    %v1792 = vadd.f32 0.0, %v1791
    %v1793 = vpop.f32.mrf.mxu0
    %v1794 = vadd.f32 0.0, %v1793
    %1795 = vmatprep.mubr.bf16.mxu0 %v1051
    %1796 = vmatmul.mubr.bf16.gmra.mxu0 %v1050
    %v1797 = vpop.f32.mrf.mxu0
    %v1798 = vadd.f32 0.0, %v1797
    %v1799 = vpop.f32.mrf.mxu0
    %v1800 = vadd.f32 0.0, %v1799
    %v1801 = vpop.f32.mrf.mxu0
    %v1802 = vadd.f32 0.0, %v1801
    %v1803 = vpop.f32.mrf.mxu0
    %v1804 = vadd.f32 0.0, %v1803
    %1805 = vmatprep.mubr.bf16.mxu0 %v1053
    %1806 = vmatmul.mubr.bf16.gmra.mxu0 %v1052
    %v1807 = vpop.f32.mrf.mxu0
    %v1808 = vadd.f32 0.0, %v1807
    %v1809 = vpop.f32.mrf.mxu0
    %v1810 = vadd.f32 0.0, %v1809
    %v1811 = vpop.f32.mrf.mxu0
    %v1812 = vadd.f32 0.0, %v1811
    %v1813 = vpop.f32.mrf.mxu0
    %v1814 = vadd.f32 0.0, %v1813
    %1815 = vmatprep.mubr.bf16.mxu0 %v1055
    %1816 = vmatmul.mubr.bf16.gmra.mxu0 %v1054
    %v1817 = vpop.f32.mrf.mxu0
    %v1818 = vadd.f32 0.0, %v1817
    %v1819 = vpop.f32.mrf.mxu0
    %v1820 = vadd.f32 0.0, %v1819
    %v1821 = vpop.f32.mrf.mxu0
    %v1822 = vadd.f32 0.0, %v1821
    %v1823 = vpop.f32.mrf.mxu0
    %v1824 = vadd.f32 0.0, %v1823
    %1825 = vdwg.mxu0
    %v1890 = vunpack.c.l.b16 %v960
    %v1891 = vunpack.c.h.b16 %v960
    %v1892 = vunpack.c.l.b16 %v961
    %v1893 = vunpack.c.h.b16 %v961
    %v1894 = vunpack.c.l.b16 %v962
    %v1895 = vunpack.c.h.b16 %v962
    %v1896 = vunpack.c.l.b16 %v963
    %v1897 = vunpack.c.h.b16 %v963
    %v1898 = vunpack.c.l.b16 %v964
    %v1899 = vunpack.c.h.b16 %v964
    %v1900 = vunpack.c.l.b16 %v965
    %v1901 = vunpack.c.h.b16 %v965
    %v1902 = vunpack.c.l.b16 %v966
    %v1903 = vunpack.c.h.b16 %v966
    %v1904 = vunpack.c.l.b16 %v967
    %v1905 = vunpack.c.h.b16 %v967
    %v1906 = vunpack.c.l.b16 %v968
    %v1907 = vunpack.c.h.b16 %v968
    %v1908 = vunpack.c.l.b16 %v969
    %v1909 = vunpack.c.h.b16 %v969
    %v1910 = vunpack.c.l.b16 %v970
    %v1911 = vunpack.c.h.b16 %v970
    %v1912 = vunpack.c.l.b16 %v971
    %v1913 = vunpack.c.h.b16 %v971
    %v1914 = vunpack.c.l.b16 %v972
    %v1915 = vunpack.c.h.b16 %v972
    %v1916 = vunpack.c.l.b16 %v973
    %v1917 = vunpack.c.h.b16 %v973
    %v1918 = vunpack.c.l.b16 %v974
    %v1919 = vunpack.c.h.b16 %v974
    %v1920 = vunpack.c.l.b16 %v975
    %v1921 = vunpack.c.h.b16 %v975
    %v1922 = vunpack.c.l.b16 %v976
    %v1923 = vunpack.c.h.b16 %v976
    %v1924 = vunpack.c.l.b16 %v977
    %v1925 = vunpack.c.h.b16 %v977
    %v1926 = vunpack.c.l.b16 %v978
    %v1927 = vunpack.c.h.b16 %v978
    %v1928 = vunpack.c.l.b16 %v979
    %v1929 = vunpack.c.h.b16 %v979
    %v1930 = vunpack.c.l.b16 %v980
    %v1931 = vunpack.c.h.b16 %v980
    %v1932 = vunpack.c.l.b16 %v981
    %v1933 = vunpack.c.h.b16 %v981
    %v1934 = vunpack.c.l.b16 %v982
    %v1935 = vunpack.c.h.b16 %v982
    %v1936 = vunpack.c.l.b16 %v983
    %v1937 = vunpack.c.h.b16 %v983
    %v1938 = vunpack.c.l.b16 %v984
    %v1939 = vunpack.c.h.b16 %v984
    %v1940 = vunpack.c.l.b16 %v985
    %v1941 = vunpack.c.h.b16 %v985
    %v1942 = vunpack.c.l.b16 %v986
    %v1943 = vunpack.c.h.b16 %v986
    %v1944 = vunpack.c.l.b16 %v987
    %v1945 = vunpack.c.h.b16 %v987
    %v1946 = vunpack.c.l.b16 %v988
    %v1947 = vunpack.c.h.b16 %v988
    %v1948 = vunpack.c.l.b16 %v989
    %v1949 = vunpack.c.h.b16 %v989
    %v1950 = vunpack.c.l.b16 %v990
    %v1951 = vunpack.c.h.b16 %v990
    %v1952 = vunpack.c.l.b16 %v991
    %v1953 = vunpack.c.h.b16 %v991
    %v1954 = vunpack.c.l.b16 %v992
    %v1955 = vunpack.c.h.b16 %v992
    %v1956 = vunpack.c.l.b16 %v993
    %v1957 = vunpack.c.h.b16 %v993
    %v1958 = vunpack.c.l.b16 %v994
    %v1959 = vunpack.c.h.b16 %v994
    %v1960 = vunpack.c.l.b16 %v995
    %v1961 = vunpack.c.h.b16 %v995
    %v1962 = vunpack.c.l.b16 %v996
    %v1963 = vunpack.c.h.b16 %v996
    %v1964 = vunpack.c.l.b16 %v997
    %v1965 = vunpack.c.h.b16 %v997
    %v1966 = vunpack.c.l.b16 %v998
    %v1967 = vunpack.c.h.b16 %v998
    %v1968 = vunpack.c.l.b16 %v999
    %v1969 = vunpack.c.h.b16 %v999
    %v1970 = vunpack.c.l.b16 %v1000
    %v1971 = vunpack.c.h.b16 %v1000
    %v1972 = vunpack.c.l.b16 %v1001
    %v1973 = vunpack.c.h.b16 %v1001
    %v1974 = vunpack.c.l.b16 %v1002
    %v1975 = vunpack.c.h.b16 %v1002
    %v1976 = vunpack.c.l.b16 %v1003
    %v1977 = vunpack.c.h.b16 %v1003
    %v1978 = vunpack.c.l.b16 %v1004
    %v1979 = vunpack.c.h.b16 %v1004
    %v1980 = vunpack.c.l.b16 %v1005
    %v1981 = vunpack.c.h.b16 %v1005
    %v1982 = vunpack.c.l.b16 %v1006
    %v1983 = vunpack.c.h.b16 %v1006
    %v1984 = vunpack.c.l.b16 %v1007
    %v1985 = vunpack.c.h.b16 %v1007
    %v1986 = vunpack.c.l.b16 %v1008
    %v1987 = vunpack.c.h.b16 %v1008
    %v1988 = vunpack.c.l.b16 %v1009
    %v1989 = vunpack.c.h.b16 %v1009
    %v1990 = vunpack.c.l.b16 %v1010
    %v1991 = vunpack.c.h.b16 %v1010
    %v1992 = vunpack.c.l.b16 %v1011
    %v1993 = vunpack.c.h.b16 %v1011
    %v1994 = vunpack.c.l.b16 %v1012
    %v1995 = vunpack.c.h.b16 %v1012
    %v1996 = vunpack.c.l.b16 %v1013
    %v1997 = vunpack.c.h.b16 %v1013
    %v1998 = vunpack.c.l.b16 %v1014
    %v1999 = vunpack.c.h.b16 %v1014
    %v2000 = vunpack.c.l.b16 %v1015
    %v2001 = vunpack.c.h.b16 %v1015
    %v2002 = vunpack.c.l.b16 %v1016
    %v2003 = vunpack.c.h.b16 %v1016
    %v2004 = vunpack.c.l.b16 %v1017
    %v2005 = vunpack.c.h.b16 %v1017
    %v2006 = vunpack.c.l.b16 %v1018
    %v2007 = vunpack.c.h.b16 %v1018
    %v2008 = vunpack.c.l.b16 %v1019
    %v2009 = vunpack.c.h.b16 %v1019
    %v2010 = vunpack.c.l.b16 %v1020
    %v2011 = vunpack.c.h.b16 %v1020
    %v2012 = vunpack.c.l.b16 %v1021
    %v2013 = vunpack.c.h.b16 %v1021
    %v2014 = vunpack.c.l.b16 %v1022
    %v2015 = vunpack.c.h.b16 %v1022
    %v2016 = vunpack.c.l.b16 %v1023
    %v2017 = vunpack.c.h.b16 %v1023
    %v2018 = vpack.c.b16 %v1894, %v1890
    %v2019 = vpack.c.b16 %v1895, %v1891
    %v2020 = vpack.c.b16 %v1896, %v1892
    %v2021 = vpack.c.b16 %v1897, %v1893
    %v2022 = vpack.c.b16 %v1902, %v1898
    %v2023 = vpack.c.b16 %v1903, %v1899
    %v2024 = vpack.c.b16 %v1904, %v1900
    %v2025 = vpack.c.b16 %v1905, %v1901
    %v2026 = vpack.c.b16 %v1910, %v1906
    %v2027 = vpack.c.b16 %v1911, %v1907
    %v2028 = vpack.c.b16 %v1912, %v1908
    %v2029 = vpack.c.b16 %v1913, %v1909
    %v2030 = vpack.c.b16 %v1918, %v1914
    %v2031 = vpack.c.b16 %v1919, %v1915
    %v2032 = vpack.c.b16 %v1920, %v1916
    %v2033 = vpack.c.b16 %v1921, %v1917
    %v2034 = vpack.c.b16 %v1926, %v1922
    %v2035 = vpack.c.b16 %v1927, %v1923
    %v2036 = vpack.c.b16 %v1928, %v1924
    %v2037 = vpack.c.b16 %v1929, %v1925
    %v2038 = vpack.c.b16 %v1934, %v1930
    %v2039 = vpack.c.b16 %v1935, %v1931
    %v2040 = vpack.c.b16 %v1936, %v1932
    %v2041 = vpack.c.b16 %v1937, %v1933
    %v2042 = vpack.c.b16 %v1942, %v1938
    %v2043 = vpack.c.b16 %v1943, %v1939
    %v2044 = vpack.c.b16 %v1944, %v1940
    %v2045 = vpack.c.b16 %v1945, %v1941
    %v2046 = vpack.c.b16 %v1950, %v1946
    %v2047 = vpack.c.b16 %v1951, %v1947
    %v2048 = vpack.c.b16 %v1952, %v1948
    %v2049 = vpack.c.b16 %v1953, %v1949
    %v2050 = vpack.c.b16 %v1958, %v1954
    %v2051 = vpack.c.b16 %v1959, %v1955
    %v2052 = vpack.c.b16 %v1960, %v1956
    %v2053 = vpack.c.b16 %v1961, %v1957
    %v2054 = vpack.c.b16 %v1966, %v1962
    %v2055 = vpack.c.b16 %v1967, %v1963
    %v2056 = vpack.c.b16 %v1968, %v1964
    %v2057 = vpack.c.b16 %v1969, %v1965
    %v2058 = vpack.c.b16 %v1974, %v1970
    %v2059 = vpack.c.b16 %v1975, %v1971
    %v2060 = vpack.c.b16 %v1976, %v1972
    %v2061 = vpack.c.b16 %v1977, %v1973
    %v2062 = vpack.c.b16 %v1982, %v1978
    %v2063 = vpack.c.b16 %v1983, %v1979
    %v2064 = vpack.c.b16 %v1984, %v1980
    %v2065 = vpack.c.b16 %v1985, %v1981
    %v2066 = vpack.c.b16 %v1990, %v1986
    %v2067 = vpack.c.b16 %v1991, %v1987
    %v2068 = vpack.c.b16 %v1992, %v1988
    %v2069 = vpack.c.b16 %v1993, %v1989
    %v2070 = vpack.c.b16 %v1998, %v1994
    %v2071 = vpack.c.b16 %v1999, %v1995
    %v2072 = vpack.c.b16 %v2000, %v1996
    %v2073 = vpack.c.b16 %v2001, %v1997
    %v2074 = vpack.c.b16 %v2006, %v2002
    %v2075 = vpack.c.b16 %v2007, %v2003
    %v2076 = vpack.c.b16 %v2008, %v2004
    %v2077 = vpack.c.b16 %v2009, %v2005
    %v2078 = vpack.c.b16 %v2014, %v2010
    %v2079 = vpack.c.b16 %v2015, %v2011
    %v2080 = vpack.c.b16 %v2016, %v2012
    %v2081 = vpack.c.b16 %v2017, %v2013
    %2146 = vmatprep.subr.bf16.mxu0 %v2047
    %2147 = vmatpush1.bf16.msra.mxu0 %v2046
    %2148 = vmatprep.subr.bf16.mxu0 %v2043
    %2149 = vmatpush1.bf16.msra.mxu0 %v2042
    %2150 = vmatprep.subr.bf16.mxu0 %v2039
    %2151 = vmatpush1.bf16.msra.mxu0 %v2038
    %2152 = vmatprep.subr.bf16.mxu0 %v2035
    %2153 = vmatpush1.bf16.msra.mxu0 %v2034
    %2154 = vmatprep.subr.bf16.mxu0 %v2031
    %2155 = vmatpush1.bf16.msra.mxu0 %v2030
    %2156 = vmatprep.subr.bf16.mxu0 %v2027
    %2157 = vmatpush1.bf16.msra.mxu0 %v2026
    %2158 = vmatprep.subr.bf16.mxu0 %v2023
    %2159 = vmatpush1.bf16.msra.mxu0 %v2022
    %2160 = vmatprep.subr.bf16.mxu0 %v2019
    %2161 = vmatpush1.bf16.msra.mxu0 %v2018
    %2162 = vmatprep.subr.bf16.mxu0 %v2079
    %2163 = vmatpush2.bf16.msra.mxu0 %v2078
    %2164 = vmatprep.subr.bf16.mxu0 %v2075
    %2165 = vmatpush2.bf16.msra.mxu0 %v2074
    %2166 = vmatprep.subr.bf16.mxu0 %v2071
    %2167 = vmatpush2.bf16.msra.mxu0 %v2070
    %2168 = vmatprep.subr.bf16.mxu0 %v2067
    %2169 = vmatpush2.bf16.msra.mxu0 %v2066
    %2170 = vmatprep.subr.bf16.mxu0 %v2063
    %2171 = vmatpush2.bf16.msra.mxu0 %v2062
    %2172 = vmatprep.subr.bf16.mxu0 %v2059
    %2173 = vmatpush2.bf16.msra.mxu0 %v2058
    %2174 = vmatprep.subr.bf16.mxu0 %v2055
    %2175 = vmatpush2.bf16.msra.mxu0 %v2054
    %2176 = vmatprep.subr.bf16.mxu0 %v2051
    %2177 = vmatpush2.bf16.msra.mxu0 %v2050
    %2178 = vmatprep.mubr.bf16.mxu0 %v929
    %2179 = vmatmul.mubr.bf16.gmra.mxu0 %v928
    %v2180 = vpop.f32.mrf.mxu0
    %v2181 = vadd.f32 %v1475, %v2180
    %v2182 = vpop.f32.mrf.mxu0
    %v2183 = vadd.f32 %v1477, %v2182
    %v2184 = vpop.f32.mrf.mxu0
    %v2185 = vadd.f32 %v1479, %v2184
    %v2186 = vpop.f32.mrf.mxu0
    %v2187 = vadd.f32 %v1481, %v2186
    %2188 = vmatprep.mubr.bf16.mxu0 %v931
    %2189 = vmatmul.mubr.bf16.gmra.mxu0 %v930
    %v2190 = vpop.f32.mrf.mxu0
    %v2191 = vadd.f32 %v1485, %v2190
    %v2192 = vpop.f32.mrf.mxu0
    %v2193 = vadd.f32 %v1487, %v2192
    %v2194 = vpop.f32.mrf.mxu0
    %v2195 = vadd.f32 %v1489, %v2194
    %v2196 = vpop.f32.mrf.mxu0
    %v2197 = vadd.f32 %v1491, %v2196
    %2198 = vmatprep.mubr.bf16.mxu0 %v933
    %2199 = vmatmul.mubr.bf16.gmra.mxu0 %v932
    %v2200 = vpop.f32.mrf.mxu0
    %v2201 = vadd.f32 %v1495, %v2200
    %v2202 = vpop.f32.mrf.mxu0
    %v2203 = vadd.f32 %v1497, %v2202
    %v2204 = vpop.f32.mrf.mxu0
    %v2205 = vadd.f32 %v1499, %v2204
    %v2206 = vpop.f32.mrf.mxu0
    %v2207 = vadd.f32 %v1501, %v2206
    %2208 = vmatprep.mubr.bf16.mxu0 %v935
    %2209 = vmatmul.mubr.bf16.gmra.mxu0 %v934
    %v2210 = vpop.f32.mrf.mxu0
    %v2211 = vadd.f32 %v1505, %v2210
    %v2212 = vpop.f32.mrf.mxu0
    %v2213 = vadd.f32 %v1507, %v2212
    %v2214 = vpop.f32.mrf.mxu0
    %v2215 = vadd.f32 %v1509, %v2214
    %v2216 = vpop.f32.mrf.mxu0
    %v2217 = vadd.f32 %v1511, %v2216
    %2218 = vmatprep.mubr.bf16.mxu0 %v937
    %2219 = vmatmul.mubr.bf16.gmra.mxu0 %v936
    %v2220 = vpop.f32.mrf.mxu0
    %v2221 = vadd.f32 %v1515, %v2220
    %v2222 = vpop.f32.mrf.mxu0
    %v2223 = vadd.f32 %v1517, %v2222
    %v2224 = vpop.f32.mrf.mxu0
    %v2225 = vadd.f32 %v1519, %v2224
    %v2226 = vpop.f32.mrf.mxu0
    %v2227 = vadd.f32 %v1521, %v2226
    %2228 = vmatprep.mubr.bf16.mxu0 %v939
    %2229 = vmatmul.mubr.bf16.gmra.mxu0 %v938
    %v2230 = vpop.f32.mrf.mxu0
    %v2231 = vadd.f32 %v1525, %v2230
    %v2232 = vpop.f32.mrf.mxu0
    %v2233 = vadd.f32 %v1527, %v2232
    %v2234 = vpop.f32.mrf.mxu0
    %v2235 = vadd.f32 %v1529, %v2234
    %v2236 = vpop.f32.mrf.mxu0
    %v2237 = vadd.f32 %v1531, %v2236
    %2238 = vmatprep.mubr.bf16.mxu0 %v941
    %2239 = vmatmul.mubr.bf16.gmra.mxu0 %v940
    %v2240 = vpop.f32.mrf.mxu0
    %v2241 = vadd.f32 %v1535, %v2240
    %v2242 = vpop.f32.mrf.mxu0
    %v2243 = vadd.f32 %v1537, %v2242
    %v2244 = vpop.f32.mrf.mxu0
    %v2245 = vadd.f32 %v1539, %v2244
    %v2246 = vpop.f32.mrf.mxu0
    %v2247 = vadd.f32 %v1541, %v2246
    %2248 = vmatprep.mubr.bf16.mxu0 %v943
    %2249 = vmatmul.mubr.bf16.gmra.mxu0 %v942
    %v2250 = vpop.f32.mrf.mxu0
    %v2251 = vadd.f32 %v1545, %v2250
    %v2252 = vpop.f32.mrf.mxu0
    %v2253 = vadd.f32 %v1547, %v2252
    %v2254 = vpop.f32.mrf.mxu0
    %v2255 = vadd.f32 %v1549, %v2254
    %v2256 = vpop.f32.mrf.mxu0
    %v2257 = vadd.f32 %v1551, %v2256
    %2258 = vmatprep.mubr.bf16.mxu0 %v945
    %2259 = vmatmul.mubr.bf16.gmra.mxu0 %v944
    %v2260 = vpop.f32.mrf.mxu0
    %v2261 = vadd.f32 %v1555, %v2260
    %v2262 = vpop.f32.mrf.mxu0
    %v2263 = vadd.f32 %v1557, %v2262
    %v2264 = vpop.f32.mrf.mxu0
    %v2265 = vadd.f32 %v1559, %v2264
    %v2266 = vpop.f32.mrf.mxu0
    %v2267 = vadd.f32 %v1561, %v2266
    %2268 = vmatprep.mubr.bf16.mxu0 %v947
    %2269 = vmatmul.mubr.bf16.gmra.mxu0 %v946
    %v2270 = vpop.f32.mrf.mxu0
    %v2271 = vadd.f32 %v1565, %v2270
    %v2272 = vpop.f32.mrf.mxu0
    %v2273 = vadd.f32 %v1567, %v2272
    %v2274 = vpop.f32.mrf.mxu0
    %v2275 = vadd.f32 %v1569, %v2274
    %v2276 = vpop.f32.mrf.mxu0
    %v2277 = vadd.f32 %v1571, %v2276
    %2278 = vmatprep.mubr.bf16.mxu0 %v949
    %2279 = vmatmul.mubr.bf16.gmra.mxu0 %v948
    %v2280 = vpop.f32.mrf.mxu0
    %v2281 = vadd.f32 %v1575, %v2280
    %v2282 = vpop.f32.mrf.mxu0
    %v2283 = vadd.f32 %v1577, %v2282
    %v2284 = vpop.f32.mrf.mxu0
    %v2285 = vadd.f32 %v1579, %v2284
    %v2286 = vpop.f32.mrf.mxu0
    %v2287 = vadd.f32 %v1581, %v2286
    %2288 = vmatprep.mubr.bf16.mxu0 %v951
    %2289 = vmatmul.mubr.bf16.gmra.mxu0 %v950
    %v2290 = vpop.f32.mrf.mxu0
    %v2291 = vadd.f32 %v1585, %v2290
    %v2292 = vpop.f32.mrf.mxu0
    %v2293 = vadd.f32 %v1587, %v2292
    %v2294 = vpop.f32.mrf.mxu0
    %v2295 = vadd.f32 %v1589, %v2294
    %v2296 = vpop.f32.mrf.mxu0
    %v2297 = vadd.f32 %v1591, %v2296
    %2298 = vmatprep.mubr.bf16.mxu0 %v953
    %2299 = vmatmul.mubr.bf16.gmra.mxu0 %v952
    %v2300 = vpop.f32.mrf.mxu0
    %v2301 = vadd.f32 %v1595, %v2300
    %v2302 = vpop.f32.mrf.mxu0
    %v2303 = vadd.f32 %v1597, %v2302
    %v2304 = vpop.f32.mrf.mxu0
    %v2305 = vadd.f32 %v1599, %v2304
    %v2306 = vpop.f32.mrf.mxu0
    %v2307 = vadd.f32 %v1601, %v2306
    %2308 = vmatprep.mubr.bf16.mxu0 %v955
    %2309 = vmatmul.mubr.bf16.gmra.mxu0 %v954
    %v2310 = vpop.f32.mrf.mxu0
    %v2311 = vadd.f32 %v1605, %v2310
    %v2312 = vpop.f32.mrf.mxu0
    %v2313 = vadd.f32 %v1607, %v2312
    %v2314 = vpop.f32.mrf.mxu0
    %v2315 = vadd.f32 %v1609, %v2314
    %v2316 = vpop.f32.mrf.mxu0
    %v2317 = vadd.f32 %v1611, %v2316
    %2318 = vmatprep.mubr.bf16.mxu0 %v957
    %2319 = vmatmul.mubr.bf16.gmra.mxu0 %v956
    %v2320 = vpop.f32.mrf.mxu0
    %v2321 = vadd.f32 %v1615, %v2320
    %v2322 = vpop.f32.mrf.mxu0
    %v2323 = vadd.f32 %v1617, %v2322
    %v2324 = vpop.f32.mrf.mxu0
    %v2325 = vadd.f32 %v1619, %v2324
    %v2326 = vpop.f32.mrf.mxu0
    %v2327 = vadd.f32 %v1621, %v2326
    %2328 = vmatprep.mubr.bf16.mxu0 %v959
    %2329 = vmatmul.mubr.bf16.gmra.mxu0 %v958
    %v2330 = vpop.f32.mrf.mxu0
    %v2331 = vadd.f32 %v1625, %v2330
    %v2332 = vpop.f32.mrf.mxu0
    %v2333 = vadd.f32 %v1627, %v2332
    %v2334 = vpop.f32.mrf.mxu0
    %v2335 = vadd.f32 %v1629, %v2334
    %v2336 = vpop.f32.mrf.mxu0
    %v2337 = vadd.f32 %v1631, %v2336
    %2338 = vdwg.mxu0
    %2339 = vmatprep.subr.bf16.mxu0 %v2049
    %2340 = vmatpush1.bf16.msra.mxu0 %v2048
    %2341 = vmatprep.subr.bf16.mxu0 %v2045
    %2342 = vmatpush1.bf16.msra.mxu0 %v2044
    %2343 = vmatprep.subr.bf16.mxu0 %v2041
    %2344 = vmatpush1.bf16.msra.mxu0 %v2040
    %2345 = vmatprep.subr.bf16.mxu0 %v2037
    %2346 = vmatpush1.bf16.msra.mxu0 %v2036
    %2347 = vmatprep.subr.bf16.mxu0 %v2033
    %2348 = vmatpush1.bf16.msra.mxu0 %v2032
    %2349 = vmatprep.subr.bf16.mxu0 %v2029
    %2350 = vmatpush1.bf16.msra.mxu0 %v2028
    %2351 = vmatprep.subr.bf16.mxu0 %v2025
    %2352 = vmatpush1.bf16.msra.mxu0 %v2024
    %2353 = vmatprep.subr.bf16.mxu0 %v2021
    %2354 = vmatpush1.bf16.msra.mxu0 %v2020
    %2355 = vmatprep.subr.bf16.mxu0 %v2081
    %2356 = vmatpush2.bf16.msra.mxu0 %v2080
    %2357 = vmatprep.subr.bf16.mxu0 %v2077
    %2358 = vmatpush2.bf16.msra.mxu0 %v2076
    %2359 = vmatprep.subr.bf16.mxu0 %v2073
    %2360 = vmatpush2.bf16.msra.mxu0 %v2072
    %2361 = vmatprep.subr.bf16.mxu0 %v2069
    %2362 = vmatpush2.bf16.msra.mxu0 %v2068
    %2363 = vmatprep.subr.bf16.mxu0 %v2065
    %2364 = vmatpush2.bf16.msra.mxu0 %v2064
    %2365 = vmatprep.subr.bf16.mxu0 %v2061
    %2366 = vmatpush2.bf16.msra.mxu0 %v2060
    %2367 = vmatprep.subr.bf16.mxu0 %v2057
    %2368 = vmatpush2.bf16.msra.mxu0 %v2056
    %2369 = vmatprep.subr.bf16.mxu0 %v2053
    %2370 = vmatpush2.bf16.msra.mxu0 %v2052
    %2371 = vmatprep.mubr.bf16.mxu0 %v929
    %2372 = vmatmul.mubr.bf16.gmra.mxu0 %v928
    %v2373 = vpop.f32.mrf.mxu0
    %v2374 = vadd.f32 %v1668, %v2373
    %v2375 = vpop.f32.mrf.mxu0
    %v2376 = vadd.f32 %v1670, %v2375
    %v2377 = vpop.f32.mrf.mxu0
    %v2378 = vadd.f32 %v1672, %v2377
    %v2379 = vpop.f32.mrf.mxu0
    %v2380 = vadd.f32 %v1674, %v2379
    %2381 = vmatprep.mubr.bf16.mxu0 %v931
    %2382 = vmatmul.mubr.bf16.gmra.mxu0 %v930
    %v2383 = vpop.f32.mrf.mxu0
    %v2384 = vadd.f32 %v1678, %v2383
    %v2385 = vpop.f32.mrf.mxu0
    %v2386 = vadd.f32 %v1680, %v2385
    %v2387 = vpop.f32.mrf.mxu0
    %v2388 = vadd.f32 %v1682, %v2387
    %v2389 = vpop.f32.mrf.mxu0
    %v2390 = vadd.f32 %v1684, %v2389
    %2391 = vmatprep.mubr.bf16.mxu0 %v933
    %2392 = vmatmul.mubr.bf16.gmra.mxu0 %v932
    %v2393 = vpop.f32.mrf.mxu0
    %v2394 = vadd.f32 %v1688, %v2393
    %v2395 = vpop.f32.mrf.mxu0
    %v2396 = vadd.f32 %v1690, %v2395
    %v2397 = vpop.f32.mrf.mxu0
    %v2398 = vadd.f32 %v1692, %v2397
    %v2399 = vpop.f32.mrf.mxu0
    %v2400 = vadd.f32 %v1694, %v2399
    %2401 = vmatprep.mubr.bf16.mxu0 %v935
    %2402 = vmatmul.mubr.bf16.gmra.mxu0 %v934
    %v2403 = vpop.f32.mrf.mxu0
    %v2404 = vadd.f32 %v1698, %v2403
    %v2405 = vpop.f32.mrf.mxu0
    %v2406 = vadd.f32 %v1700, %v2405
    %v2407 = vpop.f32.mrf.mxu0
    %v2408 = vadd.f32 %v1702, %v2407
    %v2409 = vpop.f32.mrf.mxu0
    %v2410 = vadd.f32 %v1704, %v2409
    %2411 = vmatprep.mubr.bf16.mxu0 %v937
    %2412 = vmatmul.mubr.bf16.gmra.mxu0 %v936
    %v2413 = vpop.f32.mrf.mxu0
    %v2414 = vadd.f32 %v1708, %v2413
    %v2415 = vpop.f32.mrf.mxu0
    %v2416 = vadd.f32 %v1710, %v2415
    %v2417 = vpop.f32.mrf.mxu0
    %v2418 = vadd.f32 %v1712, %v2417
    %v2419 = vpop.f32.mrf.mxu0
    %v2420 = vadd.f32 %v1714, %v2419
    %2421 = vmatprep.mubr.bf16.mxu0 %v939
    %2422 = vmatmul.mubr.bf16.gmra.mxu0 %v938
    %v2423 = vpop.f32.mrf.mxu0
    %v2424 = vadd.f32 %v1718, %v2423
    %v2425 = vpop.f32.mrf.mxu0
    %v2426 = vadd.f32 %v1720, %v2425
    %v2427 = vpop.f32.mrf.mxu0
    %v2428 = vadd.f32 %v1722, %v2427
    %v2429 = vpop.f32.mrf.mxu0
    %v2430 = vadd.f32 %v1724, %v2429
    %2431 = vmatprep.mubr.bf16.mxu0 %v941
    %2432 = vmatmul.mubr.bf16.gmra.mxu0 %v940
    %v2433 = vpop.f32.mrf.mxu0
    %v2434 = vadd.f32 %v1728, %v2433
    %v2435 = vpop.f32.mrf.mxu0
    %v2436 = vadd.f32 %v1730, %v2435
    %v2437 = vpop.f32.mrf.mxu0
    %v2438 = vadd.f32 %v1732, %v2437
    %v2439 = vpop.f32.mrf.mxu0
    %v2440 = vadd.f32 %v1734, %v2439
    %2441 = vmatprep.mubr.bf16.mxu0 %v943
    %2442 = vmatmul.mubr.bf16.gmra.mxu0 %v942
    %v2443 = vpop.f32.mrf.mxu0
    %v2444 = vadd.f32 %v1738, %v2443
    %v2445 = vpop.f32.mrf.mxu0
    %v2446 = vadd.f32 %v1740, %v2445
    %v2447 = vpop.f32.mrf.mxu0
    %v2448 = vadd.f32 %v1742, %v2447
    %v2449 = vpop.f32.mrf.mxu0
    %v2450 = vadd.f32 %v1744, %v2449
    %2451 = vmatprep.mubr.bf16.mxu0 %v945
    %2452 = vmatmul.mubr.bf16.gmra.mxu0 %v944
    %v2453 = vpop.f32.mrf.mxu0
    %v2454 = vadd.f32 %v1748, %v2453
    %v2455 = vpop.f32.mrf.mxu0
    %v2456 = vadd.f32 %v1750, %v2455
    %v2457 = vpop.f32.mrf.mxu0
    %v2458 = vadd.f32 %v1752, %v2457
    %v2459 = vpop.f32.mrf.mxu0
    %v2460 = vadd.f32 %v1754, %v2459
    %2461 = vmatprep.mubr.bf16.mxu0 %v947
    %2462 = vmatmul.mubr.bf16.gmra.mxu0 %v946
    %v2463 = vpop.f32.mrf.mxu0
    %v2464 = vadd.f32 %v1758, %v2463
    %v2465 = vpop.f32.mrf.mxu0
    %v2466 = vadd.f32 %v1760, %v2465
    %v2467 = vpop.f32.mrf.mxu0
    %v2468 = vadd.f32 %v1762, %v2467
    %v2469 = vpop.f32.mrf.mxu0
    %v2470 = vadd.f32 %v1764, %v2469
    %2471 = vmatprep.mubr.bf16.mxu0 %v949
    %2472 = vmatmul.mubr.bf16.gmra.mxu0 %v948
    %v2473 = vpop.f32.mrf.mxu0
    %v2474 = vadd.f32 %v1768, %v2473
    %v2475 = vpop.f32.mrf.mxu0
    %v2476 = vadd.f32 %v1770, %v2475
    %v2477 = vpop.f32.mrf.mxu0
    %v2478 = vadd.f32 %v1772, %v2477
    %v2479 = vpop.f32.mrf.mxu0
    %v2480 = vadd.f32 %v1774, %v2479
    %2481 = vmatprep.mubr.bf16.mxu0 %v951
    %2482 = vmatmul.mubr.bf16.gmra.mxu0 %v950
    %v2483 = vpop.f32.mrf.mxu0
    %v2484 = vadd.f32 %v1778, %v2483
    %v2485 = vpop.f32.mrf.mxu0
    %v2486 = vadd.f32 %v1780, %v2485
    %v2487 = vpop.f32.mrf.mxu0
    %v2488 = vadd.f32 %v1782, %v2487
    %v2489 = vpop.f32.mrf.mxu0
    %v2490 = vadd.f32 %v1784, %v2489
    %2491 = vmatprep.mubr.bf16.mxu0 %v953
    %2492 = vmatmul.mubr.bf16.gmra.mxu0 %v952
    %v2493 = vpop.f32.mrf.mxu0
    %v2494 = vadd.f32 %v1788, %v2493
    %v2495 = vpop.f32.mrf.mxu0
    %v2496 = vadd.f32 %v1790, %v2495
    %v2497 = vpop.f32.mrf.mxu0
    %v2498 = vadd.f32 %v1792, %v2497
    %v2499 = vpop.f32.mrf.mxu0
    %v2500 = vadd.f32 %v1794, %v2499
    %2501 = vmatprep.mubr.bf16.mxu0 %v955
    %2502 = vmatmul.mubr.bf16.gmra.mxu0 %v954
    %v2503 = vpop.f32.mrf.mxu0
    %v2504 = vadd.f32 %v1798, %v2503
    %v2505 = vpop.f32.mrf.mxu0
    %v2506 = vadd.f32 %v1800, %v2505
    %v2507 = vpop.f32.mrf.mxu0
    %v2508 = vadd.f32 %v1802, %v2507
    %v2509 = vpop.f32.mrf.mxu0
    %v2510 = vadd.f32 %v1804, %v2509
    %2511 = vmatprep.mubr.bf16.mxu0 %v957
    %2512 = vmatmul.mubr.bf16.gmra.mxu0 %v956
    %v2513 = vpop.f32.mrf.mxu0
    %v2514 = vadd.f32 %v1808, %v2513
    %v2515 = vpop.f32.mrf.mxu0
    %v2516 = vadd.f32 %v1810, %v2515
    %v2517 = vpop.f32.mrf.mxu0
    %v2518 = vadd.f32 %v1812, %v2517
    %v2519 = vpop.f32.mrf.mxu0
    %v2520 = vadd.f32 %v1814, %v2519
    %2521 = vmatprep.mubr.bf16.mxu0 %v959
    %2522 = vmatmul.mubr.bf16.gmra.mxu0 %v958
    %v2523 = vpop.f32.mrf.mxu0
    %v2524 = vadd.f32 %v1818, %v2523
    %v2525 = vpop.f32.mrf.mxu0
    %v2526 = vadd.f32 %v1820, %v2525
    %v2527 = vpop.f32.mrf.mxu0
    %v2528 = vadd.f32 %v1822, %v2527
    %v2529 = vpop.f32.mrf.mxu0
    %v2530 = vadd.f32 %v1824, %v2529
    %2531 = vdwg.mxu0
    %v2532 = vlaneseq
    %v2533 = vshrl.u32 %v2532, 7
    %v2534 = vsub.s32 0, %v2533
    %v2535 = vrot.slane %v218, %v2534
    %v2536 = vlaneseq
    %v2537 = vshrl.u32 %v2536, 7
    %v2538 = vsub.s32 0, %v2537
    %v2539 = vrot.slane %v219, %v2538
    %v2540 = vlaneseq
    %v2541 = vshrl.u32 %v2540, 7
    %v2542 = vsub.s32 0, %v2541
    %v2543 = vrot.slane %v220, %v2542
    %v2544 = vlaneseq
    %v2545 = vshrl.u32 %v2544, 7
    %v2546 = vsub.s32 0, %v2545
    %v2547 = vrot.slane %v221, %v2546
    %v2548 = vadd.f32 %v2181, %v2535
    %v2549 = vadd.f32 %v2183, %v2539
    %v2550 = vadd.f32 %v2374, %v2543
    %v2551 = vadd.f32 %v2376, %v2547
    %v2552 = vadd.f32 %v2185, %v2535
    %v2553 = vadd.f32 %v2187, %v2539
    %v2554 = vadd.f32 %v2378, %v2543
    %v2555 = vadd.f32 %v2380, %v2547
    %v2556 = vadd.f32 %v2191, %v2535
    %v2557 = vadd.f32 %v2193, %v2539
    %v2558 = vadd.f32 %v2384, %v2543
    %v2559 = vadd.f32 %v2386, %v2547
    %v2560 = vadd.f32 %v2195, %v2535
    %v2561 = vadd.f32 %v2197, %v2539
    %v2562 = vadd.f32 %v2388, %v2543
    %v2563 = vadd.f32 %v2390, %v2547
    %v2564 = vadd.f32 %v2201, %v2535
    %v2565 = vadd.f32 %v2203, %v2539
    %v2566 = vadd.f32 %v2394, %v2543
    %v2567 = vadd.f32 %v2396, %v2547
    %v2568 = vadd.f32 %v2205, %v2535
    %v2569 = vadd.f32 %v2207, %v2539
    %v2570 = vadd.f32 %v2398, %v2543
    %v2571 = vadd.f32 %v2400, %v2547
    %v2572 = vadd.f32 %v2211, %v2535
    %v2573 = vadd.f32 %v2213, %v2539
    %v2574 = vadd.f32 %v2404, %v2543
    %v2575 = vadd.f32 %v2406, %v2547
    %v2576 = vadd.f32 %v2215, %v2535
    %v2577 = vadd.f32 %v2217, %v2539
    %v2578 = vadd.f32 %v2408, %v2543
    %v2579 = vadd.f32 %v2410, %v2547
    %v2580 = vadd.f32 %v2221, %v2535
    %v2581 = vadd.f32 %v2223, %v2539
    %v2582 = vadd.f32 %v2414, %v2543
    %v2583 = vadd.f32 %v2416, %v2547
    %v2584 = vadd.f32 %v2225, %v2535
    %v2585 = vadd.f32 %v2227, %v2539
    %v2586 = vadd.f32 %v2418, %v2543
    %v2587 = vadd.f32 %v2420, %v2547
    %v2588 = vadd.f32 %v2231, %v2535
    %v2589 = vadd.f32 %v2233, %v2539
    %v2590 = vadd.f32 %v2424, %v2543
    %v2591 = vadd.f32 %v2426, %v2547
    %v2592 = vadd.f32 %v2235, %v2535
    %v2593 = vadd.f32 %v2237, %v2539
    %v2594 = vadd.f32 %v2428, %v2543
    %v2595 = vadd.f32 %v2430, %v2547
    %v2596 = vadd.f32 %v2241, %v2535
    %v2597 = vadd.f32 %v2243, %v2539
    %v2598 = vadd.f32 %v2434, %v2543
    %v2599 = vadd.f32 %v2436, %v2547
    %v2600 = vadd.f32 %v2245, %v2535
    %v2601 = vadd.f32 %v2247, %v2539
    %v2602 = vadd.f32 %v2438, %v2543
    %v2603 = vadd.f32 %v2440, %v2547
    %v2604 = vadd.f32 %v2251, %v2535
    %v2605 = vadd.f32 %v2253, %v2539
    %v2606 = vadd.f32 %v2444, %v2543
    %v2607 = vadd.f32 %v2446, %v2547
    %v2608 = vadd.f32 %v2255, %v2535
    %v2609 = vadd.f32 %v2257, %v2539
    %v2610 = vadd.f32 %v2448, %v2543
    %v2611 = vadd.f32 %v2450, %v2547
    %v2612 = vadd.f32 %v2261, %v2535
    %v2613 = vadd.f32 %v2263, %v2539
    %v2614 = vadd.f32 %v2454, %v2543
    %v2615 = vadd.f32 %v2456, %v2547
    %v2616 = vadd.f32 %v2265, %v2535
    %v2617 = vadd.f32 %v2267, %v2539
    %v2618 = vadd.f32 %v2458, %v2543
    %v2619 = vadd.f32 %v2460, %v2547
    %v2620 = vadd.f32 %v2271, %v2535
    %v2621 = vadd.f32 %v2273, %v2539
    %v2622 = vadd.f32 %v2464, %v2543
    %v2623 = vadd.f32 %v2466, %v2547
    %v2624 = vadd.f32 %v2275, %v2535
    %v2625 = vadd.f32 %v2277, %v2539
    %v2626 = vadd.f32 %v2468, %v2543
    %v2627 = vadd.f32 %v2470, %v2547
    %v2628 = vadd.f32 %v2281, %v2535
    %v2629 = vadd.f32 %v2283, %v2539
    %v2630 = vadd.f32 %v2474, %v2543
    %v2631 = vadd.f32 %v2476, %v2547
    %v2632 = vadd.f32 %v2285, %v2535
    %v2633 = vadd.f32 %v2287, %v2539
    %v2634 = vadd.f32 %v2478, %v2543
    %v2635 = vadd.f32 %v2480, %v2547
    %v2636 = vadd.f32 %v2291, %v2535
    %v2637 = vadd.f32 %v2293, %v2539
    %v2638 = vadd.f32 %v2484, %v2543
    %v2639 = vadd.f32 %v2486, %v2547
    %v2640 = vadd.f32 %v2295, %v2535
    %v2641 = vadd.f32 %v2297, %v2539
    %v2642 = vadd.f32 %v2488, %v2543
    %v2643 = vadd.f32 %v2490, %v2547
    %v2644 = vadd.f32 %v2301, %v2535
    %v2645 = vadd.f32 %v2303, %v2539
    %v2646 = vadd.f32 %v2494, %v2543
    %v2647 = vadd.f32 %v2496, %v2547
    %v2648 = vadd.f32 %v2305, %v2535
    %v2649 = vadd.f32 %v2307, %v2539
    %v2650 = vadd.f32 %v2498, %v2543
    %v2651 = vadd.f32 %v2500, %v2547
    %v2652 = vadd.f32 %v2311, %v2535
    %v2653 = vadd.f32 %v2313, %v2539
    %v2654 = vadd.f32 %v2504, %v2543
    %v2655 = vadd.f32 %v2506, %v2547
    %v2656 = vadd.f32 %v2315, %v2535
    %v2657 = vadd.f32 %v2317, %v2539
    %v2658 = vadd.f32 %v2508, %v2543
    %v2659 = vadd.f32 %v2510, %v2547
    %v2660 = vadd.f32 %v2321, %v2535
    %v2661 = vadd.f32 %v2323, %v2539
    %v2662 = vadd.f32 %v2514, %v2543
    %v2663 = vadd.f32 %v2516, %v2547
    %v2664 = vadd.f32 %v2325, %v2535
    %v2665 = vadd.f32 %v2327, %v2539
    %v2666 = vadd.f32 %v2518, %v2543
    %v2667 = vadd.f32 %v2520, %v2547
    %v2668 = vadd.f32 %v2331, %v2535
    %v2669 = vadd.f32 %v2333, %v2539
    %v2670 = vadd.f32 %v2524, %v2543
    %v2671 = vadd.f32 %v2526, %v2547
    %v2672 = vadd.f32 %v2335, %v2535
    %v2673 = vadd.f32 %v2337, %v2539
    %v2674 = vadd.f32 %v2528, %v2543
    %v2675 = vadd.f32 %v2530, %v2547
    %v2676 = vmax.f32 %v2548, 0.0
    %v2677 = vmax.f32 %v2549, 0.0
    %v2678 = vmax.f32 %v2550, 0.0
    %v2679 = vmax.f32 %v2551, 0.0
    %v2680 = vmax.f32 %v2552, 0.0
    %v2681 = vmax.f32 %v2553, 0.0
    %v2682 = vmax.f32 %v2554, 0.0
    %v2683 = vmax.f32 %v2555, 0.0
    %v2684 = vmax.f32 %v2556, 0.0
    %v2685 = vmax.f32 %v2557, 0.0
    %v2686 = vmax.f32 %v2558, 0.0
    %v2687 = vmax.f32 %v2559, 0.0
    %v2688 = vmax.f32 %v2560, 0.0
    %v2689 = vmax.f32 %v2561, 0.0
    %v2690 = vmax.f32 %v2562, 0.0
    %v2691 = vmax.f32 %v2563, 0.0
    %v2692 = vmax.f32 %v2564, 0.0
    %v2693 = vmax.f32 %v2565, 0.0
    %v2694 = vmax.f32 %v2566, 0.0
    %v2695 = vmax.f32 %v2567, 0.0
    %v2696 = vmax.f32 %v2568, 0.0
    %v2697 = vmax.f32 %v2569, 0.0
    %v2698 = vmax.f32 %v2570, 0.0
    %v2699 = vmax.f32 %v2571, 0.0
    %v2700 = vmax.f32 %v2572, 0.0
    %v2701 = vmax.f32 %v2573, 0.0
    %v2702 = vmax.f32 %v2574, 0.0
    %v2703 = vmax.f32 %v2575, 0.0
    %v2704 = vmax.f32 %v2576, 0.0
    %v2705 = vmax.f32 %v2577, 0.0
    %v2706 = vmax.f32 %v2578, 0.0
    %v2707 = vmax.f32 %v2579, 0.0
    %v2708 = vmax.f32 %v2580, 0.0
    %v2709 = vmax.f32 %v2581, 0.0
    %v2710 = vmax.f32 %v2582, 0.0
    %v2711 = vmax.f32 %v2583, 0.0
    %v2712 = vmax.f32 %v2584, 0.0
    %v2713 = vmax.f32 %v2585, 0.0
    %v2714 = vmax.f32 %v2586, 0.0
    %v2715 = vmax.f32 %v2587, 0.0
    %v2716 = vmax.f32 %v2588, 0.0
    %v2717 = vmax.f32 %v2589, 0.0
    %v2718 = vmax.f32 %v2590, 0.0
    %v2719 = vmax.f32 %v2591, 0.0
    %v2720 = vmax.f32 %v2592, 0.0
    %v2721 = vmax.f32 %v2593, 0.0
    %v2722 = vmax.f32 %v2594, 0.0
    %v2723 = vmax.f32 %v2595, 0.0
    %v2724 = vmax.f32 %v2596, 0.0
    %v2725 = vmax.f32 %v2597, 0.0
    %v2726 = vmax.f32 %v2598, 0.0
    %v2727 = vmax.f32 %v2599, 0.0
    %v2728 = vmax.f32 %v2600, 0.0
    %v2729 = vmax.f32 %v2601, 0.0
    %v2730 = vmax.f32 %v2602, 0.0
    %v2731 = vmax.f32 %v2603, 0.0
    %v2732 = vmax.f32 %v2604, 0.0
    %v2733 = vmax.f32 %v2605, 0.0
    %v2734 = vmax.f32 %v2606, 0.0
    %v2735 = vmax.f32 %v2607, 0.0
    %v2736 = vmax.f32 %v2608, 0.0
    %v2737 = vmax.f32 %v2609, 0.0
    %v2738 = vmax.f32 %v2610, 0.0
    %v2739 = vmax.f32 %v2611, 0.0
    %v2740 = vmax.f32 %v2612, 0.0
    %v2741 = vmax.f32 %v2613, 0.0
    %v2742 = vmax.f32 %v2614, 0.0
    %v2743 = vmax.f32 %v2615, 0.0
    %v2744 = vmax.f32 %v2616, 0.0
    %v2745 = vmax.f32 %v2617, 0.0
    %v2746 = vmax.f32 %v2618, 0.0
    %v2747 = vmax.f32 %v2619, 0.0
    %v2748 = vmax.f32 %v2620, 0.0
    %v2749 = vmax.f32 %v2621, 0.0
    %v2750 = vmax.f32 %v2622, 0.0
    %v2751 = vmax.f32 %v2623, 0.0
    %v2752 = vmax.f32 %v2624, 0.0
    %v2753 = vmax.f32 %v2625, 0.0
    %v2754 = vmax.f32 %v2626, 0.0
    %v2755 = vmax.f32 %v2627, 0.0
    %v2756 = vmax.f32 %v2628, 0.0
    %v2757 = vmax.f32 %v2629, 0.0
    %v2758 = vmax.f32 %v2630, 0.0
    %v2759 = vmax.f32 %v2631, 0.0
    %v2760 = vmax.f32 %v2632, 0.0
    %v2761 = vmax.f32 %v2633, 0.0
    %v2762 = vmax.f32 %v2634, 0.0
    %v2763 = vmax.f32 %v2635, 0.0
    %v2764 = vmax.f32 %v2636, 0.0
    %v2765 = vmax.f32 %v2637, 0.0
    %v2766 = vmax.f32 %v2638, 0.0
    %v2767 = vmax.f32 %v2639, 0.0
    %v2768 = vmax.f32 %v2640, 0.0
    %v2769 = vmax.f32 %v2641, 0.0
    %v2770 = vmax.f32 %v2642, 0.0
    %v2771 = vmax.f32 %v2643, 0.0
    %v2772 = vmax.f32 %v2644, 0.0
    %v2773 = vmax.f32 %v2645, 0.0
    %v2774 = vmax.f32 %v2646, 0.0
    %v2775 = vmax.f32 %v2647, 0.0
    %v2776 = vmax.f32 %v2648, 0.0
    %v2777 = vmax.f32 %v2649, 0.0
    %v2778 = vmax.f32 %v2650, 0.0
    %v2779 = vmax.f32 %v2651, 0.0
    %v2780 = vmax.f32 %v2652, 0.0
    %v2781 = vmax.f32 %v2653, 0.0
    %v2782 = vmax.f32 %v2654, 0.0
    %v2783 = vmax.f32 %v2655, 0.0
    %v2784 = vmax.f32 %v2656, 0.0
    %v2785 = vmax.f32 %v2657, 0.0
    %v2786 = vmax.f32 %v2658, 0.0
    %v2787 = vmax.f32 %v2659, 0.0
    %v2788 = vmax.f32 %v2660, 0.0
    %v2789 = vmax.f32 %v2661, 0.0
    %v2790 = vmax.f32 %v2662, 0.0
    %v2791 = vmax.f32 %v2663, 0.0
    %v2792 = vmax.f32 %v2664, 0.0
    %v2793 = vmax.f32 %v2665, 0.0
    %v2794 = vmax.f32 %v2666, 0.0
    %v2795 = vmax.f32 %v2667, 0.0
    %v2796 = vmax.f32 %v2668, 0.0
    %v2797 = vmax.f32 %v2669, 0.0
    %v2798 = vmax.f32 %v2670, 0.0
    %v2799 = vmax.f32 %v2671, 0.0
    %v2800 = vmax.f32 %v2672, 0.0
    %v2801 = vmax.f32 %v2673, 0.0
    %v2802 = vmax.f32 %v2674, 0.0
    %v2803 = vmax.f32 %v2675, 0.0
    %v2804 = vadd.f32 %v2676, %v353
    %v2805 = vadd.f32 %v2677, %v355
    %v2806 = vadd.f32 %v2680, %v359
    %v2807 = vadd.f32 %v2681, %v361
    %v2808 = vadd.f32 %v2684, %v365
    %v2809 = vadd.f32 %v2685, %v367
    %v2810 = vadd.f32 %v2688, %v371
    %v2811 = vadd.f32 %v2689, %v373
    %v2812 = vadd.f32 %v2692, %v377
    %v2813 = vadd.f32 %v2693, %v379
    %v2814 = vadd.f32 %v2696, %v383
    %v2815 = vadd.f32 %v2697, %v385
    %v2816 = vadd.f32 %v2700, %v389
    %v2817 = vadd.f32 %v2701, %v391
    %v2818 = vadd.f32 %v2704, %v395
    %v2819 = vadd.f32 %v2705, %v397
    %v2820 = vadd.f32 %v2708, %v401
    %v2821 = vadd.f32 %v2709, %v403
    %v2822 = vadd.f32 %v2712, %v407
    %v2823 = vadd.f32 %v2713, %v409
    %v2824 = vadd.f32 %v2716, %v413
    %v2825 = vadd.f32 %v2717, %v415
    %v2826 = vadd.f32 %v2720, %v419
    %v2827 = vadd.f32 %v2721, %v421
    %v2828 = vadd.f32 %v2724, %v425
    %v2829 = vadd.f32 %v2725, %v427
    %v2830 = vadd.f32 %v2728, %v431
    %v2831 = vadd.f32 %v2729, %v433
    %v2832 = vadd.f32 %v2732, %v437
    %v2833 = vadd.f32 %v2733, %v439
    %v2834 = vadd.f32 %v2736, %v443
    %v2835 = vadd.f32 %v2737, %v445
    %v2836 = vadd.f32 %v2740, %v449
    %v2837 = vadd.f32 %v2741, %v451
    %v2838 = vadd.f32 %v2744, %v455
    %v2839 = vadd.f32 %v2745, %v457
    %v2840 = vadd.f32 %v2748, %v461
    %v2841 = vadd.f32 %v2749, %v463
    %v2842 = vadd.f32 %v2752, %v467
    %v2843 = vadd.f32 %v2753, %v469
    %v2844 = vadd.f32 %v2756, %v473
    %v2845 = vadd.f32 %v2757, %v475
    %v2846 = vadd.f32 %v2760, %v479
    %v2847 = vadd.f32 %v2761, %v481
    %v2848 = vadd.f32 %v2764, %v485
    %v2849 = vadd.f32 %v2765, %v487
    %v2850 = vadd.f32 %v2768, %v491
    %v2851 = vadd.f32 %v2769, %v493
    %v2852 = vadd.f32 %v2772, %v497
    %v2853 = vadd.f32 %v2773, %v499
    %v2854 = vadd.f32 %v2776, %v503
    %v2855 = vadd.f32 %v2777, %v505
    %v2856 = vadd.f32 %v2780, %v509
    %v2857 = vadd.f32 %v2781, %v511
    %v2858 = vadd.f32 %v2784, %v515
    %v2859 = vadd.f32 %v2785, %v517
    %v2860 = vadd.f32 %v2788, %v521
    %v2861 = vadd.f32 %v2789, %v523
    %v2862 = vadd.f32 %v2792, %v527
    %v2863 = vadd.f32 %v2793, %v529
    %v2864 = vadd.f32 %v2796, %v533
    %v2865 = vadd.f32 %v2797, %v535
    %v2866 = vadd.f32 %v2800, %v539
    %v2867 = vadd.f32 %v2801, %v541
    %v2868 = vadd.f32 %v2678, %v353
    %v2869 = vadd.f32 %v2679, %v355
    %v2870 = vadd.f32 %v2682, %v359
    %v2871 = vadd.f32 %v2683, %v361
    %v2872 = vadd.f32 %v2686, %v365
    %v2873 = vadd.f32 %v2687, %v367
    %v2874 = vadd.f32 %v2690, %v371
    %v2875 = vadd.f32 %v2691, %v373
    %v2876 = vadd.f32 %v2694, %v377
    %v2877 = vadd.f32 %v2695, %v379
    %v2878 = vadd.f32 %v2698, %v383
    %v2879 = vadd.f32 %v2699, %v385
    %v2880 = vadd.f32 %v2702, %v389
    %v2881 = vadd.f32 %v2703, %v391
    %v2882 = vadd.f32 %v2706, %v395
    %v2883 = vadd.f32 %v2707, %v397
    %v2884 = vadd.f32 %v2710, %v401
    %v2885 = vadd.f32 %v2711, %v403
    %v2886 = vadd.f32 %v2714, %v407
    %v2887 = vadd.f32 %v2715, %v409
    %v2888 = vadd.f32 %v2718, %v413
    %v2889 = vadd.f32 %v2719, %v415
    %v2890 = vadd.f32 %v2722, %v419
    %v2891 = vadd.f32 %v2723, %v421
    %v2892 = vadd.f32 %v2726, %v425
    %v2893 = vadd.f32 %v2727, %v427
    %v2894 = vadd.f32 %v2730, %v431
    %v2895 = vadd.f32 %v2731, %v433
    %v2896 = vadd.f32 %v2734, %v437
    %v2897 = vadd.f32 %v2735, %v439
    %v2898 = vadd.f32 %v2738, %v443
    %v2899 = vadd.f32 %v2739, %v445
    %v2900 = vadd.f32 %v2742, %v449
    %v2901 = vadd.f32 %v2743, %v451
    %v2902 = vadd.f32 %v2746, %v455
    %v2903 = vadd.f32 %v2747, %v457
    %v2904 = vadd.f32 %v2750, %v461
    %v2905 = vadd.f32 %v2751, %v463
    %v2906 = vadd.f32 %v2754, %v467
    %v2907 = vadd.f32 %v2755, %v469
    %v2908 = vadd.f32 %v2758, %v473
    %v2909 = vadd.f32 %v2759, %v475
    %v2910 = vadd.f32 %v2762, %v479
    %v2911 = vadd.f32 %v2763, %v481
    %v2912 = vadd.f32 %v2766, %v485
    %v2913 = vadd.f32 %v2767, %v487
    %v2914 = vadd.f32 %v2770, %v491
    %v2915 = vadd.f32 %v2771, %v493
    %v2916 = vadd.f32 %v2774, %v497
    %v2917 = vadd.f32 %v2775, %v499
    %v2918 = vadd.f32 %v2778, %v503
    %v2919 = vadd.f32 %v2779, %v505
    %v2920 = vadd.f32 %v2782, %v509
    %v2921 = vadd.f32 %v2783, %v511
    %v2922 = vadd.f32 %v2786, %v515
    %v2923 = vadd.f32 %v2787, %v517
    %v2924 = vadd.f32 %v2790, %v521
    %v2925 = vadd.f32 %v2791, %v523
    %v2926 = vadd.f32 %v2794, %v527
    %v2927 = vadd.f32 %v2795, %v529
    %v2928 = vadd.f32 %v2798, %v533
    %v2929 = vadd.f32 %v2799, %v535
    %v2930 = vadd.f32 %v2802, %v539
    %v2931 = vadd.f32 %v2803, %v541
    %v2932 = vpack.c.bf16 %v2806, %v2804
    %v2933 = vpack.c.bf16 %v2807, %v2805
    %v2934 = vpack.c.bf16 %v2810, %v2808
    %v2935 = vpack.c.bf16 %v2811, %v2809
    %v2936 = vpack.c.bf16 %v2814, %v2812
    %v2937 = vpack.c.bf16 %v2815, %v2813
    %v2938 = vpack.c.bf16 %v2818, %v2816
    %v2939 = vpack.c.bf16 %v2819, %v2817
    %v2940 = vpack.c.bf16 %v2822, %v2820
    %v2941 = vpack.c.bf16 %v2823, %v2821
    %v2942 = vpack.c.bf16 %v2826, %v2824
    %v2943 = vpack.c.bf16 %v2827, %v2825
    %v2944 = vpack.c.bf16 %v2830, %v2828
    %v2945 = vpack.c.bf16 %v2831, %v2829
    %v2946 = vpack.c.bf16 %v2834, %v2832
    %v2947 = vpack.c.bf16 %v2835, %v2833
    %v2948 = vpack.c.bf16 %v2838, %v2836
    %v2949 = vpack.c.bf16 %v2839, %v2837
    %v2950 = vpack.c.bf16 %v2842, %v2840
    %v2951 = vpack.c.bf16 %v2843, %v2841
    %v2952 = vpack.c.bf16 %v2846, %v2844
    %v2953 = vpack.c.bf16 %v2847, %v2845
    %v2954 = vpack.c.bf16 %v2850, %v2848
    %v2955 = vpack.c.bf16 %v2851, %v2849
    %v2956 = vpack.c.bf16 %v2854, %v2852
    %v2957 = vpack.c.bf16 %v2855, %v2853
    %v2958 = vpack.c.bf16 %v2858, %v2856
    %v2959 = vpack.c.bf16 %v2859, %v2857
    %v2960 = vpack.c.bf16 %v2862, %v2860
    %v2961 = vpack.c.bf16 %v2863, %v2861
    %v2962 = vpack.c.bf16 %v2866, %v2864
    %v2963 = vpack.c.bf16 %v2867, %v2865
    %v2964 = vld [vmem:[#allocation10] sm:$0xf]
    %v2965 = vld [vmem:[#allocation10 + $0x8] sm:$0xf]
    %v2966 = vld [vmem:[#allocation10 + $0x10] sm:$0xf]
    %v2967 = vld [vmem:[#allocation10 + $0x18] sm:$0xf]
    %v2968 = vld [vmem:[#allocation10 + $0x20] sm:$0xf]
    %v2969 = vld [vmem:[#allocation10 + $0x28] sm:$0xf]
    %v2970 = vld [vmem:[#allocation10 + $0x30] sm:$0xf]
    %v2971 = vld [vmem:[#allocation10 + $0x38] sm:$0xf]
    %v2972 = vld [vmem:[#allocation10 + $0x40] sm:$0xf]
    %v2973 = vld [vmem:[#allocation10 + $0x48] sm:$0xf]
    %v2974 = vld [vmem:[#allocation10 + $0x50] sm:$0xf]
    %v2975 = vld [vmem:[#allocation10 + $0x58] sm:$0xf]
    %v2976 = vld [vmem:[#allocation10 + $0x60] sm:$0xf]
    %v2977 = vld [vmem:[#allocation10 + $0x68] sm:$0xf]
    %v2978 = vld [vmem:[#allocation10 + $0x70] sm:$0xf]
    %v2979 = vld [vmem:[#allocation10 + $0x78] sm:$0xf]
    %v2980 = vld [vmem:[#allocation10 + $0x80] sm:$0xf]
    %v2981 = vld [vmem:[#allocation10 + $0x88] sm:$0xf]
    %v2982 = vld [vmem:[#allocation10 + $0x90] sm:$0xf]
    %v2983 = vld [vmem:[#allocation10 + $0x98] sm:$0xf]
    %v2984 = vld [vmem:[#allocation10 + $0xa0] sm:$0xf]
    %v2985 = vld [vmem:[#allocation10 + $0xa8] sm:$0xf]
    %v2986 = vld [vmem:[#allocation10 + $0xb0] sm:$0xf]
    %v2987 = vld [vmem:[#allocation10 + $0xb8] sm:$0xf]
    %v2988 = vld [vmem:[#allocation10 + $0xc0] sm:$0xf]
    %v2989 = vld [vmem:[#allocation10 + $0xc8] sm:$0xf]
    %v2990 = vld [vmem:[#allocation10 + $0xd0] sm:$0xf]
    %v2991 = vld [vmem:[#allocation10 + $0xd8] sm:$0xf]
    %v2992 = vld [vmem:[#allocation10 + $0xe0] sm:$0xf]
    %v2993 = vld [vmem:[#allocation10 + $0xe8] sm:$0xf]
    %v2994 = vld [vmem:[#allocation10 + $0xf0] sm:$0xf]
    %v2995 = vld [vmem:[#allocation10 + $0xf8] sm:$0xf]
    %v2996 = vlaneseq
    %v2997 = vshrl.u32 %v2996, 7
    %v2998 = vsub.s32 1, %v2997
    %v2999 = vrot.slane %v218, %v2998
    %v3032 = vunpack.c.l.b16 %v2964
    %v3033 = vunpack.c.l.b16 %v2965
    %v3034 = vunpack.c.l.b16 %v2966
    %v3035 = vunpack.c.l.b16 %v2967
    %v3036 = vunpack.c.l.b16 %v2968
    %v3037 = vunpack.c.l.b16 %v2969
    %v3038 = vunpack.c.l.b16 %v2970
    %v3039 = vunpack.c.l.b16 %v2971
    %v3040 = vunpack.c.l.b16 %v2972
    %v3041 = vunpack.c.l.b16 %v2973
    %v3042 = vunpack.c.l.b16 %v2974
    %v3043 = vunpack.c.l.b16 %v2975
    %v3044 = vunpack.c.l.b16 %v2976
    %v3045 = vunpack.c.l.b16 %v2977
    %v3046 = vunpack.c.l.b16 %v2978
    %v3047 = vunpack.c.l.b16 %v2979
    %v3048 = vunpack.c.l.b16 %v2980
    %v3049 = vunpack.c.l.b16 %v2981
    %v3050 = vunpack.c.l.b16 %v2982
    %v3051 = vunpack.c.l.b16 %v2983
    %v3052 = vunpack.c.l.b16 %v2984
    %v3053 = vunpack.c.l.b16 %v2985
    %v3054 = vunpack.c.l.b16 %v2986
    %v3055 = vunpack.c.l.b16 %v2987
    %v3056 = vunpack.c.l.b16 %v2988
    %v3057 = vunpack.c.l.b16 %v2989
    %v3058 = vunpack.c.l.b16 %v2990
    %v3059 = vunpack.c.l.b16 %v2991
    %v3060 = vunpack.c.l.b16 %v2992
    %v3061 = vunpack.c.l.b16 %v2993
    %v3062 = vunpack.c.l.b16 %v2994
    %v3063 = vunpack.c.l.b16 %v2995
    %v3064 = vpack.c.b16 %v3033, %v3032
    %v3065 = vpack.c.b16 %v3035, %v3034
    %v3066 = vpack.c.b16 %v3037, %v3036
    %v3067 = vpack.c.b16 %v3039, %v3038
    %v3068 = vpack.c.b16 %v3041, %v3040
    %v3069 = vpack.c.b16 %v3043, %v3042
    %v3070 = vpack.c.b16 %v3045, %v3044
    %v3071 = vpack.c.b16 %v3047, %v3046
    %v3072 = vpack.c.b16 %v3049, %v3048
    %v3073 = vpack.c.b16 %v3051, %v3050
    %v3074 = vpack.c.b16 %v3053, %v3052
    %v3075 = vpack.c.b16 %v3055, %v3054
    %v3076 = vpack.c.b16 %v3057, %v3056
    %v3077 = vpack.c.b16 %v3059, %v3058
    %v3078 = vpack.c.b16 %v3061, %v3060
    %v3079 = vpack.c.b16 %v3063, %v3062
    %3096 = vmatprep.subr.bf16.mxu0 0
    %3097 = vmatpush1.bf16.msra.mxu0 %v3071
    %3098 = vmatprep.subr.bf16.mxu0 0
    %3099 = vmatpush1.bf16.msra.mxu0 %v3070
    %3100 = vmatprep.subr.bf16.mxu0 0
    %3101 = vmatpush1.bf16.msra.mxu0 %v3069
    %3102 = vmatprep.subr.bf16.mxu0 0
    %3103 = vmatpush1.bf16.msra.mxu0 %v3068
    %3104 = vmatprep.subr.bf16.mxu0 0
    %3105 = vmatpush1.bf16.msra.mxu0 %v3067
    %3106 = vmatprep.subr.bf16.mxu0 0
    %3107 = vmatpush1.bf16.msra.mxu0 %v3066
    %3108 = vmatprep.subr.bf16.mxu0 0
    %3109 = vmatpush1.bf16.msra.mxu0 %v3065
    %3110 = vmatprep.subr.bf16.mxu0 0
    %3111 = vmatpush1.bf16.msra.mxu0 %v3064
    %3112 = vmatprep.subr.bf16.mxu0 0
    %3113 = vmatpush2.bf16.msra.mxu0 %v3079
    %3114 = vmatprep.subr.bf16.mxu0 0
    %3115 = vmatpush2.bf16.msra.mxu0 %v3078
    %3116 = vmatprep.subr.bf16.mxu0 0
    %3117 = vmatpush2.bf16.msra.mxu0 %v3077
    %3118 = vmatprep.subr.bf16.mxu0 0
    %3119 = vmatpush2.bf16.msra.mxu0 %v3076
    %3120 = vmatprep.subr.bf16.mxu0 0
    %3121 = vmatpush2.bf16.msra.mxu0 %v3075
    %3122 = vmatprep.subr.bf16.mxu0 0
    %3123 = vmatpush2.bf16.msra.mxu0 %v3074
    %3124 = vmatprep.subr.bf16.mxu0 0
    %3125 = vmatpush2.bf16.msra.mxu0 %v3073
    %3126 = vmatprep.subr.bf16.mxu0 0
    %3127 = vmatpush2.bf16.msra.mxu0 %v3072
    %3128 = vmatprep.mubr.bf16.mxu0 %v2933
    %3129 = vmatmul.mubr.bf16.gmra.mxu0 %v2932
    %v3130 = vpop.f32.mrf.mxu0
    %v3131 = vadd.f32 %v2999, %v3130
    %v3132 = vpop.f32.mrf.mxu0
    %v3133 = vpop.f32.mrf.mxu0
    %v3134 = vadd.f32 %v2999, %v3133
    %v3135 = vpop.f32.mrf.mxu0
    %3136 = vmatprep.mubr.bf16.mxu0 %v2935
    %3137 = vmatmul.mubr.bf16.gmra.mxu0 %v2934
    %v3138 = vpop.f32.mrf.mxu0
    %v3139 = vadd.f32 %v2999, %v3138
    %v3140 = vpop.f32.mrf.mxu0
    %v3141 = vpop.f32.mrf.mxu0
    %v3142 = vadd.f32 %v2999, %v3141
    %v3143 = vpop.f32.mrf.mxu0
    %3144 = vmatprep.mubr.bf16.mxu0 %v2937
    %3145 = vmatmul.mubr.bf16.gmra.mxu0 %v2936
    %v3146 = vpop.f32.mrf.mxu0
    %v3147 = vadd.f32 %v2999, %v3146
    %v3148 = vpop.f32.mrf.mxu0
    %v3149 = vpop.f32.mrf.mxu0
    %v3150 = vadd.f32 %v2999, %v3149
    %v3151 = vpop.f32.mrf.mxu0
    %3152 = vmatprep.mubr.bf16.mxu0 %v2939
    %3153 = vmatmul.mubr.bf16.gmra.mxu0 %v2938
    %v3154 = vpop.f32.mrf.mxu0
    %v3155 = vadd.f32 %v2999, %v3154
    %v3156 = vpop.f32.mrf.mxu0
    %v3157 = vpop.f32.mrf.mxu0
    %v3158 = vadd.f32 %v2999, %v3157
    %v3159 = vpop.f32.mrf.mxu0
    %3160 = vmatprep.mubr.bf16.mxu0 %v2941
    %3161 = vmatmul.mubr.bf16.gmra.mxu0 %v2940
    %v3162 = vpop.f32.mrf.mxu0
    %v3163 = vadd.f32 %v2999, %v3162
    %v3164 = vpop.f32.mrf.mxu0
    %v3165 = vpop.f32.mrf.mxu0
    %v3166 = vadd.f32 %v2999, %v3165
    %v3167 = vpop.f32.mrf.mxu0
    %3168 = vmatprep.mubr.bf16.mxu0 %v2943
    %3169 = vmatmul.mubr.bf16.gmra.mxu0 %v2942
    %v3170 = vpop.f32.mrf.mxu0
    %v3171 = vadd.f32 %v2999, %v3170
    %v3172 = vpop.f32.mrf.mxu0
    %v3173 = vpop.f32.mrf.mxu0
    %v3174 = vadd.f32 %v2999, %v3173
    %v3175 = vpop.f32.mrf.mxu0
    %3176 = vmatprep.mubr.bf16.mxu0 %v2945
    %3177 = vmatmul.mubr.bf16.gmra.mxu0 %v2944
    %v3178 = vpop.f32.mrf.mxu0
    %v3179 = vadd.f32 %v2999, %v3178
    %v3180 = vpop.f32.mrf.mxu0
    %v3181 = vpop.f32.mrf.mxu0
    %v3182 = vadd.f32 %v2999, %v3181
    %v3183 = vpop.f32.mrf.mxu0
    %3184 = vmatprep.mubr.bf16.mxu0 %v2947
    %3185 = vmatmul.mubr.bf16.gmra.mxu0 %v2946
    %v3186 = vpop.f32.mrf.mxu0
    %v3187 = vadd.f32 %v2999, %v3186
    %v3188 = vpop.f32.mrf.mxu0
    %v3189 = vpop.f32.mrf.mxu0
    %v3190 = vadd.f32 %v2999, %v3189
    %v3191 = vpop.f32.mrf.mxu0
    %3192 = vmatprep.mubr.bf16.mxu0 %v2949
    %3193 = vmatmul.mubr.bf16.gmra.mxu0 %v2948
    %v3194 = vpop.f32.mrf.mxu0
    %v3195 = vadd.f32 %v2999, %v3194
    %v3196 = vpop.f32.mrf.mxu0
    %v3197 = vpop.f32.mrf.mxu0
    %v3198 = vadd.f32 %v2999, %v3197
    %v3199 = vpop.f32.mrf.mxu0
    %3200 = vmatprep.mubr.bf16.mxu0 %v2951
    %3201 = vmatmul.mubr.bf16.gmra.mxu0 %v2950
    %v3202 = vpop.f32.mrf.mxu0
    %v3203 = vadd.f32 %v2999, %v3202
    %v3204 = vpop.f32.mrf.mxu0
    %v3205 = vpop.f32.mrf.mxu0
    %v3206 = vadd.f32 %v2999, %v3205
    %v3207 = vpop.f32.mrf.mxu0
    %3208 = vmatprep.mubr.bf16.mxu0 %v2953
    %3209 = vmatmul.mubr.bf16.gmra.mxu0 %v2952
    %v3210 = vpop.f32.mrf.mxu0
    %v3211 = vadd.f32 %v2999, %v3210
    %v3212 = vpop.f32.mrf.mxu0
    %v3213 = vpop.f32.mrf.mxu0
    %v3214 = vadd.f32 %v2999, %v3213
    %v3215 = vpop.f32.mrf.mxu0
    %3216 = vmatprep.mubr.bf16.mxu0 %v2955
    %3217 = vmatmul.mubr.bf16.gmra.mxu0 %v2954
    %v3218 = vpop.f32.mrf.mxu0
    %v3219 = vadd.f32 %v2999, %v3218
    %v3220 = vpop.f32.mrf.mxu0
    %v3221 = vpop.f32.mrf.mxu0
    %v3222 = vadd.f32 %v2999, %v3221
    %v3223 = vpop.f32.mrf.mxu0
    %3224 = vmatprep.mubr.bf16.mxu0 %v2957
    %3225 = vmatmul.mubr.bf16.gmra.mxu0 %v2956
    %v3226 = vpop.f32.mrf.mxu0
    %v3227 = vadd.f32 %v2999, %v3226
    %v3228 = vpop.f32.mrf.mxu0
    %v3229 = vpop.f32.mrf.mxu0
    %v3230 = vadd.f32 %v2999, %v3229
    %v3231 = vpop.f32.mrf.mxu0
    %3232 = vmatprep.mubr.bf16.mxu0 %v2959
    %3233 = vmatmul.mubr.bf16.gmra.mxu0 %v2958
    %v3234 = vpop.f32.mrf.mxu0
    %v3235 = vadd.f32 %v2999, %v3234
    %v3236 = vpop.f32.mrf.mxu0
    %v3237 = vpop.f32.mrf.mxu0
    %v3238 = vadd.f32 %v2999, %v3237
    %v3239 = vpop.f32.mrf.mxu0
    %3240 = vmatprep.mubr.bf16.mxu0 %v2961
    %3241 = vmatmul.mubr.bf16.gmra.mxu0 %v2960
    %v3242 = vpop.f32.mrf.mxu0
    %v3243 = vadd.f32 %v2999, %v3242
    %v3244 = vpop.f32.mrf.mxu0
    %v3245 = vpop.f32.mrf.mxu0
    %v3246 = vadd.f32 %v2999, %v3245
    %v3247 = vpop.f32.mrf.mxu0
    %3248 = vmatprep.mubr.bf16.mxu0 %v2963
    %3249 = vmatmul.mubr.bf16.gmra.mxu0 %v2962
    %v3250 = vpop.f32.mrf.mxu0
    %v3251 = vadd.f32 %v2999, %v3250
    %v3252 = vpop.f32.mrf.mxu0
    %v3253 = vpop.f32.mrf.mxu0
    %v3254 = vadd.f32 %v2999, %v3253
    %v3255 = vpop.f32.mrf.mxu0
    %3256 = vdwg.mxu0
    %v3257 = vmax.f32 %v3131, 0.0
    %v3258 = vmax.f32 %v3134, 0.0
    %v3259 = vmax.f32 %v3139, 0.0
    %v3260 = vmax.f32 %v3142, 0.0
    %v3261 = vmax.f32 %v3147, 0.0
    %v3262 = vmax.f32 %v3150, 0.0
    %v3263 = vmax.f32 %v3155, 0.0
    %v3264 = vmax.f32 %v3158, 0.0
    %v3265 = vmax.f32 %v3163, 0.0
    %v3266 = vmax.f32 %v3166, 0.0
    %v3267 = vmax.f32 %v3171, 0.0
    %v3268 = vmax.f32 %v3174, 0.0
    %v3269 = vmax.f32 %v3179, 0.0
    %v3270 = vmax.f32 %v3182, 0.0
    %v3271 = vmax.f32 %v3187, 0.0
    %v3272 = vmax.f32 %v3190, 0.0
    %v3273 = vmax.f32 %v3195, 0.0
    %v3274 = vmax.f32 %v3198, 0.0
    %v3275 = vmax.f32 %v3203, 0.0
    %v3276 = vmax.f32 %v3206, 0.0
    %v3277 = vmax.f32 %v3211, 0.0
    %v3278 = vmax.f32 %v3214, 0.0
    %v3279 = vmax.f32 %v3219, 0.0
    %v3280 = vmax.f32 %v3222, 0.0
    %v3281 = vmax.f32 %v3227, 0.0
    %v3282 = vmax.f32 %v3230, 0.0
    %v3283 = vmax.f32 %v3235, 0.0
    %v3284 = vmax.f32 %v3238, 0.0
    %v3285 = vmax.f32 %v3243, 0.0
    %v3286 = vmax.f32 %v3246, 0.0
    %v3287 = vmax.f32 %v3251, 0.0
    %v3288 = vmax.f32 %v3254, 0.0
    %v3289 = vpack.c.bf16 %v3258, %v3257
    %v3290 = vpack.c.bf16 %v3260, %v3259
    %v3291 = vpack.c.bf16 %v3262, %v3261
    %v3292 = vpack.c.bf16 %v3264, %v3263
    %v3293 = vpack.c.bf16 %v3266, %v3265
    %v3294 = vpack.c.bf16 %v3268, %v3267
    %v3295 = vpack.c.bf16 %v3270, %v3269
    %v3296 = vpack.c.bf16 %v3272, %v3271
    %v3297 = vpack.c.bf16 %v3274, %v3273
    %v3298 = vpack.c.bf16 %v3276, %v3275
    %v3299 = vpack.c.bf16 %v3278, %v3277
    %v3300 = vpack.c.bf16 %v3280, %v3279
    %v3301 = vpack.c.bf16 %v3282, %v3281
    %v3302 = vpack.c.bf16 %v3284, %v3283
    %v3303 = vpack.c.bf16 %v3286, %v3285
    %v3304 = vpack.c.bf16 %v3288, %v3287
    %v3305 = vld [vmem:[#allocation10 + $0x100] sm:$0xf]
    %v3306 = vld [vmem:[#allocation10 + $0x108] sm:$0xf]
    %v3307 = vld [vmem:[#allocation10 + $0x110] sm:$0xf]
    %v3308 = vld [vmem:[#allocation10 + $0x118] sm:$0xf]
    %v3309 = vld [vmem:[#allocation10 + $0x120] sm:$0xf]
    %v3310 = vld [vmem:[#allocation10 + $0x128] sm:$0xf]
    %v3311 = vld [vmem:[#allocation10 + $0x130] sm:$0xf]
    %v3312 = vld [vmem:[#allocation10 + $0x138] sm:$0xf]
    %v3313 = vld [vmem:[#allocation10 + $0x140] sm:$0xf]
    %v3314 = vld [vmem:[#allocation10 + $0x148] sm:$0xf]
    %v3315 = vld [vmem:[#allocation10 + $0x150] sm:$0xf]
    %v3316 = vld [vmem:[#allocation10 + $0x158] sm:$0xf]
    %v3317 = vld [vmem:[#allocation10 + $0x160] sm:$0xf]
    %v3318 = vld [vmem:[#allocation10 + $0x168] sm:$0xf]
    %v3319 = vld [vmem:[#allocation10 + $0x170] sm:$0xf]
    %v3320 = vld [vmem:[#allocation10 + $0x178] sm:$0xf]
    %v3321 = vlaneseq
    %v3322 = vshrl.u32 %v3321, 7
    %v3323 = vsub.s32 1, %v3322
    %v3324 = vrot.slane %v219, %v3323
    %v3341 = vunpack.c.l.b16 %v3305
    %v3342 = vunpack.c.l.b16 %v3306
    %v3343 = vunpack.c.l.b16 %v3307
    %v3344 = vunpack.c.l.b16 %v3308
    %v3345 = vunpack.c.l.b16 %v3309
    %v3346 = vunpack.c.l.b16 %v3310
    %v3347 = vunpack.c.l.b16 %v3311
    %v3348 = vunpack.c.l.b16 %v3312
    %v3349 = vunpack.c.l.b16 %v3313
    %v3350 = vunpack.c.l.b16 %v3314
    %v3351 = vunpack.c.l.b16 %v3315
    %v3352 = vunpack.c.l.b16 %v3316
    %v3353 = vunpack.c.l.b16 %v3317
    %v3354 = vunpack.c.l.b16 %v3318
    %v3355 = vunpack.c.l.b16 %v3319
    %v3356 = vunpack.c.l.b16 %v3320
    %v3357 = vpack.c.b16 %v3342, %v3341
    %v3358 = vpack.c.b16 %v3344, %v3343
    %v3359 = vpack.c.b16 %v3346, %v3345
    %v3360 = vpack.c.b16 %v3348, %v3347
    %v3361 = vpack.c.b16 %v3350, %v3349
    %v3362 = vpack.c.b16 %v3352, %v3351
    %v3363 = vpack.c.b16 %v3354, %v3353
    %v3364 = vpack.c.b16 %v3356, %v3355
    %3373 = vmatprep.subr.bf16.mxu0 0
    %3374 = vmatpush1.bf16.msra.mxu0 %v3364
    %3375 = vmatprep.subr.bf16.mxu0 0
    %3376 = vmatpush1.bf16.msra.mxu0 %v3363
    %3377 = vmatprep.subr.bf16.mxu0 0
    %3378 = vmatpush1.bf16.msra.mxu0 %v3362
    %3379 = vmatprep.subr.bf16.mxu0 0
    %3380 = vmatpush1.bf16.msra.mxu0 %v3361
    %3381 = vmatprep.subr.bf16.mxu0 0
    %3382 = vmatpush1.bf16.msra.mxu0 %v3360
    %3383 = vmatprep.subr.bf16.mxu0 0
    %3384 = vmatpush1.bf16.msra.mxu0 %v3359
    %3385 = vmatprep.subr.bf16.mxu0 0
    %3386 = vmatpush1.bf16.msra.mxu0 %v3358
    %3387 = vmatprep.subr.bf16.mxu0 0
    %3388 = vmatpush1.bf16.msra.mxu0 %v3357
    %3389 = vmatprep.subr.bf16.mxu0 0
    %3390 = vmatpush2.bf16.msra.mxu0 0
    %3391 = vmatprep.subr.bf16.mxu0 0
    %3392 = vmatpush2.bf16.msra.mxu0 0
    %3393 = vmatprep.subr.bf16.mxu0 0
    %3394 = vmatpush2.bf16.msra.mxu0 0
    %3395 = vmatprep.subr.bf16.mxu0 0
    %3396 = vmatpush2.bf16.msra.mxu0 0
    %3397 = vmatprep.subr.bf16.mxu0 0
    %3398 = vmatpush2.bf16.msra.mxu0 0
    %3399 = vmatprep.subr.bf16.mxu0 0
    %3400 = vmatpush2.bf16.msra.mxu0 0
    %3401 = vmatprep.subr.bf16.mxu0 0
    %3402 = vmatpush2.bf16.msra.mxu0 0
    %3403 = vmatprep.subr.bf16.mxu0 0
    %3404 = vmatpush2.bf16.msra.mxu0 0
    %3405 = vmatprep.mubr.bf16.mxu0 0
    %3406 = vmatmul.mubr.bf16.gmra.mxu0 %v3289
    %v3407 = vpop.f32.mrf.mxu0
    %v3408 = vadd.f32 %v3324, %v3407
    %v3409 = vpop.f32.mrf.mxu0
    %v3410 = vpop.f32.mrf.mxu0
    %v3411 = vadd.f32 %v3324, %v3410
    %v3412 = vpop.f32.mrf.mxu0
    %3413 = vmatprep.mubr.bf16.mxu0 0
    %3414 = vmatmul.mubr.bf16.gmra.mxu0 %v3290
    %v3415 = vpop.f32.mrf.mxu0
    %v3416 = vadd.f32 %v3324, %v3415
    %v3417 = vpop.f32.mrf.mxu0
    %v3418 = vpop.f32.mrf.mxu0
    %v3419 = vadd.f32 %v3324, %v3418
    %v3420 = vpop.f32.mrf.mxu0
    %3421 = vmatprep.mubr.bf16.mxu0 0
    %3422 = vmatmul.mubr.bf16.gmra.mxu0 %v3291
    %v3423 = vpop.f32.mrf.mxu0
    %v3424 = vadd.f32 %v3324, %v3423
    %v3425 = vpop.f32.mrf.mxu0
    %v3426 = vpop.f32.mrf.mxu0
    %v3427 = vadd.f32 %v3324, %v3426
    %v3428 = vpop.f32.mrf.mxu0
    %3429 = vmatprep.mubr.bf16.mxu0 0
    %3430 = vmatmul.mubr.bf16.gmra.mxu0 %v3292
    %v3431 = vpop.f32.mrf.mxu0
    %v3432 = vadd.f32 %v3324, %v3431
    %v3433 = vpop.f32.mrf.mxu0
    %v3434 = vpop.f32.mrf.mxu0
    %v3435 = vadd.f32 %v3324, %v3434
    %v3436 = vpop.f32.mrf.mxu0
    %3437 = vmatprep.mubr.bf16.mxu0 0
    %3438 = vmatmul.mubr.bf16.gmra.mxu0 %v3293
    %v3439 = vpop.f32.mrf.mxu0
    %v3440 = vadd.f32 %v3324, %v3439
    %v3441 = vpop.f32.mrf.mxu0
    %v3442 = vpop.f32.mrf.mxu0
    %v3443 = vadd.f32 %v3324, %v3442
    %v3444 = vpop.f32.mrf.mxu0
    %3445 = vmatprep.mubr.bf16.mxu0 0
    %3446 = vmatmul.mubr.bf16.gmra.mxu0 %v3294
    %v3447 = vpop.f32.mrf.mxu0
    %v3448 = vadd.f32 %v3324, %v3447
    %v3449 = vpop.f32.mrf.mxu0
    %v3450 = vpop.f32.mrf.mxu0
    %v3451 = vadd.f32 %v3324, %v3450
    %v3452 = vpop.f32.mrf.mxu0
    %3453 = vmatprep.mubr.bf16.mxu0 0
    %3454 = vmatmul.mubr.bf16.gmra.mxu0 %v3295
    %v3455 = vpop.f32.mrf.mxu0
    %v3456 = vadd.f32 %v3324, %v3455
    %v3457 = vpop.f32.mrf.mxu0
    %v3458 = vpop.f32.mrf.mxu0
    %v3459 = vadd.f32 %v3324, %v3458
    %v3460 = vpop.f32.mrf.mxu0
    %3461 = vmatprep.mubr.bf16.mxu0 0
    %3462 = vmatmul.mubr.bf16.gmra.mxu0 %v3296
    %v3463 = vpop.f32.mrf.mxu0
    %v3464 = vadd.f32 %v3324, %v3463
    %v3465 = vpop.f32.mrf.mxu0
    %v3466 = vpop.f32.mrf.mxu0
    %v3467 = vadd.f32 %v3324, %v3466
    %v3468 = vpop.f32.mrf.mxu0
    %3469 = vmatprep.mubr.bf16.mxu0 0
    %3470 = vmatmul.mubr.bf16.gmra.mxu0 %v3297
    %v3471 = vpop.f32.mrf.mxu0
    %v3472 = vadd.f32 %v3324, %v3471
    %v3473 = vpop.f32.mrf.mxu0
    %v3474 = vpop.f32.mrf.mxu0
    %v3475 = vadd.f32 %v3324, %v3474
    %v3476 = vpop.f32.mrf.mxu0
    %3477 = vmatprep.mubr.bf16.mxu0 0
    %3478 = vmatmul.mubr.bf16.gmra.mxu0 %v3298
    %v3479 = vpop.f32.mrf.mxu0
    %v3480 = vadd.f32 %v3324, %v3479
    %v3481 = vpop.f32.mrf.mxu0
    %v3482 = vpop.f32.mrf.mxu0
    %v3483 = vadd.f32 %v3324, %v3482
    %v3484 = vpop.f32.mrf.mxu0
    %3485 = vmatprep.mubr.bf16.mxu0 0
    %3486 = vmatmul.mubr.bf16.gmra.mxu0 %v3299
    %v3487 = vpop.f32.mrf.mxu0
    %v3488 = vadd.f32 %v3324, %v3487
    %v3489 = vpop.f32.mrf.mxu0
    %v3490 = vpop.f32.mrf.mxu0
    %v3491 = vadd.f32 %v3324, %v3490
    %v3492 = vpop.f32.mrf.mxu0
    %3493 = vmatprep.mubr.bf16.mxu0 0
    %3494 = vmatmul.mubr.bf16.gmra.mxu0 %v3300
    %v3495 = vpop.f32.mrf.mxu0
    %v3496 = vadd.f32 %v3324, %v3495
    %v3497 = vpop.f32.mrf.mxu0
    %v3498 = vpop.f32.mrf.mxu0
    %v3499 = vadd.f32 %v3324, %v3498
    %v3500 = vpop.f32.mrf.mxu0
    %3501 = vmatprep.mubr.bf16.mxu0 0
    %3502 = vmatmul.mubr.bf16.gmra.mxu0 %v3301
    %v3503 = vpop.f32.mrf.mxu0
    %v3504 = vadd.f32 %v3324, %v3503
    %v3505 = vpop.f32.mrf.mxu0
    %v3506 = vpop.f32.mrf.mxu0
    %v3507 = vadd.f32 %v3324, %v3506
    %v3508 = vpop.f32.mrf.mxu0
    %3509 = vmatprep.mubr.bf16.mxu0 0
    %3510 = vmatmul.mubr.bf16.gmra.mxu0 %v3302
    %v3511 = vpop.f32.mrf.mxu0
    %v3512 = vadd.f32 %v3324, %v3511
    %v3513 = vpop.f32.mrf.mxu0
    %v3514 = vpop.f32.mrf.mxu0
    %v3515 = vadd.f32 %v3324, %v3514
    %v3516 = vpop.f32.mrf.mxu0
    %3517 = vmatprep.mubr.bf16.mxu0 0
    %3518 = vmatmul.mubr.bf16.gmra.mxu0 %v3303
    %v3519 = vpop.f32.mrf.mxu0
    %v3520 = vadd.f32 %v3324, %v3519
    %v3521 = vpop.f32.mrf.mxu0
    %v3522 = vpop.f32.mrf.mxu0
    %v3523 = vadd.f32 %v3324, %v3522
    %v3524 = vpop.f32.mrf.mxu0
    %3525 = vmatprep.mubr.bf16.mxu0 0
    %3526 = vmatmul.mubr.bf16.gmra.mxu0 %v3304
    %v3527 = vpop.f32.mrf.mxu0
    %v3528 = vadd.f32 %v3324, %v3527
    %v3529 = vpop.f32.mrf.mxu0
    %v3530 = vpop.f32.mrf.mxu0
    %v3531 = vadd.f32 %v3324, %v3530
    %v3532 = vpop.f32.mrf.mxu0
    %3533 = vdwg.mxu0
    %v3534 = vmax.f32 %v3408, 0.0
    %v3535 = vmax.f32 %v3411, 0.0
    %v3536 = vmax.f32 %v3416, 0.0
    %v3537 = vmax.f32 %v3419, 0.0
    %v3538 = vmax.f32 %v3424, 0.0
    %v3539 = vmax.f32 %v3427, 0.0
    %v3540 = vmax.f32 %v3432, 0.0
    %v3541 = vmax.f32 %v3435, 0.0
    %v3542 = vmax.f32 %v3440, 0.0
    %v3543 = vmax.f32 %v3443, 0.0
    %v3544 = vmax.f32 %v3448, 0.0
    %v3545 = vmax.f32 %v3451, 0.0
    %v3546 = vmax.f32 %v3456, 0.0
    %v3547 = vmax.f32 %v3459, 0.0
    %v3548 = vmax.f32 %v3464, 0.0
    %v3549 = vmax.f32 %v3467, 0.0
    %v3550 = vmax.f32 %v3472, 0.0
    %v3551 = vmax.f32 %v3475, 0.0
    %v3552 = vmax.f32 %v3480, 0.0
    %v3553 = vmax.f32 %v3483, 0.0
    %v3554 = vmax.f32 %v3488, 0.0
    %v3555 = vmax.f32 %v3491, 0.0
    %v3556 = vmax.f32 %v3496, 0.0
    %v3557 = vmax.f32 %v3499, 0.0
    %v3558 = vmax.f32 %v3504, 0.0
    %v3559 = vmax.f32 %v3507, 0.0
    %v3560 = vmax.f32 %v3512, 0.0
    %v3561 = vmax.f32 %v3515, 0.0
    %v3562 = vmax.f32 %v3520, 0.0
    %v3563 = vmax.f32 %v3523, 0.0
    %v3564 = vmax.f32 %v3528, 0.0
    %v3565 = vmax.f32 %v3531, 0.0
    %v3566 = vpack.c.bf16 %v3535, %v3534
    %v3567 = vpack.c.bf16 %v3537, %v3536
    %v3568 = vpack.c.bf16 %v3539, %v3538
    %v3569 = vpack.c.bf16 %v3541, %v3540
    %v3570 = vpack.c.bf16 %v3543, %v3542
    %v3571 = vpack.c.bf16 %v3545, %v3544
    %v3572 = vpack.c.bf16 %v3547, %v3546
    %v3573 = vpack.c.bf16 %v3549, %v3548
    %v3574 = vpack.c.bf16 %v3551, %v3550
    %v3575 = vpack.c.bf16 %v3553, %v3552
    %v3576 = vpack.c.bf16 %v3555, %v3554
    %v3577 = vpack.c.bf16 %v3557, %v3556
    %v3578 = vpack.c.bf16 %v3559, %v3558
    %v3579 = vpack.c.bf16 %v3561, %v3560
    %v3580 = vpack.c.bf16 %v3563, %v3562
    %v3581 = vpack.c.bf16 %v3565, %v3564
    %v3582 = vld [vmem:[#allocation10 + $0x180] sm:$0xf]
    %v3583 = vld [vmem:[#allocation10 + $0x188] sm:$0xf]
    %v3584 = vld [vmem:[#allocation10 + $0x190] sm:$0xf]
    %v3585 = vld [vmem:[#allocation10 + $0x198] sm:$0xf]
    %v3586 = vld [vmem:[#allocation10 + $0x1a0] sm:$0xf]
    %v3587 = vld [vmem:[#allocation10 + $0x1a8] sm:$0xf]
    %v3588 = vld [vmem:[#allocation10 + $0x1b0] sm:$0xf]
    %v3589 = vld [vmem:[#allocation10 + $0x1b8] sm:$0xf]
    %v3590 = vld [vmem:[#allocation10 + $0x1c0] sm:$0xf]
    %v3591 = vld [vmem:[#allocation10 + $0x1c8] sm:$0xf]
    %v3592 = vld [vmem:[#allocation10 + $0x1d0] sm:$0xf]
    %v3593 = vld [vmem:[#allocation10 + $0x1d8] sm:$0xf]
    %v3594 = vld [vmem:[#allocation10 + $0x1e0] sm:$0xf]
    %v3595 = vld [vmem:[#allocation10 + $0x1e8] sm:$0xf]
    %v3596 = vld [vmem:[#allocation10 + $0x1f0] sm:$0xf]
    %v3597 = vld [vmem:[#allocation10 + $0x1f8] sm:$0xf]
    %v3598 = vlaneseq
    %v3599 = vshrl.u32 %v3598, 7
    %v3600 = vsub.s32 1, %v3599
    %v3601 = vrot.slane %v220, %v3600
    %v3618 = vunpack.c.l.b16 %v3582
    %v3619 = vunpack.c.l.b16 %v3583
    %v3620 = vunpack.c.l.b16 %v3584
    %v3621 = vunpack.c.l.b16 %v3585
    %v3622 = vunpack.c.l.b16 %v3586
    %v3623 = vunpack.c.l.b16 %v3587
    %v3624 = vunpack.c.l.b16 %v3588
    %v3625 = vunpack.c.l.b16 %v3589
    %v3626 = vunpack.c.l.b16 %v3590
    %v3627 = vunpack.c.l.b16 %v3591
    %v3628 = vunpack.c.l.b16 %v3592
    %v3629 = vunpack.c.l.b16 %v3593
    %v3630 = vunpack.c.l.b16 %v3594
    %v3631 = vunpack.c.l.b16 %v3595
    %v3632 = vunpack.c.l.b16 %v3596
    %v3633 = vunpack.c.l.b16 %v3597
    %v3634 = vpack.c.b16 %v3619, %v3618
    %v3635 = vpack.c.b16 %v3621, %v3620
    %v3636 = vpack.c.b16 %v3623, %v3622
    %v3637 = vpack.c.b16 %v3625, %v3624
    %v3638 = vpack.c.b16 %v3627, %v3626
    %v3639 = vpack.c.b16 %v3629, %v3628
    %v3640 = vpack.c.b16 %v3631, %v3630
    %v3641 = vpack.c.b16 %v3633, %v3632
    %3650 = vmatprep.subr.bf16.mxu0 0
    %3651 = vmatpush1.bf16.msra.mxu0 %v3641
    %3652 = vmatprep.subr.bf16.mxu0 0
    %3653 = vmatpush1.bf16.msra.mxu0 %v3640
    %3654 = vmatprep.subr.bf16.mxu0 0
    %3655 = vmatpush1.bf16.msra.mxu0 %v3639
    %3656 = vmatprep.subr.bf16.mxu0 0
    %3657 = vmatpush1.bf16.msra.mxu0 %v3638
    %3658 = vmatprep.subr.bf16.mxu0 0
    %3659 = vmatpush1.bf16.msra.mxu0 %v3637
    %3660 = vmatprep.subr.bf16.mxu0 0
    %3661 = vmatpush1.bf16.msra.mxu0 %v3636
    %3662 = vmatprep.subr.bf16.mxu0 0
    %3663 = vmatpush1.bf16.msra.mxu0 %v3635
    %3664 = vmatprep.subr.bf16.mxu0 0
    %3665 = vmatpush1.bf16.msra.mxu0 %v3634
    %3666 = vmatprep.subr.bf16.mxu0 0
    %3667 = vmatpush2.bf16.msra.mxu0 0
    %3668 = vmatprep.subr.bf16.mxu0 0
    %3669 = vmatpush2.bf16.msra.mxu0 0
    %3670 = vmatprep.subr.bf16.mxu0 0
    %3671 = vmatpush2.bf16.msra.mxu0 0
    %3672 = vmatprep.subr.bf16.mxu0 0
    %3673 = vmatpush2.bf16.msra.mxu0 0
    %3674 = vmatprep.subr.bf16.mxu0 0
    %3675 = vmatpush2.bf16.msra.mxu0 0
    %3676 = vmatprep.subr.bf16.mxu0 0
    %3677 = vmatpush2.bf16.msra.mxu0 0
    %3678 = vmatprep.subr.bf16.mxu0 0
    %3679 = vmatpush2.bf16.msra.mxu0 0
    %3680 = vmatprep.subr.bf16.mxu0 0
    %3681 = vmatpush2.bf16.msra.mxu0 0
    %3682 = vmatprep.mubr.bf16.mxu0 0
    %3683 = vmatmul.mubr.bf16.gmra.mxu0 %v3566
    %v3684 = vpop.f32.mrf.mxu0
    %v3685 = vadd.f32 %v3601, %v3684
    %v3686 = vpop.f32.mrf.mxu0
    %v3687 = vpop.f32.mrf.mxu0
    %v3688 = vadd.f32 %v3601, %v3687
    %v3689 = vpop.f32.mrf.mxu0
    %3690 = vmatprep.mubr.bf16.mxu0 0
    %3691 = vmatmul.mubr.bf16.gmra.mxu0 %v3567
    %v3692 = vpop.f32.mrf.mxu0
    %v3693 = vadd.f32 %v3601, %v3692
    %v3694 = vpop.f32.mrf.mxu0
    %v3695 = vpop.f32.mrf.mxu0
    %v3696 = vadd.f32 %v3601, %v3695
    %v3697 = vpop.f32.mrf.mxu0
    %3698 = vmatprep.mubr.bf16.mxu0 0
    %3699 = vmatmul.mubr.bf16.gmra.mxu0 %v3568
    %v3700 = vpop.f32.mrf.mxu0
    %v3701 = vadd.f32 %v3601, %v3700
    %v3702 = vpop.f32.mrf.mxu0
    %v3703 = vpop.f32.mrf.mxu0
    %v3704 = vadd.f32 %v3601, %v3703
    %v3705 = vpop.f32.mrf.mxu0
    %3706 = vmatprep.mubr.bf16.mxu0 0
    %3707 = vmatmul.mubr.bf16.gmra.mxu0 %v3569
    %v3708 = vpop.f32.mrf.mxu0
    %v3709 = vadd.f32 %v3601, %v3708
    %v3710 = vpop.f32.mrf.mxu0
    %v3711 = vpop.f32.mrf.mxu0
    %v3712 = vadd.f32 %v3601, %v3711
    %v3713 = vpop.f32.mrf.mxu0
    %3714 = vmatprep.mubr.bf16.mxu0 0
    %3715 = vmatmul.mubr.bf16.gmra.mxu0 %v3570
    %v3716 = vpop.f32.mrf.mxu0
    %v3717 = vadd.f32 %v3601, %v3716
    %v3718 = vpop.f32.mrf.mxu0
    %v3719 = vpop.f32.mrf.mxu0
    %v3720 = vadd.f32 %v3601, %v3719
    %v3721 = vpop.f32.mrf.mxu0
    %3722 = vmatprep.mubr.bf16.mxu0 0
    %3723 = vmatmul.mubr.bf16.gmra.mxu0 %v3571
    %v3724 = vpop.f32.mrf.mxu0
    %v3725 = vadd.f32 %v3601, %v3724
    %v3726 = vpop.f32.mrf.mxu0
    %v3727 = vpop.f32.mrf.mxu0
    %v3728 = vadd.f32 %v3601, %v3727
    %v3729 = vpop.f32.mrf.mxu0
    %3730 = vmatprep.mubr.bf16.mxu0 0
    %3731 = vmatmul.mubr.bf16.gmra.mxu0 %v3572
    %v3732 = vpop.f32.mrf.mxu0
    %v3733 = vadd.f32 %v3601, %v3732
    %v3734 = vpop.f32.mrf.mxu0
    %v3735 = vpop.f32.mrf.mxu0
    %v3736 = vadd.f32 %v3601, %v3735
    %v3737 = vpop.f32.mrf.mxu0
    %3738 = vmatprep.mubr.bf16.mxu0 0
    %3739 = vmatmul.mubr.bf16.gmra.mxu0 %v3573
    %v3740 = vpop.f32.mrf.mxu0
    %v3741 = vadd.f32 %v3601, %v3740
    %v3742 = vpop.f32.mrf.mxu0
    %v3743 = vpop.f32.mrf.mxu0
    %v3744 = vadd.f32 %v3601, %v3743
    %v3745 = vpop.f32.mrf.mxu0
    %3746 = vmatprep.mubr.bf16.mxu0 0
    %3747 = vmatmul.mubr.bf16.gmra.mxu0 %v3574
    %v3748 = vpop.f32.mrf.mxu0
    %v3749 = vadd.f32 %v3601, %v3748
    %v3750 = vpop.f32.mrf.mxu0
    %v3751 = vpop.f32.mrf.mxu0
    %v3752 = vadd.f32 %v3601, %v3751
    %v3753 = vpop.f32.mrf.mxu0
    %3754 = vmatprep.mubr.bf16.mxu0 0
    %3755 = vmatmul.mubr.bf16.gmra.mxu0 %v3575
    %v3756 = vpop.f32.mrf.mxu0
    %v3757 = vadd.f32 %v3601, %v3756
    %v3758 = vpop.f32.mrf.mxu0
    %v3759 = vpop.f32.mrf.mxu0
    %v3760 = vadd.f32 %v3601, %v3759
    %v3761 = vpop.f32.mrf.mxu0
    %3762 = vmatprep.mubr.bf16.mxu0 0
    %3763 = vmatmul.mubr.bf16.gmra.mxu0 %v3576
    %v3764 = vpop.f32.mrf.mxu0
    %v3765 = vadd.f32 %v3601, %v3764
    %v3766 = vpop.f32.mrf.mxu0
    %v3767 = vpop.f32.mrf.mxu0
    %v3768 = vadd.f32 %v3601, %v3767
    %v3769 = vpop.f32.mrf.mxu0
    %3770 = vmatprep.mubr.bf16.mxu0 0
    %3771 = vmatmul.mubr.bf16.gmra.mxu0 %v3577
    %v3772 = vpop.f32.mrf.mxu0
    %v3773 = vadd.f32 %v3601, %v3772
    %v3774 = vpop.f32.mrf.mxu0
    %v3775 = vpop.f32.mrf.mxu0
    %v3776 = vadd.f32 %v3601, %v3775
    %v3777 = vpop.f32.mrf.mxu0
    %3778 = vmatprep.mubr.bf16.mxu0 0
    %3779 = vmatmul.mubr.bf16.gmra.mxu0 %v3578
    %v3780 = vpop.f32.mrf.mxu0
    %v3781 = vadd.f32 %v3601, %v3780
    %v3782 = vpop.f32.mrf.mxu0
    %v3783 = vpop.f32.mrf.mxu0
    %v3784 = vadd.f32 %v3601, %v3783
    %v3785 = vpop.f32.mrf.mxu0
    %3786 = vmatprep.mubr.bf16.mxu0 0
    %3787 = vmatmul.mubr.bf16.gmra.mxu0 %v3579
    %v3788 = vpop.f32.mrf.mxu0
    %v3789 = vadd.f32 %v3601, %v3788
    %v3790 = vpop.f32.mrf.mxu0
    %v3791 = vpop.f32.mrf.mxu0
    %v3792 = vadd.f32 %v3601, %v3791
    %v3793 = vpop.f32.mrf.mxu0
    %3794 = vmatprep.mubr.bf16.mxu0 0
    %3795 = vmatmul.mubr.bf16.gmra.mxu0 %v3580
    %v3796 = vpop.f32.mrf.mxu0
    %v3797 = vadd.f32 %v3601, %v3796
    %v3798 = vpop.f32.mrf.mxu0
    %v3799 = vpop.f32.mrf.mxu0
    %v3800 = vadd.f32 %v3601, %v3799
    %v3801 = vpop.f32.mrf.mxu0
    %3802 = vmatprep.mubr.bf16.mxu0 0
    %3803 = vmatmul.mubr.bf16.gmra.mxu0 %v3581
    %v3804 = vpop.f32.mrf.mxu0
    %v3805 = vadd.f32 %v3601, %v3804
    %v3806 = vpop.f32.mrf.mxu0
    %v3807 = vpop.f32.mrf.mxu0
    %v3808 = vadd.f32 %v3601, %v3807
    %v3809 = vpop.f32.mrf.mxu0
    %3810 = vdwg.mxu0
    %v3811 = vmax.f32 %v3685, 0.0
    %v3812 = vmax.f32 %v3688, 0.0
    %v3813 = vmax.f32 %v3693, 0.0
    %v3814 = vmax.f32 %v3696, 0.0
    %v3815 = vmax.f32 %v3701, 0.0
    %v3816 = vmax.f32 %v3704, 0.0
    %v3817 = vmax.f32 %v3709, 0.0
    %v3818 = vmax.f32 %v3712, 0.0
    %v3819 = vmax.f32 %v3717, 0.0
    %v3820 = vmax.f32 %v3720, 0.0
    %v3821 = vmax.f32 %v3725, 0.0
    %v3822 = vmax.f32 %v3728, 0.0
    %v3823 = vmax.f32 %v3733, 0.0
    %v3824 = vmax.f32 %v3736, 0.0
    %v3825 = vmax.f32 %v3741, 0.0
    %v3826 = vmax.f32 %v3744, 0.0
    %v3827 = vmax.f32 %v3749, 0.0
    %v3828 = vmax.f32 %v3752, 0.0
    %v3829 = vmax.f32 %v3757, 0.0
    %v3830 = vmax.f32 %v3760, 0.0
    %v3831 = vmax.f32 %v3765, 0.0
    %v3832 = vmax.f32 %v3768, 0.0
    %v3833 = vmax.f32 %v3773, 0.0
    %v3834 = vmax.f32 %v3776, 0.0
    %v3835 = vmax.f32 %v3781, 0.0
    %v3836 = vmax.f32 %v3784, 0.0
    %v3837 = vmax.f32 %v3789, 0.0
    %v3838 = vmax.f32 %v3792, 0.0
    %v3839 = vmax.f32 %v3797, 0.0
    %v3840 = vmax.f32 %v3800, 0.0
    %v3841 = vmax.f32 %v3805, 0.0
    %v3842 = vmax.f32 %v3808, 0.0
    %vm3843 = vcmp.ne.f32.partialorder %v3685, %v3685
    %vm3844 = vcmp.ne.f32.partialorder %v3688, %v3688
    %vm3845 = vcmp.ne.f32.partialorder %v3693, %v3693
    %vm3846 = vcmp.ne.f32.partialorder %v3696, %v3696
    %vm3847 = vcmp.ne.f32.partialorder %v3701, %v3701
    %vm3848 = vcmp.ne.f32.partialorder %v3704, %v3704
    %vm3849 = vcmp.ne.f32.partialorder %v3709, %v3709
    %vm3850 = vcmp.ne.f32.partialorder %v3712, %v3712
    %vm3851 = vcmp.ne.f32.partialorder %v3717, %v3717
    %vm3852 = vcmp.ne.f32.partialorder %v3720, %v3720
    %vm3853 = vcmp.ne.f32.partialorder %v3725, %v3725
    %vm3854 = vcmp.ne.f32.partialorder %v3728, %v3728
    %vm3855 = vcmp.ne.f32.partialorder %v3733, %v3733
    %vm3856 = vcmp.ne.f32.partialorder %v3736, %v3736
    %vm3857 = vcmp.ne.f32.partialorder %v3741, %v3741
    %vm3858 = vcmp.ne.f32.partialorder %v3744, %v3744
    %vm3859 = vcmp.ne.f32.partialorder %v3749, %v3749
    %vm3860 = vcmp.ne.f32.partialorder %v3752, %v3752
    %vm3861 = vcmp.ne.f32.partialorder %v3757, %v3757
    %vm3862 = vcmp.ne.f32.partialorder %v3760, %v3760
    %vm3863 = vcmp.ne.f32.partialorder %v3765, %v3765
    %vm3864 = vcmp.ne.f32.partialorder %v3768, %v3768
    %vm3865 = vcmp.ne.f32.partialorder %v3773, %v3773
    %vm3866 = vcmp.ne.f32.partialorder %v3776, %v3776
    %vm3867 = vcmp.ne.f32.partialorder %v3781, %v3781
    %vm3868 = vcmp.ne.f32.partialorder %v3784, %v3784
    %vm3869 = vcmp.ne.f32.partialorder %v3789, %v3789
    %vm3870 = vcmp.ne.f32.partialorder %v3792, %v3792
    %vm3871 = vcmp.ne.f32.partialorder %v3797, %v3797
    %vm3872 = vcmp.ne.f32.partialorder %v3800, %v3800
    %vm3873 = vcmp.ne.f32.partialorder %v3805, %v3805
    %vm3874 = vcmp.ne.f32.partialorder %v3808, %v3808
    %v3875 = vadd.f32 %v3685, 0.0
    %v3876 = vadd.f32 %v3688, 0.0
    %v3877 = vadd.f32 %v3693, 0.0
    %v3878 = vadd.f32 %v3696, 0.0
    %v3879 = vadd.f32 %v3701, 0.0
    %v3880 = vadd.f32 %v3704, 0.0
    %v3881 = vadd.f32 %v3709, 0.0
    %v3882 = vadd.f32 %v3712, 0.0
    %v3883 = vadd.f32 %v3717, 0.0
    %v3884 = vadd.f32 %v3720, 0.0
    %v3885 = vadd.f32 %v3725, 0.0
    %v3886 = vadd.f32 %v3728, 0.0
    %v3887 = vadd.f32 %v3733, 0.0
    %v3888 = vadd.f32 %v3736, 0.0
    %v3889 = vadd.f32 %v3741, 0.0
    %v3890 = vadd.f32 %v3744, 0.0
    %v3891 = vadd.f32 %v3749, 0.0
    %v3892 = vadd.f32 %v3752, 0.0
    %v3893 = vadd.f32 %v3757, 0.0
    %v3894 = vadd.f32 %v3760, 0.0
    %v3895 = vadd.f32 %v3765, 0.0
    %v3896 = vadd.f32 %v3768, 0.0
    %v3897 = vadd.f32 %v3773, 0.0
    %v3898 = vadd.f32 %v3776, 0.0
    %v3899 = vadd.f32 %v3781, 0.0
    %v3900 = vadd.f32 %v3784, 0.0
    %v3901 = vadd.f32 %v3789, 0.0
    %v3902 = vadd.f32 %v3792, 0.0
    %v3903 = vadd.f32 %v3797, 0.0
    %v3904 = vadd.f32 %v3800, 0.0
    %v3905 = vadd.f32 %v3805, 0.0
    %v3906 = vadd.f32 %v3808, 0.0
    %v3907 = vand.u32 2147483647, %v3685
    %v3908 = vand.u32 2147483647, %v3688
    %v3909 = vand.u32 2147483647, %v3693
    %v3910 = vand.u32 2147483647, %v3696
    %v3911 = vand.u32 2147483647, %v3701
    %v3912 = vand.u32 2147483647, %v3704
    %v3913 = vand.u32 2147483647, %v3709
    %v3914 = vand.u32 2147483647, %v3712
    %v3915 = vand.u32 2147483647, %v3717
    %v3916 = vand.u32 2147483647, %v3720
    %v3917 = vand.u32 2147483647, %v3725
    %v3918 = vand.u32 2147483647, %v3728
    %v3919 = vand.u32 2147483647, %v3733
    %v3920 = vand.u32 2147483647, %v3736
    %v3921 = vand.u32 2147483647, %v3741
    %v3922 = vand.u32 2147483647, %v3744
    %v3923 = vand.u32 2147483647, %v3749
    %v3924 = vand.u32 2147483647, %v3752
    %v3925 = vand.u32 2147483647, %v3757
    %v3926 = vand.u32 2147483647, %v3760
    %v3927 = vand.u32 2147483647, %v3765
    %v3928 = vand.u32 2147483647, %v3768
    %v3929 = vand.u32 2147483647, %v3773
    %v3930 = vand.u32 2147483647, %v3776
    %v3931 = vand.u32 2147483647, %v3781
    %v3932 = vand.u32 2147483647, %v3784
    %v3933 = vand.u32 2147483647, %v3789
    %v3934 = vand.u32 2147483647, %v3792
    %v3935 = vand.u32 2147483647, %v3797
    %v3936 = vand.u32 2147483647, %v3800
    %v3937 = vand.u32 2147483647, %v3805
    %v3938 = vand.u32 2147483647, %v3808
    %v3939 = vsub.f32 0.0, %v3907
    %v3940 = vsub.f32 0.0, %v3908
    %v3941 = vsub.f32 0.0, %v3909
    %v3942 = vsub.f32 0.0, %v3910
    %v3943 = vsub.f32 0.0, %v3911
    %v3944 = vsub.f32 0.0, %v3912
    %v3945 = vsub.f32 0.0, %v3913
    %v3946 = vsub.f32 0.0, %v3914
    %v3947 = vsub.f32 0.0, %v3915
    %v3948 = vsub.f32 0.0, %v3916
    %v3949 = vsub.f32 0.0, %v3917
    %v3950 = vsub.f32 0.0, %v3918
    %v3951 = vsub.f32 0.0, %v3919
    %v3952 = vsub.f32 0.0, %v3920
    %v3953 = vsub.f32 0.0, %v3921
    %v3954 = vsub.f32 0.0, %v3922
    %v3955 = vsub.f32 0.0, %v3923
    %v3956 = vsub.f32 0.0, %v3924
    %v3957 = vsub.f32 0.0, %v3925
    %v3958 = vsub.f32 0.0, %v3926
    %v3959 = vsub.f32 0.0, %v3927
    %v3960 = vsub.f32 0.0, %v3928
    %v3961 = vsub.f32 0.0, %v3929
    %v3962 = vsub.f32 0.0, %v3930
    %v3963 = vsub.f32 0.0, %v3931
    %v3964 = vsub.f32 0.0, %v3932
    %v3965 = vsub.f32 0.0, %v3933
    %v3966 = vsub.f32 0.0, %v3934
    %v3967 = vsub.f32 0.0, %v3935
    %v3968 = vsub.f32 0.0, %v3936
    %v3969 = vsub.f32 0.0, %v3937
    %v3970 = vsub.f32 0.0, %v3938
    %v3971 = vmul.f32 %v3939, 1.442695
    %v3972 = vpow.pop %v3971
    %v3973 = vmul.f32 %v3940, 1.442695
    %v3974 = vpow.pop %v3973
    %v3975 = vmul.f32 %v3941, 1.442695
    %v3976 = vpow.pop %v3975
    %v3977 = vmul.f32 %v3942, 1.442695
    %v3978 = vpow.pop %v3977
    %v3979 = vmul.f32 %v3943, 1.442695
    %v3980 = vpow.pop %v3979
    %v3981 = vmul.f32 %v3944, 1.442695
    %v3982 = vpow.pop %v3981
    %v3983 = vmul.f32 %v3945, 1.442695
    %v3984 = vpow.pop %v3983
    %v3985 = vmul.f32 %v3946, 1.442695
    %v3986 = vpow.pop %v3985
    %v3987 = vmul.f32 %v3947, 1.442695
    %v3988 = vpow.pop %v3987
    %v3989 = vmul.f32 %v3948, 1.442695
    %v3990 = vpow.pop %v3989
    %v3991 = vmul.f32 %v3949, 1.442695
    %v3992 = vpow.pop %v3991
    %v3993 = vmul.f32 %v3950, 1.442695
    %v3994 = vpow.pop %v3993
    %v3995 = vmul.f32 %v3951, 1.442695
    %v3996 = vpow.pop %v3995
    %v3997 = vmul.f32 %v3952, 1.442695
    %v3998 = vpow.pop %v3997
    %v3999 = vmul.f32 %v3953, 1.442695
    %v4000 = vpow.pop %v3999
    %v4001 = vmul.f32 %v3954, 1.442695
    %v4002 = vpow.pop %v4001
    %v4003 = vmul.f32 %v3955, 1.442695
    %v4004 = vpow.pop %v4003
    %v4005 = vmul.f32 %v3956, 1.442695
    %v4006 = vpow.pop %v4005
    %v4007 = vmul.f32 %v3957, 1.442695
    %v4008 = vpow.pop %v4007
    %v4009 = vmul.f32 %v3958, 1.442695
    %v4010 = vpow.pop %v4009
    %v4011 = vmul.f32 %v3959, 1.442695
    %v4012 = vpow.pop %v4011
    %v4013 = vmul.f32 %v3960, 1.442695
    %v4014 = vpow.pop %v4013
    %v4015 = vmul.f32 %v3961, 1.442695
    %v4016 = vpow.pop %v4015
    %v4017 = vmul.f32 %v3962, 1.442695
    %v4018 = vpow.pop %v4017
    %v4019 = vmul.f32 %v3963, 1.442695
    %v4020 = vpow.pop %v4019
    %v4021 = vmul.f32 %v3964, 1.442695
    %v4022 = vpow.pop %v4021
    %v4023 = vmul.f32 %v3965, 1.442695
    %v4024 = vpow.pop %v4023
    %v4025 = vmul.f32 %v3966, 1.442695
    %v4026 = vpow.pop %v4025
    %v4027 = vmul.f32 %v3967, 1.442695
    %v4028 = vpow.pop %v4027
    %v4029 = vmul.f32 %v3968, 1.442695
    %v4030 = vpow.pop %v4029
    %v4031 = vmul.f32 %v3969, 1.442695
    %v4032 = vpow.pop %v4031
    %v4033 = vmul.f32 %v3970, 1.442695
    %v4034 = vpow.pop %v4033
    %v4035 = vadd.f32 %v3972, 1.0
    %v4036 = vlog2.pop %v4035
    %v4037 = vmul.f32 %v4036, 0.6931472
    %v4038 = vmul.f32 -0.5, %v3972
    %v4039 = vadd.f32 %v4038, 1.0
    %v4040 = vmul.f32 %v4039, %v3972
    %v4041 = vand.u32 2147483647, %v3972
    %vm4042 = vcmp.lt.f32.partialorder %v4041, 0.0004427343
    %v4043 = vsel %vm4042, %v4040, %v4037
    %v4044 = vadd.f32 %v3974, 1.0
    %v4045 = vlog2.pop %v4044
    %v4046 = vmul.f32 %v4045, 0.6931472
    %v4047 = vmul.f32 -0.5, %v3974
    %v4048 = vadd.f32 %v4047, 1.0
    %v4049 = vmul.f32 %v4048, %v3974
    %v4050 = vand.u32 2147483647, %v3974
    %vm4051 = vcmp.lt.f32.partialorder %v4050, 0.0004427343
    %v4052 = vsel %vm4051, %v4049, %v4046
    %v4053 = vadd.f32 %v3976, 1.0
    %v4054 = vlog2.pop %v4053
    %v4055 = vmul.f32 %v4054, 0.6931472
    %v4056 = vmul.f32 -0.5, %v3976
    %v4057 = vadd.f32 %v4056, 1.0
    %v4058 = vmul.f32 %v4057, %v3976
    %v4059 = vand.u32 2147483647, %v3976
    %vm4060 = vcmp.lt.f32.partialorder %v4059, 0.0004427343
    %v4061 = vsel %vm4060, %v4058, %v4055
    %v4062 = vadd.f32 %v3978, 1.0
    %v4063 = vlog2.pop %v4062
    %v4064 = vmul.f32 %v4063, 0.6931472
    %v4065 = vmul.f32 -0.5, %v3978
    %v4066 = vadd.f32 %v4065, 1.0
    %v4067 = vmul.f32 %v4066, %v3978
    %v4068 = vand.u32 2147483647, %v3978
    %vm4069 = vcmp.lt.f32.partialorder %v4068, 0.0004427343
    %v4070 = vsel %vm4069, %v4067, %v4064
    %v4071 = vadd.f32 %v3980, 1.0
    %v4072 = vlog2.pop %v4071
    %v4073 = vmul.f32 %v4072, 0.6931472
    %v4074 = vmul.f32 -0.5, %v3980
    %v4075 = vadd.f32 %v4074, 1.0
    %v4076 = vmul.f32 %v4075, %v3980
    %v4077 = vand.u32 2147483647, %v3980
    %vm4078 = vcmp.lt.f32.partialorder %v4077, 0.0004427343
    %v4079 = vsel %vm4078, %v4076, %v4073
    %v4080 = vadd.f32 %v3982, 1.0
    %v4081 = vlog2.pop %v4080
    %v4082 = vmul.f32 %v4081, 0.6931472
    %v4083 = vmul.f32 -0.5, %v3982
    %v4084 = vadd.f32 %v4083, 1.0
    %v4085 = vmul.f32 %v4084, %v3982
    %v4086 = vand.u32 2147483647, %v3982
    %vm4087 = vcmp.lt.f32.partialorder %v4086, 0.0004427343
    %v4088 = vsel %vm4087, %v4085, %v4082
    %v4089 = vadd.f32 %v3984, 1.0
    %v4090 = vlog2.pop %v4089
    %v4091 = vmul.f32 %v4090, 0.6931472
    %v4092 = vmul.f32 -0.5, %v3984
    %v4093 = vadd.f32 %v4092, 1.0
    %v4094 = vmul.f32 %v4093, %v3984
    %v4095 = vand.u32 2147483647, %v3984
    %vm4096 = vcmp.lt.f32.partialorder %v4095, 0.0004427343
    %v4097 = vsel %vm4096, %v4094, %v4091
    %v4098 = vadd.f32 %v3986, 1.0
    %v4099 = vlog2.pop %v4098
    %v4100 = vmul.f32 %v4099, 0.6931472
    %v4101 = vmul.f32 -0.5, %v3986
    %v4102 = vadd.f32 %v4101, 1.0
    %v4103 = vmul.f32 %v4102, %v3986
    %v4104 = vand.u32 2147483647, %v3986
    %vm4105 = vcmp.lt.f32.partialorder %v4104, 0.0004427343
    %v4106 = vsel %vm4105, %v4103, %v4100
    %v4107 = vadd.f32 %v3988, 1.0
    %v4108 = vlog2.pop %v4107
    %v4109 = vmul.f32 %v4108, 0.6931472
    %v4110 = vmul.f32 -0.5, %v3988
    %v4111 = vadd.f32 %v4110, 1.0
    %v4112 = vmul.f32 %v4111, %v3988
    %v4113 = vand.u32 2147483647, %v3988
    %vm4114 = vcmp.lt.f32.partialorder %v4113, 0.0004427343
    %v4115 = vsel %vm4114, %v4112, %v4109
    %v4116 = vadd.f32 %v3990, 1.0
    %v4117 = vlog2.pop %v4116
    %v4118 = vmul.f32 %v4117, 0.6931472
    %v4119 = vmul.f32 -0.5, %v3990
    %v4120 = vadd.f32 %v4119, 1.0
    %v4121 = vmul.f32 %v4120, %v3990
    %v4122 = vand.u32 2147483647, %v3990
    %vm4123 = vcmp.lt.f32.partialorder %v4122, 0.0004427343
    %v4124 = vsel %vm4123, %v4121, %v4118
    %v4125 = vadd.f32 %v3992, 1.0
    %v4126 = vlog2.pop %v4125
    %v4127 = vmul.f32 %v4126, 0.6931472
    %v4128 = vmul.f32 -0.5, %v3992
    %v4129 = vadd.f32 %v4128, 1.0
    %v4130 = vmul.f32 %v4129, %v3992
    %v4131 = vand.u32 2147483647, %v3992
    %vm4132 = vcmp.lt.f32.partialorder %v4131, 0.0004427343
    %v4133 = vsel %vm4132, %v4130, %v4127
    %v4134 = vadd.f32 %v3994, 1.0
    %v4135 = vlog2.pop %v4134
    %v4136 = vmul.f32 %v4135, 0.6931472
    %v4137 = vmul.f32 -0.5, %v3994
    %v4138 = vadd.f32 %v4137, 1.0
    %v4139 = vmul.f32 %v4138, %v3994
    %v4140 = vand.u32 2147483647, %v3994
    %vm4141 = vcmp.lt.f32.partialorder %v4140, 0.0004427343
    %v4142 = vsel %vm4141, %v4139, %v4136
    %v4143 = vadd.f32 %v3996, 1.0
    %v4144 = vlog2.pop %v4143
    %v4145 = vmul.f32 %v4144, 0.6931472
    %v4146 = vmul.f32 -0.5, %v3996
    %v4147 = vadd.f32 %v4146, 1.0
    %v4148 = vmul.f32 %v4147, %v3996
    %v4149 = vand.u32 2147483647, %v3996
    %vm4150 = vcmp.lt.f32.partialorder %v4149, 0.0004427343
    %v4151 = vsel %vm4150, %v4148, %v4145
    %v4152 = vadd.f32 %v3998, 1.0
    %v4153 = vlog2.pop %v4152
    %v4154 = vmul.f32 %v4153, 0.6931472
    %v4155 = vmul.f32 -0.5, %v3998
    %v4156 = vadd.f32 %v4155, 1.0
    %v4157 = vmul.f32 %v4156, %v3998
    %v4158 = vand.u32 2147483647, %v3998
    %vm4159 = vcmp.lt.f32.partialorder %v4158, 0.0004427343
    %v4160 = vsel %vm4159, %v4157, %v4154
    %v4161 = vadd.f32 %v4000, 1.0
    %v4162 = vlog2.pop %v4161
    %v4163 = vmul.f32 %v4162, 0.6931472
    %v4164 = vmul.f32 -0.5, %v4000
    %v4165 = vadd.f32 %v4164, 1.0
    %v4166 = vmul.f32 %v4165, %v4000
    %v4167 = vand.u32 2147483647, %v4000
    %vm4168 = vcmp.lt.f32.partialorder %v4167, 0.0004427343
    %v4169 = vsel %vm4168, %v4166, %v4163
    %v4170 = vadd.f32 %v4002, 1.0
    %v4171 = vlog2.pop %v4170
    %v4172 = vmul.f32 %v4171, 0.6931472
    %v4173 = vmul.f32 -0.5, %v4002
    %v4174 = vadd.f32 %v4173, 1.0
    %v4175 = vmul.f32 %v4174, %v4002
    %v4176 = vand.u32 2147483647, %v4002
    %vm4177 = vcmp.lt.f32.partialorder %v4176, 0.0004427343
    %v4178 = vsel %vm4177, %v4175, %v4172
    %v4179 = vadd.f32 %v4004, 1.0
    %v4180 = vlog2.pop %v4179
    %v4181 = vmul.f32 %v4180, 0.6931472
    %v4182 = vmul.f32 -0.5, %v4004
    %v4183 = vadd.f32 %v4182, 1.0
    %v4184 = vmul.f32 %v4183, %v4004
    %v4185 = vand.u32 2147483647, %v4004
    %vm4186 = vcmp.lt.f32.partialorder %v4185, 0.0004427343
    %v4187 = vsel %vm4186, %v4184, %v4181
    %v4188 = vadd.f32 %v4006, 1.0
    %v4189 = vlog2.pop %v4188
    %v4190 = vmul.f32 %v4189, 0.6931472
    %v4191 = vmul.f32 -0.5, %v4006
    %v4192 = vadd.f32 %v4191, 1.0
    %v4193 = vmul.f32 %v4192, %v4006
    %v4194 = vand.u32 2147483647, %v4006
    %vm4195 = vcmp.lt.f32.partialorder %v4194, 0.0004427343
    %v4196 = vsel %vm4195, %v4193, %v4190
    %v4197 = vadd.f32 %v4008, 1.0
    %v4198 = vlog2.pop %v4197
    %v4199 = vmul.f32 %v4198, 0.6931472
    %v4200 = vmul.f32 -0.5, %v4008
    %v4201 = vadd.f32 %v4200, 1.0
    %v4202 = vmul.f32 %v4201, %v4008
    %v4203 = vand.u32 2147483647, %v4008
    %vm4204 = vcmp.lt.f32.partialorder %v4203, 0.0004427343
    %v4205 = vsel %vm4204, %v4202, %v4199
    %v4206 = vadd.f32 %v4010, 1.0
    %v4207 = vlog2.pop %v4206
    %v4208 = vmul.f32 %v4207, 0.6931472
    %v4209 = vmul.f32 -0.5, %v4010
    %v4210 = vadd.f32 %v4209, 1.0
    %v4211 = vmul.f32 %v4210, %v4010
    %v4212 = vand.u32 2147483647, %v4010
    %vm4213 = vcmp.lt.f32.partialorder %v4212, 0.0004427343
    %v4214 = vsel %vm4213, %v4211, %v4208
    %v4215 = vadd.f32 %v4012, 1.0
    %v4216 = vlog2.pop %v4215
    %v4217 = vmul.f32 %v4216, 0.6931472
    %v4218 = vmul.f32 -0.5, %v4012
    %v4219 = vadd.f32 %v4218, 1.0
    %v4220 = vmul.f32 %v4219, %v4012
    %v4221 = vand.u32 2147483647, %v4012
    %vm4222 = vcmp.lt.f32.partialorder %v4221, 0.0004427343
    %v4223 = vsel %vm4222, %v4220, %v4217
    %v4224 = vadd.f32 %v4014, 1.0
    %v4225 = vlog2.pop %v4224
    %v4226 = vmul.f32 %v4225, 0.6931472
    %v4227 = vmul.f32 -0.5, %v4014
    %v4228 = vadd.f32 %v4227, 1.0
    %v4229 = vmul.f32 %v4228, %v4014
    %v4230 = vand.u32 2147483647, %v4014
    %vm4231 = vcmp.lt.f32.partialorder %v4230, 0.0004427343
    %v4232 = vsel %vm4231, %v4229, %v4226
    %v4233 = vadd.f32 %v4016, 1.0
    %v4234 = vlog2.pop %v4233
    %v4235 = vmul.f32 %v4234, 0.6931472
    %v4236 = vmul.f32 -0.5, %v4016
    %v4237 = vadd.f32 %v4236, 1.0
    %v4238 = vmul.f32 %v4237, %v4016
    %v4239 = vand.u32 2147483647, %v4016
    %vm4240 = vcmp.lt.f32.partialorder %v4239, 0.0004427343
    %v4241 = vsel %vm4240, %v4238, %v4235
    %v4242 = vadd.f32 %v4018, 1.0
    %v4243 = vlog2.pop %v4242
    %v4244 = vmul.f32 %v4243, 0.6931472
    %v4245 = vmul.f32 -0.5, %v4018
    %v4246 = vadd.f32 %v4245, 1.0
    %v4247 = vmul.f32 %v4246, %v4018
    %v4248 = vand.u32 2147483647, %v4018
    %vm4249 = vcmp.lt.f32.partialorder %v4248, 0.0004427343
    %v4250 = vsel %vm4249, %v4247, %v4244
    %v4251 = vadd.f32 %v4020, 1.0
    %v4252 = vlog2.pop %v4251
    %v4253 = vmul.f32 %v4252, 0.6931472
    %v4254 = vmul.f32 -0.5, %v4020
    %v4255 = vadd.f32 %v4254, 1.0
    %v4256 = vmul.f32 %v4255, %v4020
    %v4257 = vand.u32 2147483647, %v4020
    %vm4258 = vcmp.lt.f32.partialorder %v4257, 0.0004427343
    %v4259 = vsel %vm4258, %v4256, %v4253
    %v4260 = vadd.f32 %v4022, 1.0
    %v4261 = vlog2.pop %v4260
    %v4262 = vmul.f32 %v4261, 0.6931472
    %v4263 = vmul.f32 -0.5, %v4022
    %v4264 = vadd.f32 %v4263, 1.0
    %v4265 = vmul.f32 %v4264, %v4022
    %v4266 = vand.u32 2147483647, %v4022
    %vm4267 = vcmp.lt.f32.partialorder %v4266, 0.0004427343
    %v4268 = vsel %vm4267, %v4265, %v4262
    %v4269 = vadd.f32 %v4024, 1.0
    %v4270 = vlog2.pop %v4269
    %v4271 = vmul.f32 %v4270, 0.6931472
    %v4272 = vmul.f32 -0.5, %v4024
    %v4273 = vadd.f32 %v4272, 1.0
    %v4274 = vmul.f32 %v4273, %v4024
    %v4275 = vand.u32 2147483647, %v4024
    %vm4276 = vcmp.lt.f32.partialorder %v4275, 0.0004427343
    %v4277 = vsel %vm4276, %v4274, %v4271
    %v4278 = vadd.f32 %v4026, 1.0
    %v4279 = vlog2.pop %v4278
    %v4280 = vmul.f32 %v4279, 0.6931472
    %v4281 = vmul.f32 -0.5, %v4026
    %v4282 = vadd.f32 %v4281, 1.0
    %v4283 = vmul.f32 %v4282, %v4026
    %v4284 = vand.u32 2147483647, %v4026
    %vm4285 = vcmp.lt.f32.partialorder %v4284, 0.0004427343
    %v4286 = vsel %vm4285, %v4283, %v4280
    %v4287 = vadd.f32 %v4028, 1.0
    %v4288 = vlog2.pop %v4287
    %v4289 = vmul.f32 %v4288, 0.6931472
    %v4290 = vmul.f32 -0.5, %v4028
    %v4291 = vadd.f32 %v4290, 1.0
    %v4292 = vmul.f32 %v4291, %v4028
    %v4293 = vand.u32 2147483647, %v4028
    %vm4294 = vcmp.lt.f32.partialorder %v4293, 0.0004427343
    %v4295 = vsel %vm4294, %v4292, %v4289
    %v4296 = vadd.f32 %v4030, 1.0
    %v4297 = vlog2.pop %v4296
    %v4298 = vmul.f32 %v4297, 0.6931472
    %v4299 = vmul.f32 -0.5, %v4030
    %v4300 = vadd.f32 %v4299, 1.0
    %v4301 = vmul.f32 %v4300, %v4030
    %v4302 = vand.u32 2147483647, %v4030
    %vm4303 = vcmp.lt.f32.partialorder %v4302, 0.0004427343
    %v4304 = vsel %vm4303, %v4301, %v4298
    %v4305 = vadd.f32 %v4032, 1.0
    %v4306 = vlog2.pop %v4305
    %v4307 = vmul.f32 %v4306, 0.6931472
    %v4308 = vmul.f32 -0.5, %v4032
    %v4309 = vadd.f32 %v4308, 1.0
    %v4310 = vmul.f32 %v4309, %v4032
    %v4311 = vand.u32 2147483647, %v4032
    %vm4312 = vcmp.lt.f32.partialorder %v4311, 0.0004427343
    %v4313 = vsel %vm4312, %v4310, %v4307
    %v4314 = vadd.f32 %v4034, 1.0
    %v4315 = vlog2.pop %v4314
    %v4316 = vmul.f32 %v4315, 0.6931472
    %v4317 = vmul.f32 -0.5, %v4034
    %v4318 = vadd.f32 %v4317, 1.0
    %v4319 = vmul.f32 %v4318, %v4034
    %v4320 = vand.u32 2147483647, %v4034
    %vm4321 = vcmp.lt.f32.partialorder %v4320, 0.0004427343
    %v4322 = vsel %vm4321, %v4319, %v4316
    %v4323 = vadd.f32 %v3811, %v4043
    %v4324 = vadd.f32 %v3812, %v4052
    %v4325 = vadd.f32 %v3813, %v4061
    %v4326 = vadd.f32 %v3814, %v4070
    %v4327 = vadd.f32 %v3815, %v4079
    %v4328 = vadd.f32 %v3816, %v4088
    %v4329 = vadd.f32 %v3817, %v4097
    %v4330 = vadd.f32 %v3818, %v4106
    %v4331 = vadd.f32 %v3819, %v4115
    %v4332 = vadd.f32 %v3820, %v4124
    %v4333 = vadd.f32 %v3821, %v4133
    %v4334 = vadd.f32 %v3822, %v4142
    %v4335 = vadd.f32 %v3823, %v4151
    %v4336 = vadd.f32 %v3824, %v4160
    %v4337 = vadd.f32 %v3825, %v4169
    %v4338 = vadd.f32 %v3826, %v4178
    %v4339 = vadd.f32 %v3827, %v4187
    %v4340 = vadd.f32 %v3828, %v4196
    %v4341 = vadd.f32 %v3829, %v4205
    %v4342 = vadd.f32 %v3830, %v4214
    %v4343 = vadd.f32 %v3831, %v4223
    %v4344 = vadd.f32 %v3832, %v4232
    %v4345 = vadd.f32 %v3833, %v4241
    %v4346 = vadd.f32 %v3834, %v4250
    %v4347 = vadd.f32 %v3835, %v4259
    %v4348 = vadd.f32 %v3836, %v4268
    %v4349 = vadd.f32 %v3837, %v4277
    %v4350 = vadd.f32 %v3838, %v4286
    %v4351 = vadd.f32 %v3839, %v4295
    %v4352 = vadd.f32 %v3840, %v4304
    %v4353 = vadd.f32 %v3841, %v4313
    %v4354 = vadd.f32 %v3842, %v4322
    %v4355 = vsel %vm3843, %v3875, %v4323
    %v4356 = vsel %vm3844, %v3876, %v4324
    %v4357 = vsel %vm3845, %v3877, %v4325
    %v4358 = vsel %vm3846, %v3878, %v4326
    %v4359 = vsel %vm3847, %v3879, %v4327
    %v4360 = vsel %vm3848, %v3880, %v4328
    %v4361 = vsel %vm3849, %v3881, %v4329
    %v4362 = vsel %vm3850, %v3882, %v4330
    %v4363 = vsel %vm3851, %v3883, %v4331
    %v4364 = vsel %vm3852, %v3884, %v4332
    %v4365 = vsel %vm3853, %v3885, %v4333
    %v4366 = vsel %vm3854, %v3886, %v4334
    %v4367 = vsel %vm3855, %v3887, %v4335
    %v4368 = vsel %vm3856, %v3888, %v4336
    %v4369 = vsel %vm3857, %v3889, %v4337
    %v4370 = vsel %vm3858, %v3890, %v4338
    %v4371 = vsel %vm3859, %v3891, %v4339
    %v4372 = vsel %vm3860, %v3892, %v4340
    %v4373 = vsel %vm3861, %v3893, %v4341
    %v4374 = vsel %vm3862, %v3894, %v4342
    %v4375 = vsel %vm3863, %v3895, %v4343
    %v4376 = vsel %vm3864, %v3896, %v4344
    %v4377 = vsel %vm3865, %v3897, %v4345
    %v4378 = vsel %vm3866, %v3898, %v4346
    %v4379 = vsel %vm3867, %v3899, %v4347
    %v4380 = vsel %vm3868, %v3900, %v4348
    %v4381 = vsel %vm3869, %v3901, %v4349
    %v4382 = vsel %vm3870, %v3902, %v4350
    %v4383 = vsel %vm3871, %v3903, %v4351
    %v4384 = vsel %vm3872, %v3904, %v4352
    %v4385 = vsel %vm3873, %v3905, %v4353
    %v4386 = vsel %vm3874, %v3906, %v4354
    %v4387 = vadd.f32 %v4355, 1e-20
    %v4388 = vadd.f32 %v4356, 1e-20
    %v4389 = vadd.f32 %v4357, 1e-20
    %v4390 = vadd.f32 %v4358, 1e-20
    %v4391 = vadd.f32 %v4359, 1e-20
    %v4392 = vadd.f32 %v4360, 1e-20
    %v4393 = vadd.f32 %v4361, 1e-20
    %v4394 = vadd.f32 %v4362, 1e-20
    %v4395 = vadd.f32 %v4363, 1e-20
    %v4396 = vadd.f32 %v4364, 1e-20
    %v4397 = vadd.f32 %v4365, 1e-20
    %v4398 = vadd.f32 %v4366, 1e-20
    %v4399 = vadd.f32 %v4367, 1e-20
    %v4400 = vadd.f32 %v4368, 1e-20
    %v4401 = vadd.f32 %v4369, 1e-20
    %v4402 = vadd.f32 %v4370, 1e-20
    %v4403 = vadd.f32 %v4371, 1e-20
    %v4404 = vadd.f32 %v4372, 1e-20
    %v4405 = vadd.f32 %v4373, 1e-20
    %v4406 = vadd.f32 %v4374, 1e-20
    %v4407 = vadd.f32 %v4375, 1e-20
    %v4408 = vadd.f32 %v4376, 1e-20
    %v4409 = vadd.f32 %v4377, 1e-20
    %v4410 = vadd.f32 %v4378, 1e-20
    %v4411 = vadd.f32 %v4379, 1e-20
    %v4412 = vadd.f32 %v4380, 1e-20
    %v4413 = vadd.f32 %v4381, 1e-20
    %v4414 = vadd.f32 %v4382, 1e-20
    %v4415 = vadd.f32 %v4383, 1e-20
    %v4416 = vadd.f32 %v4384, 1e-20
    %v4417 = vadd.f32 %v4385, 1e-20
    %v4418 = vadd.f32 %v4386, 1e-20
    %v4419 = vpack.c.bf16 %v4388, %v4387
    %v4420 = vpack.c.bf16 %v4390, %v4389
    %v4421 = vpack.c.bf16 %v4392, %v4391
    %v4422 = vpack.c.bf16 %v4394, %v4393
    %v4423 = vpack.c.bf16 %v4396, %v4395
    %v4424 = vpack.c.bf16 %v4398, %v4397
    %v4425 = vpack.c.bf16 %v4400, %v4399
    %v4426 = vpack.c.bf16 %v4402, %v4401
    %v4427 = vpack.c.bf16 %v4404, %v4403
    %v4428 = vpack.c.bf16 %v4406, %v4405
    %v4429 = vpack.c.bf16 %v4408, %v4407
    %v4430 = vpack.c.bf16 %v4410, %v4409
    %v4431 = vpack.c.bf16 %v4412, %v4411
    %v4432 = vpack.c.bf16 %v4414, %v4413
    %v4433 = vpack.c.bf16 %v4416, %v4415
    %v4434 = vpack.c.bf16 %v4418, %v4417
    %v4451 = vunpack.c.l.b16 %v4419
    %v4452 = vunpack.c.h.b16 %v4419
    %v4453 = vunpack.c.l.b16 %v4420
    %v4454 = vunpack.c.h.b16 %v4420
    %v4455 = vunpack.c.l.b16 %v4421
    %v4456 = vunpack.c.h.b16 %v4421
    %v4457 = vunpack.c.l.b16 %v4422
    %v4458 = vunpack.c.h.b16 %v4422
    %v4459 = vunpack.c.l.b16 %v4423
    %v4460 = vunpack.c.h.b16 %v4423
    %v4461 = vunpack.c.l.b16 %v4424
    %v4462 = vunpack.c.h.b16 %v4424
    %v4463 = vunpack.c.l.b16 %v4425
    %v4464 = vunpack.c.h.b16 %v4425
    %v4465 = vunpack.c.l.b16 %v4426
    %v4466 = vunpack.c.h.b16 %v4426
    %v4467 = vunpack.c.l.b16 %v4427
    %v4468 = vunpack.c.h.b16 %v4427
    %v4469 = vunpack.c.l.b16 %v4428
    %v4470 = vunpack.c.h.b16 %v4428
    %v4471 = vunpack.c.l.b16 %v4429
    %v4472 = vunpack.c.h.b16 %v4429
    %v4473 = vunpack.c.l.b16 %v4430
    %v4474 = vunpack.c.h.b16 %v4430
    %v4475 = vunpack.c.l.b16 %v4431
    %v4476 = vunpack.c.h.b16 %v4431
    %v4477 = vunpack.c.l.b16 %v4432
    %v4478 = vunpack.c.h.b16 %v4432
    %v4479 = vunpack.c.l.b16 %v4433
    %v4480 = vunpack.c.h.b16 %v4433
    %v4481 = vunpack.c.l.b16 %v4434
    %v4482 = vunpack.c.h.b16 %v4434
    %v4483 = vpack.c.b16 %v4451, %v4451
    %v4484 = vpack.c.b16 %v4452, %v4452
    %v4485 = vpack.c.b16 %v4453, %v4453
    %v4486 = vpack.c.b16 %v4454, %v4454
    %v4487 = vpack.c.b16 %v4455, %v4455
    %v4488 = vpack.c.b16 %v4456, %v4456
    %v4489 = vpack.c.b16 %v4457, %v4457
    %v4490 = vpack.c.b16 %v4458, %v4458
    %v4491 = vpack.c.b16 %v4459, %v4459
    %v4492 = vpack.c.b16 %v4460, %v4460
    %v4493 = vpack.c.b16 %v4461, %v4461
    %v4494 = vpack.c.b16 %v4462, %v4462
    %v4495 = vpack.c.b16 %v4463, %v4463
    %v4496 = vpack.c.b16 %v4464, %v4464
    %v4497 = vpack.c.b16 %v4465, %v4465
    %v4498 = vpack.c.b16 %v4466, %v4466
    %v4499 = vpack.c.b16 %v4467, %v4467
    %v4500 = vpack.c.b16 %v4468, %v4468
    %v4501 = vpack.c.b16 %v4469, %v4469
    %v4502 = vpack.c.b16 %v4470, %v4470
    %v4503 = vpack.c.b16 %v4471, %v4471
    %v4504 = vpack.c.b16 %v4472, %v4472
    %v4505 = vpack.c.b16 %v4473, %v4473
    %v4506 = vpack.c.b16 %v4474, %v4474
    %v4507 = vpack.c.b16 %v4475, %v4475
    %v4508 = vpack.c.b16 %v4476, %v4476
    %v4509 = vpack.c.b16 %v4477, %v4477
    %v4510 = vpack.c.b16 %v4478, %v4478
    %v4511 = vpack.c.b16 %v4479, %v4479
    %v4512 = vpack.c.b16 %v4480, %v4480
    %v4513 = vpack.c.b16 %v4481, %v4481
    %v4514 = vpack.c.b16 %v4482, %v4482
    %4547 = vst [vmem:[%s7] sm:$0xf] %v4483
    %4548 = vst [vmem:[%s7 + $0x4] sm:$0xf] %v4484
    %4549 = vst [vmem:[%s7 + $0x8] sm:$0xf] %v4485
    %4550 = vst [vmem:[%s7 + $0xc] sm:$0xf] %v4486
    %4551 = vst [vmem:[%s7 + $0x10] sm:$0xf] %v4487
    %4552 = vst [vmem:[%s7 + $0x14] sm:$0xf] %v4488
    %4553 = vst [vmem:[%s7 + $0x18] sm:$0xf] %v4489
    %4554 = vst [vmem:[%s7 + $0x1c] sm:$0xf] %v4490
    %4555 = vst [vmem:[%s7 + $0x20] sm:$0xf] %v4491
    %4556 = vst [vmem:[%s7 + $0x24] sm:$0xf] %v4492
    %4557 = vst [vmem:[%s7 + $0x28] sm:$0xf] %v4493
    %4558 = vst [vmem:[%s7 + $0x2c] sm:$0xf] %v4494
    %4559 = vst [vmem:[%s7 + $0x30] sm:$0xf] %v4495
    %4560 = vst [vmem:[%s7 + $0x34] sm:$0xf] %v4496
    %4561 = vst [vmem:[%s7 + $0x38] sm:$0xf] %v4497
    %4562 = vst [vmem:[%s7 + $0x3c] sm:$0xf] %v4498
    %4563 = vst [vmem:[%s7 + $0x40] sm:$0xf] %v4499
    %4564 = vst [vmem:[%s7 + $0x44] sm:$0xf] %v4500
    %4565 = vst [vmem:[%s7 + $0x48] sm:$0xf] %v4501
    %4566 = vst [vmem:[%s7 + $0x4c] sm:$0xf] %v4502
    %4567 = vst [vmem:[%s7 + $0x50] sm:$0xf] %v4503
    %4568 = vst [vmem:[%s7 + $0x54] sm:$0xf] %v4504
    %4569 = vst [vmem:[%s7 + $0x58] sm:$0xf] %v4505
    %4570 = vst [vmem:[%s7 + $0x5c] sm:$0xf] %v4506
    %4571 = vst [vmem:[%s7 + $0x60] sm:$0xf] %v4507
    %4572 = vst [vmem:[%s7 + $0x64] sm:$0xf] %v4508
    %4573 = vst [vmem:[%s7 + $0x68] sm:$0xf] %v4509
    %4574 = vst [vmem:[%s7 + $0x6c] sm:$0xf] %v4510
    %4575 = vst [vmem:[%s7 + $0x70] sm:$0xf] %v4511
    %4576 = vst [vmem:[%s7 + $0x74] sm:$0xf] %v4512
    %4577 = vst [vmem:[%s7 + $0x78] sm:$0xf] %v4513
    %4578 = vst [vmem:[%s7 + $0x7c] sm:$0xf] %v4514
    %v4579 = vld [vmem:[#allocation7] sm:$0xff]
    %v4580 = vld [vmem:[#allocation7 + $0x8] sm:$0xff]
    %v4581 = vld [vmem:[#allocation7 + $0x10] sm:$0xff]
    %v4582 = vld [vmem:[#allocation7 + $0x18] sm:$0xff]
    %v4583 = vld [vmem:[#allocation7 + $0x20] sm:$0xff]
    %v4584 = vld [vmem:[#allocation7 + $0x28] sm:$0xff]
    %v4585 = vld [vmem:[#allocation7 + $0x30] sm:$0xff]
    %v4586 = vld [vmem:[#allocation7 + $0x38] sm:$0xff]
    %4587 = vmatprep.subr.mxu0 %v2899
    %4588 = vmatpush1.msra.mxu0 %v2898
    %4589 = vmatprep.subr.mxu0 %v2897
    %4590 = vmatpush1.msra.mxu0 %v2896
    %4591 = vmatprep.subr.mxu0 %v2895
    %4592 = vmatpush1.msra.mxu0 %v2894
    %4593 = vmatprep.subr.mxu0 %v2893
    %4594 = vmatpush1.msra.mxu0 %v2892
    %4595 = vmatprep.subr.mxu0 %v2891
    %4596 = vmatpush1.msra.mxu0 %v2890
    %4597 = vmatprep.subr.mxu0 %v2889
    %4598 = vmatpush1.msra.mxu0 %v2888
    %4599 = vmatprep.subr.mxu0 %v2887
    %4600 = vmatpush1.msra.mxu0 %v2886
    %4601 = vmatprep.subr.mxu0 %v2885
    %4602 = vmatpush1.msra.mxu0 %v2884
    %4603 = vmatprep.subr.mxu0 %v2883
    %4604 = vmatpush1.msra.mxu0 %v2882
    %4605 = vmatprep.subr.mxu0 %v2881
    %4606 = vmatpush1.msra.mxu0 %v2880
    %4607 = vmatprep.subr.mxu0 %v2879
    %4608 = vmatpush1.msra.mxu0 %v2878
    %4609 = vmatprep.subr.mxu0 %v2877
    %4610 = vmatpush1.msra.mxu0 %v2876
    %4611 = vmatprep.subr.mxu0 %v2875
    %4612 = vmatpush1.msra.mxu0 %v2874
    %4613 = vmatprep.subr.mxu0 %v2873
    %4614 = vmatpush1.msra.mxu0 %v2872
    %4615 = vmatprep.subr.mxu0 %v2871
    %4616 = vmatpush1.msra.mxu0 %v2870
    %4617 = vmatprep.subr.mxu0 %v2869
    %4618 = vmatpush1.msra.mxu0 %v2868
    %4619 = vmatprep.subr.mxu0 %v2931
    %4620 = vmatpush2.msra.mxu0 %v2930
    %4621 = vmatprep.subr.mxu0 %v2929
    %4622 = vmatpush2.msra.mxu0 %v2928
    %4623 = vmatprep.subr.mxu0 %v2927
    %4624 = vmatpush2.msra.mxu0 %v2926
    %4625 = vmatprep.subr.mxu0 %v2925
    %4626 = vmatpush2.msra.mxu0 %v2924
    %4627 = vmatprep.subr.mxu0 %v2923
    %4628 = vmatpush2.msra.mxu0 %v2922
    %4629 = vmatprep.subr.mxu0 %v2921
    %4630 = vmatpush2.msra.mxu0 %v2920
    %4631 = vmatprep.subr.mxu0 %v2919
    %4632 = vmatpush2.msra.mxu0 %v2918
    %4633 = vmatprep.subr.mxu0 %v2917
    %4634 = vmatpush2.msra.mxu0 %v2916
    %4635 = vmatprep.subr.mxu0 %v2915
    %4636 = vmatpush2.msra.mxu0 %v2914
    %4637 = vmatprep.subr.mxu0 %v2913
    %4638 = vmatpush2.msra.mxu0 %v2912
    %4639 = vmatprep.subr.mxu0 %v2911
    %4640 = vmatpush2.msra.mxu0 %v2910
    %4641 = vmatprep.subr.mxu0 %v2909
    %4642 = vmatpush2.msra.mxu0 %v2908
    %4643 = vmatprep.subr.mxu0 %v2907
    %4644 = vmatpush2.msra.mxu0 %v2906
    %4645 = vmatprep.subr.mxu0 %v2905
    %4646 = vmatpush2.msra.mxu0 %v2904
    %4647 = vmatprep.subr.mxu0 %v2903
    %4648 = vmatpush2.msra.mxu0 %v2902
    %4649 = vmatprep.subr.mxu0 %v2901
    %4650 = vmatpush2.msra.mxu0 %v2900
    %4651 = vmatprep.mubr.f32.mxu0 %v4580
    %4652 = vmatmul.mubr.f32.gmra.mxu0 %v4579
    %v4653 = vpop.f32.mrf.mxu0
    %v4654 = vadd.f32 0.0, %v4653
    %v4655 = vpop.f32.mrf.mxu0
    %v4656 = vadd.f32 0.0, %v4655
    %4657 = vmatprep.mubr.f32.mxu0 %v4582
    %4658 = vmatmul.mubr.f32.gmra.mxu0 %v4581
    %v4659 = vpop.f32.mrf.mxu0
    %v4660 = vadd.f32 0.0, %v4659
    %v4661 = vpop.f32.mrf.mxu0
    %v4662 = vadd.f32 0.0, %v4661
    %4663 = vmatprep.mubr.f32.mxu0 %v4584
    %4664 = vmatmul.mubr.f32.gmra.mxu0 %v4583
    %v4665 = vpop.f32.mrf.mxu0
    %v4666 = vadd.f32 0.0, %v4665
    %v4667 = vpop.f32.mrf.mxu0
    %v4668 = vadd.f32 0.0, %v4667
    %4669 = vmatprep.mubr.f32.mxu0 %v4586
    %4670 = vmatmul.mubr.f32.gmra.mxu0 %v4585
    %v4671 = vpop.f32.mrf.mxu0
    %v4672 = vadd.f32 0.0, %v4671
    %v4673 = vpop.f32.mrf.mxu0
    %v4674 = vadd.f32 0.0, %v4673
    %4675 = vdwg.mxu0
    %v4676 = vpack.c.bf16 %v4660, %v4654
    %v4677 = vpack.c.bf16 %v4662, %v4656
    %v4678 = vpack.c.bf16 %v4672, %v4666
    %v4679 = vpack.c.bf16 %v4674, %v4668
    %v4680 = vld [vmem:[#allocation10 + $0x4] sm:$0xf]
    %v4681 = vld [vmem:[#allocation10 + $0xc] sm:$0xf]
    %v4682 = vld [vmem:[#allocation10 + $0x14] sm:$0xf]
    %v4683 = vld [vmem:[#allocation10 + $0x1c] sm:$0xf]
    %v4684 = vld [vmem:[#allocation10 + $0x24] sm:$0xf]
    %v4685 = vld [vmem:[#allocation10 + $0x2c] sm:$0xf]
    %v4686 = vld [vmem:[#allocation10 + $0x34] sm:$0xf]
    %v4687 = vld [vmem:[#allocation10 + $0x3c] sm:$0xf]
    %v4688 = vld [vmem:[#allocation10 + $0x44] sm:$0xf]
    %v4689 = vld [vmem:[#allocation10 + $0x4c] sm:$0xf]
    %v4690 = vld [vmem:[#allocation10 + $0x54] sm:$0xf]
    %v4691 = vld [vmem:[#allocation10 + $0x5c] sm:$0xf]
    %v4692 = vld [vmem:[#allocation10 + $0x64] sm:$0xf]
    %v4693 = vld [vmem:[#allocation10 + $0x6c] sm:$0xf]
    %v4694 = vld [vmem:[#allocation10 + $0x74] sm:$0xf]
    %v4695 = vld [vmem:[#allocation10 + $0x7c] sm:$0xf]
    %v4696 = vld [vmem:[#allocation10 + $0x84] sm:$0xf]
    %v4697 = vld [vmem:[#allocation10 + $0x8c] sm:$0xf]
    %v4698 = vld [vmem:[#allocation10 + $0x94] sm:$0xf]
    %v4699 = vld [vmem:[#allocation10 + $0x9c] sm:$0xf]
    %v4700 = vld [vmem:[#allocation10 + $0xa4] sm:$0xf]
    %v4701 = vld [vmem:[#allocation10 + $0xac] sm:$0xf]
    %v4702 = vld [vmem:[#allocation10 + $0xb4] sm:$0xf]
    %v4703 = vld [vmem:[#allocation10 + $0xbc] sm:$0xf]
    %v4704 = vld [vmem:[#allocation10 + $0xc4] sm:$0xf]
    %v4705 = vld [vmem:[#allocation10 + $0xcc] sm:$0xf]
    %v4706 = vld [vmem:[#allocation10 + $0xd4] sm:$0xf]
    %v4707 = vld [vmem:[#allocation10 + $0xdc] sm:$0xf]
    %v4708 = vld [vmem:[#allocation10 + $0xe4] sm:$0xf]
    %v4709 = vld [vmem:[#allocation10 + $0xec] sm:$0xf]
    %v4710 = vld [vmem:[#allocation10 + $0xf4] sm:$0xf]
    %v4711 = vld [vmem:[#allocation10 + $0xfc] sm:$0xf]
    %v4712 = vlaneseq
    %v4713 = vshrl.u32 %v4712, 7
    %v4714 = vsub.s32 2, %v4713
    %v4715 = vrot.slane %v218, %v4714
    %v4748 = vunpack.c.l.b16 %v4680
    %v4749 = vunpack.c.l.b16 %v4681
    %v4750 = vunpack.c.l.b16 %v4682
    %v4751 = vunpack.c.l.b16 %v4683
    %v4752 = vunpack.c.l.b16 %v4684
    %v4753 = vunpack.c.l.b16 %v4685
    %v4754 = vunpack.c.l.b16 %v4686
    %v4755 = vunpack.c.l.b16 %v4687
    %v4756 = vunpack.c.l.b16 %v4688
    %v4757 = vunpack.c.l.b16 %v4689
    %v4758 = vunpack.c.l.b16 %v4690
    %v4759 = vunpack.c.l.b16 %v4691
    %v4760 = vunpack.c.l.b16 %v4692
    %v4761 = vunpack.c.l.b16 %v4693
    %v4762 = vunpack.c.l.b16 %v4694
    %v4763 = vunpack.c.l.b16 %v4695
    %v4764 = vunpack.c.l.b16 %v4696
    %v4765 = vunpack.c.l.b16 %v4697
    %v4766 = vunpack.c.l.b16 %v4698
    %v4767 = vunpack.c.l.b16 %v4699
    %v4768 = vunpack.c.l.b16 %v4700
    %v4769 = vunpack.c.l.b16 %v4701
    %v4770 = vunpack.c.l.b16 %v4702
    %v4771 = vunpack.c.l.b16 %v4703
    %v4772 = vunpack.c.l.b16 %v4704
    %v4773 = vunpack.c.l.b16 %v4705
    %v4774 = vunpack.c.l.b16 %v4706
    %v4775 = vunpack.c.l.b16 %v4707
    %v4776 = vunpack.c.l.b16 %v4708
    %v4777 = vunpack.c.l.b16 %v4709
    %v4778 = vunpack.c.l.b16 %v4710
    %v4779 = vunpack.c.l.b16 %v4711
    %v4780 = vpack.c.b16 %v4749, %v4748
    %v4781 = vpack.c.b16 %v4751, %v4750
    %v4782 = vpack.c.b16 %v4753, %v4752
    %v4783 = vpack.c.b16 %v4755, %v4754
    %v4784 = vpack.c.b16 %v4757, %v4756
    %v4785 = vpack.c.b16 %v4759, %v4758
    %v4786 = vpack.c.b16 %v4761, %v4760
    %v4787 = vpack.c.b16 %v4763, %v4762
    %v4788 = vpack.c.b16 %v4765, %v4764
    %v4789 = vpack.c.b16 %v4767, %v4766
    %v4790 = vpack.c.b16 %v4769, %v4768
    %v4791 = vpack.c.b16 %v4771, %v4770
    %v4792 = vpack.c.b16 %v4773, %v4772
    %v4793 = vpack.c.b16 %v4775, %v4774
    %v4794 = vpack.c.b16 %v4777, %v4776
    %v4795 = vpack.c.b16 %v4779, %v4778
    %4812 = vmatprep.subr.bf16.mxu0 0
    %4813 = vmatpush1.bf16.msra.mxu0 %v4787
    %4814 = vmatprep.subr.bf16.mxu0 0
    %4815 = vmatpush1.bf16.msra.mxu0 %v4786
    %4816 = vmatprep.subr.bf16.mxu0 0
    %4817 = vmatpush1.bf16.msra.mxu0 %v4785
    %4818 = vmatprep.subr.bf16.mxu0 0
    %4819 = vmatpush1.bf16.msra.mxu0 %v4784
    %4820 = vmatprep.subr.bf16.mxu0 0
    %4821 = vmatpush1.bf16.msra.mxu0 %v4783
    %4822 = vmatprep.subr.bf16.mxu0 0
    %4823 = vmatpush1.bf16.msra.mxu0 %v4782
    %4824 = vmatprep.subr.bf16.mxu0 0
    %4825 = vmatpush1.bf16.msra.mxu0 %v4781
    %4826 = vmatprep.subr.bf16.mxu0 0
    %4827 = vmatpush1.bf16.msra.mxu0 %v4780
    %4828 = vmatprep.subr.bf16.mxu0 0
    %4829 = vmatpush2.bf16.msra.mxu0 %v4795
    %4830 = vmatprep.subr.bf16.mxu0 0
    %4831 = vmatpush2.bf16.msra.mxu0 %v4794
    %4832 = vmatprep.subr.bf16.mxu0 0
    %4833 = vmatpush2.bf16.msra.mxu0 %v4793
    %4834 = vmatprep.subr.bf16.mxu0 0
    %4835 = vmatpush2.bf16.msra.mxu0 %v4792
    %4836 = vmatprep.subr.bf16.mxu0 0
    %4837 = vmatpush2.bf16.msra.mxu0 %v4791
    %4838 = vmatprep.subr.bf16.mxu0 0
    %4839 = vmatpush2.bf16.msra.mxu0 %v4790
    %4840 = vmatprep.subr.bf16.mxu0 0
    %4841 = vmatpush2.bf16.msra.mxu0 %v4789
    %4842 = vmatprep.subr.bf16.mxu0 0
    %4843 = vmatpush2.bf16.msra.mxu0 %v4788
    %4844 = vmatprep.mubr.bf16.mxu0 %v4677
    %4845 = vmatmul.mubr.bf16.gmra.mxu0 %v4676
    %v4846 = vpop.f32.mrf.mxu0
    %v4847 = vadd.f32 %v4715, %v4846
    %v4848 = vpop.f32.mrf.mxu0
    %v4849 = vpop.f32.mrf.mxu0
    %v4850 = vadd.f32 %v4715, %v4849
    %v4851 = vpop.f32.mrf.mxu0
    %4852 = vmatprep.mubr.bf16.mxu0 %v4679
    %4853 = vmatmul.mubr.bf16.gmra.mxu0 %v4678
    %v4854 = vpop.f32.mrf.mxu0
    %v4855 = vadd.f32 %v4715, %v4854
    %v4856 = vpop.f32.mrf.mxu0
    %v4857 = vpop.f32.mrf.mxu0
    %v4858 = vadd.f32 %v4715, %v4857
    %v4859 = vpop.f32.mrf.mxu0
    %4860 = vdwg.mxu0
    %v4861 = vmax.f32 %v4847, 0.0
    %v4862 = vmax.f32 %v4850, 0.0
    %v4863 = vmax.f32 %v4855, 0.0
    %v4864 = vmax.f32 %v4858, 0.0
    %v4865 = vpack.c.bf16 %v4862, %v4861
    %v4866 = vpack.c.bf16 %v4864, %v4863
    %v4867 = vld [vmem:[#allocation10 + $0x104] sm:$0xf]
    %v4868 = vld [vmem:[#allocation10 + $0x10c] sm:$0xf]
    %v4869 = vld [vmem:[#allocation10 + $0x114] sm:$0xf]
    %v4870 = vld [vmem:[#allocation10 + $0x11c] sm:$0xf]
    %v4871 = vld [vmem:[#allocation10 + $0x124] sm:$0xf]
    %v4872 = vld [vmem:[#allocation10 + $0x12c] sm:$0xf]
    %v4873 = vld [vmem:[#allocation10 + $0x134] sm:$0xf]
    %v4874 = vld [vmem:[#allocation10 + $0x13c] sm:$0xf]
    %v4875 = vld [vmem:[#allocation10 + $0x144] sm:$0xf]
    %v4876 = vld [vmem:[#allocation10 + $0x14c] sm:$0xf]
    %v4877 = vld [vmem:[#allocation10 + $0x154] sm:$0xf]
    %v4878 = vld [vmem:[#allocation10 + $0x15c] sm:$0xf]
    %v4879 = vld [vmem:[#allocation10 + $0x164] sm:$0xf]
    %v4880 = vld [vmem:[#allocation10 + $0x16c] sm:$0xf]
    %v4881 = vld [vmem:[#allocation10 + $0x174] sm:$0xf]
    %v4882 = vld [vmem:[#allocation10 + $0x17c] sm:$0xf]
    %v4883 = vlaneseq
    %v4884 = vshrl.u32 %v4883, 7
    %v4885 = vsub.s32 2, %v4884
    %v4886 = vrot.slane %v219, %v4885
    %v4903 = vunpack.c.l.b16 %v4867
    %v4904 = vunpack.c.l.b16 %v4868
    %v4905 = vunpack.c.l.b16 %v4869
    %v4906 = vunpack.c.l.b16 %v4870
    %v4907 = vunpack.c.l.b16 %v4871
    %v4908 = vunpack.c.l.b16 %v4872
    %v4909 = vunpack.c.l.b16 %v4873
    %v4910 = vunpack.c.l.b16 %v4874
    %v4911 = vunpack.c.l.b16 %v4875
    %v4912 = vunpack.c.l.b16 %v4876
    %v4913 = vunpack.c.l.b16 %v4877
    %v4914 = vunpack.c.l.b16 %v4878
    %v4915 = vunpack.c.l.b16 %v4879
    %v4916 = vunpack.c.l.b16 %v4880
    %v4917 = vunpack.c.l.b16 %v4881
    %v4918 = vunpack.c.l.b16 %v4882
    %v4919 = vpack.c.b16 %v4904, %v4903
    %v4920 = vpack.c.b16 %v4906, %v4905
    %v4921 = vpack.c.b16 %v4908, %v4907
    %v4922 = vpack.c.b16 %v4910, %v4909
    %v4923 = vpack.c.b16 %v4912, %v4911
    %v4924 = vpack.c.b16 %v4914, %v4913
    %v4925 = vpack.c.b16 %v4916, %v4915
    %v4926 = vpack.c.b16 %v4918, %v4917
    %4935 = vmatprep.subr.bf16.mxu0 0
    %4936 = vmatpush1.bf16.msra.mxu0 %v4926
    %4937 = vmatprep.subr.bf16.mxu0 0
    %4938 = vmatpush1.bf16.msra.mxu0 %v4925
    %4939 = vmatprep.subr.bf16.mxu0 0
    %4940 = vmatpush1.bf16.msra.mxu0 %v4924
    %4941 = vmatprep.subr.bf16.mxu0 0
    %4942 = vmatpush1.bf16.msra.mxu0 %v4923
    %4943 = vmatprep.subr.bf16.mxu0 0
    %4944 = vmatpush1.bf16.msra.mxu0 %v4922
    %4945 = vmatprep.subr.bf16.mxu0 0
    %4946 = vmatpush1.bf16.msra.mxu0 %v4921
    %4947 = vmatprep.subr.bf16.mxu0 0
    %4948 = vmatpush1.bf16.msra.mxu0 %v4920
    %4949 = vmatprep.subr.bf16.mxu0 0
    %4950 = vmatpush1.bf16.msra.mxu0 %v4919
    %4951 = vmatprep.subr.bf16.mxu0 0
    %4952 = vmatpush2.bf16.msra.mxu0 0
    %4953 = vmatprep.subr.bf16.mxu0 0
    %4954 = vmatpush2.bf16.msra.mxu0 0
    %4955 = vmatprep.subr.bf16.mxu0 0
    %4956 = vmatpush2.bf16.msra.mxu0 0
    %4957 = vmatprep.subr.bf16.mxu0 0
    %4958 = vmatpush2.bf16.msra.mxu0 0
    %4959 = vmatprep.subr.bf16.mxu0 0
    %4960 = vmatpush2.bf16.msra.mxu0 0
    %4961 = vmatprep.subr.bf16.mxu0 0
    %4962 = vmatpush2.bf16.msra.mxu0 0
    %4963 = vmatprep.subr.bf16.mxu0 0
    %4964 = vmatpush2.bf16.msra.mxu0 0
    %4965 = vmatprep.subr.bf16.mxu0 0
    %4966 = vmatpush2.bf16.msra.mxu0 0
    %4967 = vmatprep.mubr.bf16.mxu0 0
    %4968 = vmatmul.mubr.bf16.gmra.mxu0 %v4865
    %v4969 = vpop.f32.mrf.mxu0
    %v4970 = vadd.f32 %v4886, %v4969
    %v4971 = vpop.f32.mrf.mxu0
    %v4972 = vpop.f32.mrf.mxu0
    %v4973 = vadd.f32 %v4886, %v4972
    %v4974 = vpop.f32.mrf.mxu0
    %4975 = vmatprep.mubr.bf16.mxu0 0
    %4976 = vmatmul.mubr.bf16.gmra.mxu0 %v4866
    %v4977 = vpop.f32.mrf.mxu0
    %v4978 = vadd.f32 %v4886, %v4977
    %v4979 = vpop.f32.mrf.mxu0
    %v4980 = vpop.f32.mrf.mxu0
    %v4981 = vadd.f32 %v4886, %v4980
    %v4982 = vpop.f32.mrf.mxu0
    %4983 = vdwg.mxu0
    %v4984 = vmax.f32 %v4970, 0.0
    %v4985 = vmax.f32 %v4973, 0.0
    %v4986 = vmax.f32 %v4978, 0.0
    %v4987 = vmax.f32 %v4981, 0.0
    %v4988 = vpack.c.bf16 %v4985, %v4984
    %v4989 = vpack.c.bf16 %v4987, %v4986
    %v4990 = vld [vmem:[#allocation10 + $0x184] sm:$0xf]
    %v4991 = vld [vmem:[#allocation10 + $0x18c] sm:$0xf]
    %v4992 = vld [vmem:[#allocation10 + $0x194] sm:$0xf]
    %v4993 = vld [vmem:[#allocation10 + $0x19c] sm:$0xf]
    %v4994 = vld [vmem:[#allocation10 + $0x1a4] sm:$0xf]
    %v4995 = vld [vmem:[#allocation10 + $0x1ac] sm:$0xf]
    %v4996 = vld [vmem:[#allocation10 + $0x1b4] sm:$0xf]
    %v4997 = vld [vmem:[#allocation10 + $0x1bc] sm:$0xf]
    %v4998 = vld [vmem:[#allocation10 + $0x1c4] sm:$0xf]
    %v4999 = vld [vmem:[#allocation10 + $0x1cc] sm:$0xf]
    %v5000 = vld [vmem:[#allocation10 + $0x1d4] sm:$0xf]
    %v5001 = vld [vmem:[#allocation10 + $0x1dc] sm:$0xf]
    %v5002 = vld [vmem:[#allocation10 + $0x1e4] sm:$0xf]
    %v5003 = vld [vmem:[#allocation10 + $0x1ec] sm:$0xf]
    %v5004 = vld [vmem:[#allocation10 + $0x1f4] sm:$0xf]
    %v5005 = vld [vmem:[#allocation10 + $0x1fc] sm:$0xf]
    %v5006 = vlaneseq
    %v5007 = vshrl.u32 %v5006, 7
    %v5008 = vsub.s32 2, %v5007
    %v5009 = vrot.slane %v220, %v5008
    %v5026 = vunpack.c.l.b16 %v4990
    %v5027 = vunpack.c.l.b16 %v4991
    %v5028 = vunpack.c.l.b16 %v4992
    %v5029 = vunpack.c.l.b16 %v4993
    %v5030 = vunpack.c.l.b16 %v4994
    %v5031 = vunpack.c.l.b16 %v4995
    %v5032 = vunpack.c.l.b16 %v4996
    %v5033 = vunpack.c.l.b16 %v4997
    %v5034 = vunpack.c.l.b16 %v4998
    %v5035 = vunpack.c.l.b16 %v4999
    %v5036 = vunpack.c.l.b16 %v5000
    %v5037 = vunpack.c.l.b16 %v5001
    %v5038 = vunpack.c.l.b16 %v5002
    %v5039 = vunpack.c.l.b16 %v5003
    %v5040 = vunpack.c.l.b16 %v5004
    %v5041 = vunpack.c.l.b16 %v5005
    %v5042 = vpack.c.b16 %v5027, %v5026
    %v5043 = vpack.c.b16 %v5029, %v5028
    %v5044 = vpack.c.b16 %v5031, %v5030
    %v5045 = vpack.c.b16 %v5033, %v5032
    %v5046 = vpack.c.b16 %v5035, %v5034
    %v5047 = vpack.c.b16 %v5037, %v5036
    %v5048 = vpack.c.b16 %v5039, %v5038
    %v5049 = vpack.c.b16 %v5041, %v5040
    %5058 = vmatprep.subr.bf16.mxu0 0
    %5059 = vmatpush1.bf16.msra.mxu0 %v5049
    %5060 = vmatprep.subr.bf16.mxu0 0
    %5061 = vmatpush1.bf16.msra.mxu0 %v5048
    %5062 = vmatprep.subr.bf16.mxu0 0
    %5063 = vmatpush1.bf16.msra.mxu0 %v5047
    %5064 = vmatprep.subr.bf16.mxu0 0
    %5065 = vmatpush1.bf16.msra.mxu0 %v5046
    %5066 = vmatprep.subr.bf16.mxu0 0
    %5067 = vmatpush1.bf16.msra.mxu0 %v5045
    %5068 = vmatprep.subr.bf16.mxu0 0
    %5069 = vmatpush1.bf16.msra.mxu0 %v5044
    %5070 = vmatprep.subr.bf16.mxu0 0
    %5071 = vmatpush1.bf16.msra.mxu0 %v5043
    %5072 = vmatprep.subr.bf16.mxu0 0
    %5073 = vmatpush1.bf16.msra.mxu0 %v5042
    %5074 = vmatprep.subr.bf16.mxu0 0
    %5075 = vmatpush2.bf16.msra.mxu0 0
    %5076 = vmatprep.subr.bf16.mxu0 0
    %5077 = vmatpush2.bf16.msra.mxu0 0
    %5078 = vmatprep.subr.bf16.mxu0 0
    %5079 = vmatpush2.bf16.msra.mxu0 0
    %5080 = vmatprep.subr.bf16.mxu0 0
    %5081 = vmatpush2.bf16.msra.mxu0 0
    %5082 = vmatprep.subr.bf16.mxu0 0
    %5083 = vmatpush2.bf16.msra.mxu0 0
    %5084 = vmatprep.subr.bf16.mxu0 0
    %5085 = vmatpush2.bf16.msra.mxu0 0
    %5086 = vmatprep.subr.bf16.mxu0 0
    %5087 = vmatpush2.bf16.msra.mxu0 0
    %5088 = vmatprep.subr.bf16.mxu0 0
    %5089 = vmatpush2.bf16.msra.mxu0 0
    %5090 = vmatprep.mubr.bf16.mxu0 0
    %5091 = vmatmul.mubr.bf16.gmra.mxu0 %v4988
    %v5092 = vpop.f32.mrf.mxu0
    %v5093 = vadd.f32 %v5009, %v5092
    %v5094 = vpop.f32.mrf.mxu0
    %v5095 = vpop.f32.mrf.mxu0
    %v5096 = vadd.f32 %v5009, %v5095
    %v5097 = vpop.f32.mrf.mxu0
    %5098 = vmatprep.mubr.bf16.mxu0 0
    %5099 = vmatmul.mubr.bf16.gmra.mxu0 %v4989
    %v5100 = vpop.f32.mrf.mxu0
    %v5101 = vadd.f32 %v5009, %v5100
    %v5102 = vpop.f32.mrf.mxu0
    %v5103 = vpop.f32.mrf.mxu0
    %v5104 = vadd.f32 %v5009, %v5103
    %v5105 = vpop.f32.mrf.mxu0
    %5106 = vdwg.mxu0
    %5107 = vst [vmem:[%s8] sm:$0xff] %v5093
    %5108 = vst [vmem:[%s8 + $0x8] sm:$0xff] %v5096
    %5109 = vst [vmem:[%s8 + $0x10] sm:$0xff] %v5101
    %5110 = vst [vmem:[%s8 + $0x18] sm:$0xff] %v5104
    // Predicated region
    $region58: #{a2c_forward.1} parent=1 // pred_check
      _
    $region59: #{a2c_forward.1} parent=1 // pred_check_branch
      %5112 = sbr.rel (0) target = $region61
    $region60: #{a2c_forward.1} parent=1 // pred_region
      _
    $region61: #{a2c_forward.1} parent=1 // pred_fallthru
      _
    // Predicated region
    $region62: #{a2c_forward.1} parent=1 // pred_check
      _
    $region63: #{a2c_forward.1} parent=1 // pred_check_branch
      %5114 = sbr.rel (0) target = $region65
    $region64: #{a2c_forward.1} parent=1 // pred_region
      _
    $region65: #{a2c_forward.1} parent=1 // pred_fallthru
      _
    // Predicated region
    $region66: #{a2c_forward.1} parent=1 // pred_check
      _
    $region67: #{a2c_forward.1} parent=1 // pred_check_branch
      %5116 = sbr.rel (0) target = $region69
    $region68: #{a2c_forward.1} parent=1 // pred_region
      _
    $region69: #{a2c_forward.1} parent=1 // pred_fallthru
      _
    // Predicated region
    $region70: #{a2c_forward.1} parent=1 // pred_check
      _
    $region71: #{a2c_forward.1} parent=1 // pred_check_branch
      %5118 = sbr.rel (0) target = $region73
    $region72: #{a2c_forward.1} parent=1 // pred_region
      _
    $region73: #{a2c_forward.1} parent=1 // pred_fallthru
      _
    %5119 = vsyncpa [#allocation3], 1
    %5120 = vsyncpa [#allocation5], 1
    %5121 = vsyncpa [#allocation8], 1
    %5122 = vsyncpa [#allocation11], 1

</llo_original>
